<compile_context>
chip_gen: v7x
topology: tpu7x:2x2x1
jax: 0.10.0
libtpu: 0.0.40
codegen_flags: <defaults>
</compile_context>

<pallas_src>
import functools
import math

import jax
import jax.numpy as jnp
from jax import lax
from jax.experimental import pallas as pl
from jax.experimental.pallas import tpu as pltpu


# ---------------------------------------------------------------------------
# Tiling helpers
# ---------------------------------------------------------------------------
def _pick_tile(dim, pref, align):
    """Largest tile <= pref that is a multiple of `align` and divides `dim`;
    falls back to the full dimension (always a legal Pallas block size)."""
    if dim <= pref:
        return dim
    t = (pref // align) * align
    while t >= align:
        if dim % t == 0:
            return t
        t -= align
    return dim


def _pick_tile_pad(dim, pref, align):
    """Like _pick_tile, but instead of a full-dimension fallback returns a
    (tile, padded_dim) pair so the caller pads rows to a tile multiple.
    Avoids silently creating huge blocks (VMEM OOM risk on v7x)."""
    if dim <= pref:
        return dim, dim
    t = (pref // align) * align
    while t >= align:
        if dim % t == 0:
            return t, dim
        t -= align
    t = (pref // align) * align
    return t, ((dim + t - 1) // t) * t


# ---------------------------------------------------------------------------
# Tiled matmul kernel (PyTorch Linear semantics: y = x @ w.T [+ b] [gelu] [+ res])
# ---------------------------------------------------------------------------
def _matmul_kernel(*refs, activation, has_bias, has_res):
    # ref order: x (tm,tk), w (tn,tk) [PyTorch (out,in) layout], [b (1,tn)],
    #            [res (tm,tn)], o (tm,tn), acc scratch (tm,tn) f32.
    x_ref, w_ref = refs[0], refs[1]
    idx = 2
    b_ref = None
    res_ref = None
    if has_bias:
        b_ref = refs[idx]; idx += 1
    if has_res:
        res_ref = refs[idx]; idx += 1
    o_ref, acc_ref = refs[idx], refs[idx + 1]

    k = pl.program_id(2)

    @pl.when(k == 0)
    def _init():
        acc_ref[...] = jnp.zeros(acc_ref.shape, jnp.float32)

    acc_ref[...] += lax.dot_general(
        x_ref[...].astype(jnp.bfloat16),
        w_ref[...].astype(jnp.bfloat16),
        dimension_numbers=(((1,), (1,)), ((), ())),   # contract last dims: x @ w.T
        preferred_element_type=jnp.float32,
    )

    @pl.when(k == pl.num_programs(2) - 1)
    def _finalize():
        y = acc_ref[...]
        if has_bias:
            y = y + b_ref[...].astype(jnp.float32)
        if activation == "gelu":
            # TODO(synk): PyTorch nn.GELU() is erf-exact; tanh approximation used
            # for guaranteed Mosaic lowering (max abs deviation < 3e-3).
            y = jax.nn.gelu(y, approximate=True)
        if has_res:
            y = y + res_ref[...].astype(jnp.float32)
        o_ref[...] = y.astype(o_ref.dtype)


def _linear(x, w, bias=None, *, residual=None, out_dtype=jnp.float32, activation=None):
    """x: (M, K); w: (N, K) PyTorch layout, pre-cast bf16; bias: (N,) or None;
    residual: (M, N) or None (added after activation) -> (M, N)."""
    M, K = x.shape
    N, K2 = w.shape
    assert K == K2
    tm, Mp = _pick_tile_pad(M, 512, 8)
    tn = _pick_tile(N, 512, 128)
    tk = _pick_tile(K, 1024, 128)

    if Mp != M:                                   # ragged rows: pad, slice after
        x = jnp.pad(x, ((0, Mp - M), (0, 0)))
        if residual is not None:
            residual = jnp.pad(residual, ((0, Mp - M), (0, 0)))

    inputs = [x, w]
    in_specs = [pl.BlockSpec((tm, tk), lambda i, j, k: (i, k)),
                pl.BlockSpec((tn, tk), lambda i, j, k: (j, k))]
    extra_bytes = 0
    if bias is not None:
        inputs.append(bias.reshape(1, N).astype(jnp.float32))
        in_specs.append(pl.BlockSpec((1, tn), lambda i, j, k: (0, j)))
        extra_bytes += 4 * N
    if residual is not None:
        inputs.append(residual)
        in_specs.append(pl.BlockSpec((tm, tn), lambda i, j, k: (i, j)))
        extra_bytes += residual.size * residual.dtype.itemsize

    kernel = functools.partial(_matmul_kernel, activation=activation,
                               has_bias=bias is not None, has_res=residual is not None)
    out = pl.pallas_call(
        kernel,
        out_shape=jax.ShapeDtypeStruct((Mp, N), out_dtype),
        grid=(Mp // tm, N // tn, K // tk),
        in_specs=in_specs,
        out_specs=pl.BlockSpec((tm, tn), lambda i, j, k: (i, j)),
        scratch_shapes=[pltpu.VMEM((tm, tn), jnp.float32)],
        compiler_params=pltpu.CompilerParams(
            dimension_semantics=("parallel", "parallel", "arbitrary"),
            vmem_limit_bytes=32 * 1024 * 1024,   # safe on v7x (64 MiB phys), ample on v5e/v6e
        ),
        cost_estimate=pl.CostEstimate(
            flops=int(2 * Mp * N * K),
            transcendentals=int(Mp * N) if activation == "gelu" else 0,
            bytes_accessed=int(Mp * K * x.dtype.itemsize + N * K * 2
                               + Mp * N * jnp.dtype(out_dtype).itemsize + extra_bytes),
        ),
    )(*inputs)
    return out[:M] if Mp != M else out


# ---------------------------------------------------------------------------
# LayerNorm (weight only, no bias) kernel
# ---------------------------------------------------------------------------
def _layernorm_kernel(x_ref, g_ref, o_ref, *, eps):
    x = x_ref[...].astype(jnp.float32)
    mu = jnp.mean(x, axis=-1, keepdims=True)
    xc = x - mu
    var = jnp.mean(xc * xc, axis=-1, keepdims=True)
    y = xc * lax.rsqrt(var + eps) * g_ref[...].astype(jnp.float32)
    o_ref[...] = y.astype(o_ref.dtype)


def _layernorm(x, gamma, *, out_dtype=jnp.float32, eps=1e-5):
    M, D = x.shape
    tm, Mp = _pick_tile_pad(M, 512, 8)
    if Mp != M:
        x = jnp.pad(x, ((0, Mp - M), (0, 0)))
    g = gamma.reshape(1, D)
    out = pl.pallas_call(
        functools.partial(_layernorm_kernel, eps=eps),
        out_shape=jax.ShapeDtypeStruct((Mp, D), out_dtype),
        grid=(Mp // tm,),
        in_specs=[pl.BlockSpec((tm, D), lambda i: (i, 0)),
                  pl.BlockSpec((1, D), lambda i: (0, 0))],
        out_specs=pl.BlockSpec((tm, D), lambda i: (i, 0)),
        compiler_params=pltpu.CompilerParams(dimension_semantics=("parallel",)),
    )(x, g)
    return out[:M] if Mp != M else out


# ---------------------------------------------------------------------------
# Flash attention: heads handled in-kernel, q/k/v read straight out of the
# packed (B, S, 3D) QKV tensor via column-block BlockSpecs (no HBM re-slicing).
# ---------------------------------------------------------------------------
def _flash_attn_kernel(q_ref, k_ref, v_ref, o_ref, m_ref, l_ref, acc_ref, *, heads):
    # q_ref: (1, tq, D) bf16 (1/sqrt(Dh) pre-folded into Wq); k/v: (1, tkv, D).
    # scratch: m/l (H, tq, 1) f32 (natural sublane layout of row stats, avoids
    # XLU relayouts); acc (H, tq, Dh) f32.
    ki = pl.program_id(2)
    hd = q_ref.shape[-1]
    dh = hd // heads

    @pl.when(ki == 0)
    def _init():
        m_ref[...] = jnp.full(m_ref.shape, -jnp.inf, jnp.float32)
        l_ref[...] = jnp.zeros(l_ref.shape, jnp.float32)
        acc_ref[...] = jnp.zeros(acc_ref.shape, jnp.float32)

    q = q_ref[0]            # (tq, D)
    k = k_ref[0]            # (tkv, D)
    v = v_ref[0]

    for h in range(heads):
        lo, hi = h * dh, (h + 1) * dh
        s = lax.dot_general(                                   # q_h @ k_h.T, no transpose
            q[:, lo:hi], k[:, lo:hi],
            dimension_numbers=(((1,), (1,)), ((), ())),
            preferred_element_type=jnp.float32)                # (tq, tkv) f32
        m_prev = m_ref[h]                                      # (tq, 1)
        m_new = jnp.maximum(m_prev, jnp.max(s, axis=-1, keepdims=True))
        alpha = jnp.exp(m_prev - m_new)
        p = jnp.exp(s - m_new)
        l_ref[h] = alpha * l_ref[h] + jnp.sum(p, axis=-1, keepdims=True)
        pv = lax.dot_general(
            p.astype(v.dtype), v[:, lo:hi],
            dimension_numbers=(((1,), (0,)), ((), ())),
            preferred_element_type=jnp.float32)                # (tq, Dh)
        acc_ref[h] = alpha * acc_ref[h] + pv
        m_ref[h] = m_new

    @pl.when(ki == pl.num_programs(2) - 1)
    def _finalize():
        outs = []
        for h in range(heads):
            inv_l = pl.reciprocal(l_ref[h], approx=True)       # EUP slot, ~free
            outs.append(acc_ref[h] * inv_l)
        # single lane-dense (tq, D) store in 'b n (h d)' layout
        o_ref[0] = jnp.concatenate(outs, axis=-1).astype(o_ref.dtype)


def _attention(qkv, *, heads, d_model):
    """qkv: (B, S, 3*D) packed [q|k|v] in 'b n (h d)' layout -> (B, S, D)."""
    B, S, threeD = qkv.shape
    D = d_model
    assert threeD == 3 * D and D % heads == 0
    dh = D // heads
    # tq raised to 512: better MXU fill (d_head contraction is only 64-deep) and
    # still >=2 parallel blocks per core for v7x megacore at realistic seq lens.
    tq = _pick_tile(S, 512, 8)
    tkv = _pick_tile(S, 512, 8)
    # TODO(synk): ragged S falls back to a full-S block (no KV masking path yet).

    if D % 128 == 0:
        # Carve q/k/v straight out of the packed tensor: column blocks 0/1/2.
        q_spec = pl.BlockSpec((1, tq, D), lambda b, i, j: (b, i, 0))
        k_spec = pl.BlockSpec((1, tkv, D), lambda b, i, j: (b, j, 1))
        v_spec = pl.BlockSpec((1, tkv, D), lambda b, i, j: (b, j, 2))
        args = (qkv, qkv, qkv)
    else:
        # TODO(synk): lane-misaligned d_model; fall back to HBM slices of qkv.
        q_spec = pl.BlockSpec((1, tq, D), lambda b, i, j: (b, i, 0))
        k_spec = pl.BlockSpec((1, tkv, D), lambda b, i, j: (b, j, 0))
        v_spec = pl.BlockSpec((1, tkv, D), lambda b, i, j: (b, j, 0))
        args = (qkv[..., :D], qkv[..., D:2 * D], qkv[..., 2 * D:])

    kernel = functools.partial(_flash_attn_kernel, heads=heads)
    return pl.pallas_call(
        kernel,
        out_shape=jax.ShapeDtypeStruct((B, S, D), qkv.dtype),
        grid=(B, S // tq, S // tkv),
        in_specs=[q_spec, k_spec, v_spec],
        out_specs=pl.BlockSpec((1, tq, D), lambda b, i, j: (b, i, 0)),
        scratch_shapes=[
            pltpu.VMEM((heads, tq, 1), jnp.float32),
            pltpu.VMEM((heads, tq, 1), jnp.float32),
            pltpu.VMEM((heads, tq, dh), jnp.float32),
        ],
        compiler_params=pltpu.CompilerParams(
            dimension_semantics=("parallel", "parallel", "arbitrary"),
            vmem_limit_bytes=32 * 1024 * 1024,
        ),
        cost_estimate=pl.CostEstimate(
            flops=int(4 * B * S * S * D),
            transcendentals=int(B * heads * S * S),
            bytes_accessed=int(2 * (B * S * 3 * D) + 2 * (B * S * D)),
        ),
    )(*args)


# ---------------------------------------------------------------------------
# One-time parameter preparation (outside the per-forward graph):
#   * fuse Wq/Wk/Wv -> Wqkv with 1/sqrt(d_head) folded into Wq
#   * cast every matmul weight to bf16 once
# ---------------------------------------------------------------------------
def prepare_params(params, *, heads):
    D = params["pos_embed"].shape[-1]
    scale = 1.0 / math.sqrt(D // heads)
    prepared = {
        "patchify_w": params["patchify"].reshape(D, -1).astype(jnp.bfloat16),
        "pos_embed": params["pos_embed"],
        "ref_embed": params["ref_embed"],
        "src_embed": params["src_embed"],
        "norm": params["norm"],
        "unpatchify_w": params["unpatchify_w"].astype(jnp.bfloat16),
        "unpatchify_b": params["unpatchify_b"].astype(jnp.float32),
        "blocks": [],
    }
    for blk in params["blocks"]:
        wqkv = jnp.concatenate([blk["to_q"] * scale, blk["to_k"], blk["to_v"]], axis=0)
        prepared["blocks"].append({
            "norm1": blk["norm1"],
            "wqkv": wqkv.astype(jnp.bfloat16),
            "to_out": blk["to_out"].astype(jnp.bfloat16),
            "norm2": blk["norm2"],
            "ff_w1": blk["ff_w1"].astype(jnp.bfloat16),
            "ff_w2": blk["ff_w2"].astype(jnp.bfloat16),
        })
    return prepared


# ---------------------------------------------------------------------------
# Full Transformer forward (consumes prepared params)
# ---------------------------------------------------------------------------
def transformer_forward(params, images, *, patch_size, heads):
    """images: (B, N, C, H, W) float32 -> (B, N, H, W, output_dim)."""
    B, N, C, H, W = images.shape
    p = patch_size
    hp, wp = H // p, W // p
    hw = hp * wp
    D = params["pos_embed"].shape[-1]

    # patchify: Conv2d(kernel=stride=p, bias=False) == im2col + Linear.
    # LHS pre-cast to bf16 (halves im2col + DMA traffic for this matmul).
    x = images.astype(jnp.bfloat16).reshape(B * N, C, hp, p, wp, p)
    x = x.transpose(0, 2, 4, 1, 3, 5).reshape(B * N * hw, C * p * p)
    tokens = _linear(x, params["patchify_w"], out_dtype=jnp.float32)   # (B*N*hw, D)
    tokens = tokens.reshape(B, N, hw, D)

    # positional / view embeddings
    # TODO(synk): only the identity path of interpolate_pos_encoding (npatch ==
    # num_patches and square input) is implemented; bicubic resize branch is not.
    pos = params["pos_embed"]                                          # (1, hw, D)
    view = jnp.concatenate(
        [params["ref_embed"], jnp.tile(params["src_embed"], (1, N - 1, 1))], axis=1)
    tokens = tokens + pos[:, None, :, :] + view[:, :, None, :]
    x = tokens.reshape(B, N * hw, D)
    S = N * hw
    M = B * S

    for blk in params["blocks"]:
        # --- self-attention -------------------------------------------------
        xf = x.reshape(M, D)                                    # residual stream (f32)
        n1 = _layernorm(xf, blk["norm1"], out_dtype=jnp.bfloat16)
        qkv = _linear(n1, blk["wqkv"], out_dtype=jnp.bfloat16)  # (M, 3D), pre-fused weight
        attn = _attention(qkv.reshape(B, S, 3 * D), heads=heads, d_model=D)
        # to_out projection with the residual add fused into the finalize
        x = _linear(attn.reshape(M, D), blk["to_out"], residual=xf,
                    out_dtype=jnp.float32).reshape(B, S, D)

        # --- feed-forward (GELU fused in w1 finalize, residual fused in w2) ---
        xf = x.reshape(M, D)
        n2 = _layernorm(xf, blk["norm2"], out_dtype=jnp.bfloat16)
        h1 = _linear(n2, blk["ff_w1"], out_dtype=jnp.bfloat16, activation="gelu")
        x = _linear(h1, blk["ff_w2"], residual=xf,
                    out_dtype=jnp.float32).reshape(B, S, D)

    xn = _layernorm(x.reshape(M, D), params["norm"], out_dtype=jnp.bfloat16)
    out = _linear(xn, params["unpatchify_w"], params["unpatchify_b"],
                  out_dtype=jnp.float32)                               # (M, p*p*out_dim)

    out_dim = params["unpatchify_w"].shape[0] // (p * p)
    out = out.reshape(B, N, hp, wp, p, p, out_dim)
    out = out.transpose(0, 1, 2, 4, 3, 5, 6).reshape(B, N, hp * p, wp * p, out_dim)
    return out


def init_transformer_params(key, *, image_size, patch_size, input_dim, inner_dim,
                            output_dim, n_heads, depth):
    p = patch_size
    num_patches = (image_size // p) ** 2
    keys = jax.random.split(key, 8 + depth)
    std = 0.02

    def nrm(k, shape):
        return std * jax.random.normal(k, shape, jnp.float32)

    params = {
        "patchify": nrm(keys[0], (inner_dim, input_dim, p, p)),
        "pos_embed": nrm(keys[1], (1, num_patches, inner_dim)),
        "ref_embed": nrm(keys[2], (1, 1, inner_dim)),
        "src_embed": nrm(keys[3], (1, 1, inner_dim)),
        "norm": jnp.ones((inner_dim,), jnp.float32),
        "unpatchify_w": nrm(keys[4], (p * p * output_dim, inner_dim)),
        "unpatchify_b": nrm(keys[5], (p * p * output_dim,)),
        "blocks": [],
    }
    for d in range(depth):
        bk = jax.random.split(keys[8 + d], 6)
        params["blocks"].append({
            "norm1": jnp.ones((inner_dim,), jnp.float32),
            "to_q": nrm(bk[0], (inner_dim, inner_dim)),
            "to_k": nrm(bk[1], (inner_dim, inner_dim)),
            "to_v": nrm(bk[2], (inner_dim, inner_dim)),
            "to_out": nrm(bk[3], (inner_dim, inner_dim)),
            "norm2": jnp.ones((inner_dim,), jnp.float32),
            "ff_w1": nrm(bk[4], (4 * inner_dim, inner_dim)),
            "ff_w2": nrm(bk[5], (inner_dim, 4 * inner_dim)),
        })
    return params


# ---------------------------------------------------------------------------
# Pure-JAX fp32 reference (mirrors the PyTorch module, uses raw f32 params)
# ---------------------------------------------------------------------------
def ref_transformer(params, images, *, patch_size, heads, eps=1e-5):
    B, N, C, H, W = images.shape
    p = patch_size
    hp, wp = H // p, W // p
    hw = hp * wp
    D = params["pos_embed"].shape[-1]
    dh = D // heads
    scale = 1.0 / math.sqrt(dh)

    def layernorm(x, g):
        mu = jnp.mean(x, axis=-1, keepdims=True)
        var = jnp.mean((x - mu) ** 2, axis=-1, keepdims=True)
        return (x - mu) * lax.rsqrt(var + eps) * g

    imgs = images.reshape(B * N, C, H, W)
    tok = lax.conv_general_dilated(
        imgs, params["patchify"], window_strides=(p, p), padding="VALID",
        dimension_numbers=("NCHW", "OIHW", "NCHW"))               # (BN, D, hp, wp)
    tok = tok.transpose(0, 2, 3, 1).reshape(B, N, hw, D)
    view = jnp.concatenate(
        [params["ref_embed"], jnp.tile(params["src_embed"], (1, N - 1, 1))], axis=1)
    tok = tok + params["pos_embed"][:, None, :, :] + view[:, :, None, :]
    x = tok.reshape(B, N * hw, D)

    def attention(xn, blk):
        q = xn @ blk["to_q"].T
        k = xn @ blk["to_k"].T
        v = xn @ blk["to_v"].T

        def split(t):
            b, s, _ = t.shape
            return t.reshape(b, s, heads, dh).transpose(0, 2, 1, 3)

        qh, kh, vh = split(q), split(k), split(v)
        s = jnp.einsum("bhqd,bhkd->bhqk", qh, kh) * scale
        pattn = jax.nn.softmax(s, axis=-1)
        o = jnp.einsum("bhqk,bhkd->bhqd", pattn, vh)
        o = o.transpose(0, 2, 1, 3).reshape(xn.shape)
        return o @ blk["to_out"].T

    for blk in params["blocks"]:
        x = x + attention(layernorm(x, blk["norm1"]), blk)
        hdn = layernorm(x, blk["norm2"])
        ff = jax.nn.gelu(hdn @ blk["ff_w1"].T, approximate=False) @ blk["ff_w2"].T
        x = x + ff

    x = layernorm(x, params["norm"])
    x = x @ params["unpatchify_w"].T + params["unpatchify_b"]
    out_dim = params["unpatchify_w"].shape[0] // (p * p)
    x = x.reshape(B, N, hp, wp, p, p, out_dim)
    x = x.transpose(0, 1, 2, 4, 3, 5, 6).reshape(B, N, hp * p, wp * p, out_dim)
    return x


# ---------------------------------------------------------------------------
if __name__ == "__main__":
    # Small shapes consistent with the module.  inner_dim=128 keeps the packed
    # QKV column-block path lane-aligned (D % 128 == 0, as in the real model's
    # inner_dim=1024); d_head = 64 matches the module default.
    B, N = 1, 2            # batch, views
    C, H, W = 3, 16, 16
    patch_size = 8
    inner_dim = 128
    n_heads = 2            # d_head = 64
    depth = 2
    output_dim = 14

    key = jax.random.PRNGKey(0)
    k_img, k_par = jax.random.split(key)
    images = jax.random.normal(k_img, (B, N, C, H, W), jnp.float32)
    params = init_transformer_params(
        k_par, image_size=H, patch_size=patch_size, input_dim=C,
        inner_dim=inner_dim, output_dim=output_dim, n_heads=n_heads, depth=depth)

    # One-time weight prep (bf16 cast + QKV fusion) OUTSIDE the jitted forward.
    prepared = prepare_params(params, heads=n_heads)

    fwd = jax.jit(functools.partial(transformer_forward,
                                    patch_size=patch_size, heads=n_heads))
    out = jax.block_until_ready(fwd(prepared, images))

    ref = ref_transformer(params, images, patch_size=patch_size, heads=n_heads)
    assert out.shape == (B, N, H, W, output_dim), out.shape
    err = float(jnp.max(jnp.abs(out - ref)))
    # bf16 MXU operands (f32 accumulation) + tanh-GELU -> loosened tolerance
    assert err < 3e-2, f"max abs err {err}"

    print("KERNEL_OK")
</pallas_src>

<mosaic_0001>
module attributes {stable_mosaic.version = 11 : i64} {
  func.func @_matmul_kernel(%arg0: i32, %arg1: i32, %arg2: i32, %arg3: memref<8x192xbf16, #tpu.memory_space<vmem>>, %arg4: memref<128x192xbf16, #tpu.memory_space<vmem>>, %arg5: memref<8x128xf32, #tpu.memory_space<vmem>>, %arg6: memref<8x128xf32, #tpu.memory_space<vmem>>) attributes {dimension_semantics = [#tpu.dimension_semantics<parallel>, #tpu.dimension_semantics<parallel>, #tpu.dimension_semantics<arbitrary>], iteration_bounds = array<i64: 1, 1, 1>, scalar_prefetch = 0 : i64, scratch_operands = 1 : i64, tpu.core_type = #tpu.core_type<tc>, window_params = [{transform_indices = @transform_0, window_bounds = array<i64: 8, 192>}, {transform_indices = @transform_1, window_bounds = array<i64: 128, 192>}, {transform_indices = @transform_2, window_bounds = array<i64: 8, 128>}]} {
    %c0_i32 = arith.constant 0 : i32
    %0 = arith.cmpi eq, %arg2, %c0_i32 : i32
    %1 = arith.extui %0 : i1 to i32
    %c0_i32_0 = arith.constant 0 : i32
    %2 = arith.cmpi ne, %1, %c0_i32_0 : i32
    scf.if %2 {
      %cst_10 = arith.constant 0.000000e+00 : f32
      %12 = vector.broadcast %cst_10 : f32 to vector<8x128xf32>
      %c0_11 = arith.constant 0 : index
      %c0_12 = arith.constant 0 : index
      %13 = vector.load %arg6[%c0_11, %c0_12] : memref<8x128xf32, #tpu.memory_space<vmem>>, vector<8x128xf32>
      tpu.vector_store %arg6[%c0_11, %c0_12], %12 {strides = array<i32>} : memref<8x128xf32, #tpu.memory_space<vmem>>, vector<8x128xf32>,
    } else {
    }
    %c0 = arith.constant 0 : index
    %c0_1 = arith.constant 0 : index
    %3 = vector.load %arg6[%c0, %c0_1] : memref<8x128xf32, #tpu.memory_space<vmem>>, vector<8x128xf32>
    %c0_2 = arith.constant 0 : index
    %c0_3 = arith.constant 0 : index
    %4 = vector.load %arg3[%c0_2, %c0_3] : memref<8x192xbf16, #tpu.memory_space<vmem>>, vector<8x192xbf16>
    %c0_4 = arith.constant 0 : index
    %c0_5 = arith.constant 0 : index
    %5 = vector.load %arg4[%c0_4, %c0_5] : memref<128x192xbf16, #tpu.memory_space<vmem>>, vector<128x192xbf16>
    %cst = arith.constant dense<0.000000e+00> : vector<8x128xf32>
    %6 = tpu.matmul %4, %5, %cst {dimension_numbers = #tpu.dot_dimension_numbers<[1], [1], [0], [0], [0, 0, 1, 0], [], []>} : vector<8x192xbf16>, vector<128x192xbf16>, vector<8x128xf32> -> vector<8x128xf32>
    %7 = arith.addf %3, %6 : vector<8x128xf32>
    %c0_6 = arith.constant 0 : index
    %c0_7 = arith.constant 0 : index
    %8 = vector.load %arg6[%c0_6, %c0_7] : memref<8x128xf32, #tpu.memory_space<vmem>>, vector<8x128xf32>
    tpu.vector_store %arg6[%c0_6, %c0_7], %7 {strides = array<i32>} : memref<8x128xf32, #tpu.memory_space<vmem>>, vector<8x128xf32>,
    %c0_i32_8 = arith.constant 0 : i32
    %9 = arith.cmpi eq, %arg2, %c0_i32_8 : i32
    %10 = arith.extui %9 : i1 to i32
    %c0_i32_9 = arith.constant 0 : i32
    %11 = arith.cmpi ne, %10, %c0_i32_9 : i32
    scf.if %11 {
      %c0_10 = arith.constant 0 : index
      %c0_11 = arith.constant 0 : index
      %12 = vector.load %arg6[%c0_10, %c0_11] : memref<8x128xf32, #tpu.memory_space<vmem>>, vector<8x128xf32>
      %c0_12 = arith.constant 0 : index
      %c0_13 = arith.constant 0 : index
      %13 = vector.load %arg5[%c0_12, %c0_13] : memref<8x128xf32, #tpu.memory_space<vmem>>, vector<8x128xf32>
      tpu.vector_store %arg5[%c0_12, %c0_13], %12 {strides = array<i32>} : memref<8x128xf32, #tpu.memory_space<vmem>>, vector<8x128xf32>,
    } else {
    }
    return
  }
  func.func @transform_0(%arg0: i32, %arg1: i32, %arg2: i32) -> (i32, i32) {
    %c0_i32 = arith.constant 0 : i32
    return %arg0, %arg2 : i32, i32
  }
  func.func @transform_1(%arg0: i32, %arg1: i32, %arg2: i32) -> (i32, i32) {
    %c0_i32 = arith.constant 0 : i32
    return %arg1, %arg2 : i32, i32
  }
  func.func @transform_2(%arg0: i32, %arg1: i32, %arg2: i32) -> (i32, i32) {
    %c0_i32 = arith.constant 0 : i32
    return %arg0, %arg1 : i32, i32
  }
}

module attributes {stable_mosaic.version = 11 : i64} {
  func.func @_matmul_kernel(%arg0: i32, %arg1: i32, %arg2: i32, %arg3: memref<8x128xbf16, #tpu.memory_space<vmem>>, %arg4: memref<384x128xbf16, #tpu.memory_space<vmem>>, %arg5: memref<8x384xbf16, #tpu.memory_space<vmem>>, %arg6: memref<8x384xf32, #tpu.memory_space<vmem>>) attributes {dimension_semantics = [#tpu.dimension_semantics<parallel>, #tpu.dimension_semantics<parallel>, #tpu.dimension_semantics<arbitrary>], iteration_bounds = array<i64: 1, 1, 1>, scalar_prefetch = 0 : i64, scratch_operands = 1 : i64, tpu.core_type = #tpu.core_type<tc>, window_params = [{transform_indices = @transform_0, window_bounds = array<i64: 8, 128>}, {transform_indices = @transform_1, window_bounds = array<i64: 384, 128>}, {transform_indices = @transform_2, window_bounds = array<i64: 8, 384>}]} {
    %c0_i32 = arith.constant 0 : i32
    %0 = arith.cmpi eq, %arg2, %c0_i32 : i32
    %1 = arith.extui %0 : i1 to i32
    %c0_i32_0 = arith.constant 0 : i32
    %2 = arith.cmpi ne, %1, %c0_i32_0 : i32
    scf.if %2 {
      %cst_10 = arith.constant 0.000000e+00 : f32
      %12 = vector.broadcast %cst_10 : f32 to vector<8x384xf32>
      %c0_11 = arith.constant 0 : index
      %c0_12 = arith.constant 0 : index
      %13 = vector.load %arg6[%c0_11, %c0_12] : memref<8x384xf32, #tpu.memory_space<vmem>>, vector<8x384xf32>
      tpu.vector_store %arg6[%c0_11, %c0_12], %12 {strides = array<i32>} : memref<8x384xf32, #tpu.memory_space<vmem>>, vector<8x384xf32>,
    } else {
    }
    %c0 = arith.constant 0 : index
    %c0_1 = arith.constant 0 : index
    %3 = vector.load %arg6[%c0, %c0_1] : memref<8x384xf32, #tpu.memory_space<vmem>>, vector<8x384xf32>
    %c0_2 = arith.constant 0 : index
    %c0_3 = arith.constant 0 : index
    %4 = vector.load %arg3[%c0_2, %c0_3] : memref<8x128xbf16, #tpu.memory_space<vmem>>, vector<8x128xbf16>
    %c0_4 = arith.constant 0 : index
    %c0_5 = arith.constant 0 : index
    %5 = vector.load %arg4[%c0_4, %c0_5] : memref<384x128xbf16, #tpu.memory_space<vmem>>, vector<384x128xbf16>
    %cst = arith.constant dense<0.000000e+00> : vector<8x384xf32>
    %6 = tpu.matmul %4, %5, %cst {dimension_numbers = #tpu.dot_dimension_numbers<[1], [1], [0], [0], [0, 0, 1, 0], [], []>} : vector<8x128xbf16>, vector<384x128xbf16>, vector<8x384xf32> -> vector<8x384xf32>
    %7 = arith.addf %3, %6 : vector<8x384xf32>
    %c0_6 = arith.constant 0 : index
    %c0_7 = arith.constant 0 : index
    %8 = vector.load %arg6[%c0_6, %c0_7] : memref<8x384xf32, #tpu.memory_space<vmem>>, vector<8x384xf32>
    tpu.vector_store %arg6[%c0_6, %c0_7], %7 {strides = array<i32>} : memref<8x384xf32, #tpu.memory_space<vmem>>, vector<8x384xf32>,
    %c0_i32_8 = arith.constant 0 : i32
    %9 = arith.cmpi eq, %arg2, %c0_i32_8 : i32
    %10 = arith.extui %9 : i1 to i32
    %c0_i32_9 = arith.constant 0 : i32
    %11 = arith.cmpi ne, %10, %c0_i32_9 : i32
    scf.if %11 {
      %c0_10 = arith.constant 0 : index
      %c0_11 = arith.constant 0 : index
      %12 = vector.load %arg6[%c0_10, %c0_11] : memref<8x384xf32, #tpu.memory_space<vmem>>, vector<8x384xf32>
      %13 = arith.truncf %12 : vector<8x384xf32> to vector<8x384xbf16>
      %c0_12 = arith.constant 0 : index
      %c0_13 = arith.constant 0 : index
      %14 = vector.load %arg5[%c0_12, %c0_13] : memref<8x384xbf16, #tpu.memory_space<vmem>>, vector<8x384xbf16>
      tpu.vector_store %arg5[%c0_12, %c0_13], %13 {strides = array<i32>} : memref<8x384xbf16, #tpu.memory_space<vmem>>, vector<8x384xbf16>,
    } else {
    }
    return
  }
  func.func @transform_0(%arg0: i32, %arg1: i32, %arg2: i32) -> (i32, i32) {
    %c0_i32 = arith.constant 0 : i32
    return %arg0, %arg2 : i32, i32
  }
  func.func @transform_1(%arg0: i32, %arg1: i32, %arg2: i32) -> (i32, i32) {
    %c0_i32 = arith.constant 0 : i32
    return %arg1, %arg2 : i32, i32
  }
  func.func @transform_2(%arg0: i32, %arg1: i32, %arg2: i32) -> (i32, i32) {
    %c0_i32 = arith.constant 0 : i32
    return %arg0, %arg1 : i32, i32
  }
}

module attributes {stable_mosaic.version = 11 : i64} {
  func.func @_layernorm_kernel(%arg0: i32, %arg1: memref<8x128xf32, #tpu.memory_space<vmem>>, %arg2: memref<1x128xf32, #tpu.memory_space<vmem>>, %arg3: memref<8x128xbf16, #tpu.memory_space<vmem>>) attributes {dimension_semantics = [#tpu.dimension_semantics<parallel>], iteration_bounds = array<i64: 1>, scalar_prefetch = 0 : i64, scratch_operands = 0 : i64, tpu.core_type = #tpu.core_type<tc>, window_params = [{transform_indices = @transform_0, window_bounds = array<i64: 8, 128>}, {pipeline_mode = #tpu.pipeline_mode<synchronous>, transform_indices = @transform_1, window_bounds = array<i64: 1, 128>}, {transform_indices = @transform_2, window_bounds = array<i64: 8, 128>}]} {
    %c0 = arith.constant 0 : index
    %c0_0 = arith.constant 0 : index
    %0 = vector.load %arg1[%c0, %c0_0] : memref<8x128xf32, #tpu.memory_space<vmem>>, vector<8x128xf32>
    %cst = arith.constant dense<0.000000e+00> : vector<8xf32>
    %1 = vector.multi_reduction <add>, %0, %cst [1] : vector<8x128xf32> to vector<8xf32>
    %2 = vector.shape_cast %1 : vector<8xf32> to vector<8x1xf32>
    %cst_1 = arith.constant 1.280000e+02 : f32
    %3 = vector.broadcast %cst_1 : f32 to vector<8x1xf32>
    %4 = arith.divf %2, %3 : vector<8x1xf32>
    %5 = vector.broadcast %4 : vector<8x1xf32> to vector<8x128xf32>
    %6 = arith.subf %0, %5 : vector<8x128xf32>
    %7 = arith.mulf %6, %6 : vector<8x128xf32>
    %cst_2 = arith.constant dense<0.000000e+00> : vector<8xf32>
    %8 = vector.multi_reduction <add>, %7, %cst_2 [1] : vector<8x128xf32> to vector<8xf32>
    %9 = vector.shape_cast %8 : vector<8xf32> to vector<8x1xf32>
    %cst_3 = arith.constant 1.280000e+02 : f32
    %10 = vector.broadcast %cst_3 : f32 to vector<8x1xf32>
    %11 = arith.divf %9, %10 : vector<8x1xf32>
    %cst_4 = arith.constant 9.99999974E-6 : f32
    %12 = vector.broadcast %cst_4 : f32 to vector<8x1xf32>
    %13 = arith.addf %11, %12 : vector<8x1xf32>
    %14 = math.rsqrt %13 : vector<8x1xf32>
    %15 = vector.broadcast %14 : vector<8x1xf32> to vector<8x128xf32>
    %16 = arith.mulf %6, %15 : vector<8x128xf32>
    %c0_5 = arith.constant 0 : index
    %c0_6 = arith.constant 0 : index
    %17 = vector.load %arg2[%c0_5, %c0_6] : memref<1x128xf32, #tpu.memory_space<vmem>>, vector<1x128xf32>
    %18 = vector.broadcast %17 : vector<1x128xf32> to vector<8x128xf32>
    %19 = arith.mulf %16, %18 : vector<8x128xf32>
    %20 = arith.truncf %19 : vector<8x128xf32> to vector<8x128xbf16>
    %c0_7 = arith.constant 0 : index
    %c0_8 = arith.constant 0 : index
    %21 = vector.load %arg3[%c0_7, %c0_8] : memref<8x128xbf16, #tpu.memory_space<vmem>>, vector<8x128xbf16>
    tpu.vector_store %arg3[%c0_7, %c0_8], %20 {strides = array<i32>} : memref<8x128xbf16, #tpu.memory_space<vmem>>, vector<8x128xbf16>,
    return
  }
  func.func @transform_0(%arg0: i32) -> (i32, i32) {
    %c0_i32 = arith.constant 0 : i32
    %c0_i32_0 = arith.constant 0 : i32
    return %arg0, %c0_i32 : i32, i32
  }
  func.func @transform_1(%arg0: i32) -> (i32, i32) {
    %c0_i32 = arith.constant 0 : i32
    %c0_i32_0 = arith.constant 0 : i32
    %c0_i32_1 = arith.constant 0 : i32
    return %c0_i32, %c0_i32_0 : i32, i32
  }
  func.func @transform_2(%arg0: i32) -> (i32, i32) {
    %c0_i32 = arith.constant 0 : i32
    %c0_i32_0 = arith.constant 0 : i32
    return %arg0, %c0_i32 : i32, i32
  }
}

module attributes {stable_mosaic.version = 11 : i64} {
  func.func @_flash_attn_kernel(%arg0: i32, %arg1: i32, %arg2: i32, %arg3: memref<1x8x128xbf16, #tpu.memory_space<vmem>>, %arg4: memref<1x8x128xbf16, #tpu.memory_space<vmem>>, %arg5: memref<1x8x128xbf16, #tpu.memory_space<vmem>>, %arg6: memref<1x8x128xbf16, #tpu.memory_space<vmem>>, %arg7: memref<2x8x1xf32, #tpu.memory_space<vmem>>, %arg8: memref<2x8x1xf32, #tpu.memory_space<vmem>>, %arg9: memref<2x8x64xf32, #tpu.memory_space<vmem>>) attributes {dimension_semantics = [#tpu.dimension_semantics<parallel>, #tpu.dimension_semantics<parallel>, #tpu.dimension_semantics<arbitrary>], iteration_bounds = array<i64: 1, 1, 1>, scalar_prefetch = 0 : i64, scratch_operands = 3 : i64, tpu.core_type = #tpu.core_type<tc>, window_params = [{transform_indices = @transform_0, window_bounds = array<i64: 1, 8, 128>}, {transform_indices = @transform_1, window_bounds = array<i64: 1, 8, 128>}, {transform_indices = @transform_2, window_bounds = array<i64: 1, 8, 128>}, {transform_indices = @transform_3, window_bounds = array<i64: 1, 8, 128>}]} {
    %c0_i32 = arith.constant 0 : i32
    %0 = arith.cmpi eq, %arg2, %c0_i32 : i32
    %1 = arith.extui %0 : i1 to i32
    %c0_i32_0 = arith.constant 0 : i32
    %2 = arith.cmpi ne, %1, %c0_i32_0 : i32
    scf.if %2 {
      %cst_53 = arith.constant 0xFF800000 : f32
      %84 = vector.broadcast %cst_53 : f32 to vector<2x8x1xf32>
      %c0_54 = arith.constant 0 : index
      %c0_55 = arith.constant 0 : index
      %c0_56 = arith.constant 0 : index
      %85 = vector.load %arg7[%c0_54, %c0_55, %c0_56] : memref<2x8x1xf32, #tpu.memory_space<vmem>>, vector<2x8x1xf32>
      tpu.vector_store %arg7[%c0_54, %c0_55, %c0_56], %84 {strides = array<i32>} : memref<2x8x1xf32, #tpu.memory_space<vmem>>, vector<2x8x1xf32>,
      %cst_57 = arith.constant 0.000000e+00 : f32
      %86 = vector.broadcast %cst_57 : f32 to vector<2x8x1xf32>
      %c0_58 = arith.constant 0 : index
      %c0_59 = arith.constant 0 : index
      %c0_60 = arith.constant 0 : index
      %87 = vector.load %arg8[%c0_58, %c0_59, %c0_60] : memref<2x8x1xf32, #tpu.memory_space<vmem>>, vector<2x8x1xf32>
      tpu.vector_store %arg8[%c0_58, %c0_59, %c0_60], %86 {strides = array<i32>} : memref<2x8x1xf32, #tpu.memory_space<vmem>>, vector<2x8x1xf32>,
      %cst_61 = arith.constant 0.000000e+00 : f32
      %88 = vector.broadcast %cst_61 : f32 to vector<2x8x64xf32>
      %c0_62 = arith.constant 0 : index
      %c0_63 = arith.constant 0 : index
      %c0_64 = arith.constant 0 : index
      %89 = vector.load %arg9[%c0_62, %c0_63, %c0_64] : memref<2x8x64xf32, #tpu.memory_space<vmem>>, vector<2x8x64xf32>
      tpu.vector_store %arg9[%c0_62, %c0_63, %c0_64], %88 {strides = array<i32>} : memref<2x8x64xf32, #tpu.memory_space<vmem>>, vector<2x8x64xf32>,
    } else {
    }
    %c0 = arith.constant 0 : index
    %c0_1 = arith.constant 0 : index
    %c0_2 = arith.constant 0 : index
    %3 = vector.load %arg3[%c0, %c0_1, %c0_2] : memref<1x8x128xbf16, #tpu.memory_space<vmem>>, vector<1x8x128xbf16>
    %4 = vector.shape_cast %3 : vector<1x8x128xbf16> to vector<8x128xbf16>
    %c0_3 = arith.constant 0 : index
    %c0_4 = arith.constant 0 : index
    %c0_5 = arith.constant 0 : index
    %5 = vector.load %arg4[%c0_3, %c0_4, %c0_5] : memref<1x8x128xbf16, #tpu.memory_space<vmem>>, vector<1x8x128xbf16>
    %6 = vector.shape_cast %5 : vector<1x8x128xbf16> to vector<8x128xbf16>
    %c0_6 = arith.constant 0 : index
    %c0_7 = arith.constant 0 : index
    %c0_8 = arith.constant 0 : index
    %7 = vector.load %arg5[%c0_6, %c0_7, %c0_8] : memref<1x8x128xbf16, #tpu.memory_space<vmem>>, vector<1x8x128xbf16>
    %8 = vector.shape_cast %7 : vector<1x8x128xbf16> to vector<8x128xbf16>
    %9 = vector.extract_strided_slice %4 {offsets = [0, 0], sizes = [8, 64], strides = [1, 1]} : vector<8x128xbf16> to vector<8x64xbf16>
    %10 = vector.extract_strided_slice %6 {offsets = [0, 0], sizes = [8, 64], strides = [1, 1]} : vector<8x128xbf16> to vector<8x64xbf16>
    %cst = arith.constant dense<0.000000e+00> : vector<8x8xf32>
    %11 = tpu.matmul %9, %10, %cst {dimension_numbers = #tpu.dot_dimension_numbers<[1], [1], [0], [0], [0, 0, 1, 0], [], []>} : vector<8x64xbf16>, vector<8x64xbf16>, vector<8x8xf32> -> vector<8x8xf32>
    %c0_9 = arith.constant 0 : index
    %c0_10 = arith.constant 0 : index
    %c0_11 = arith.constant 0 : index
    %12 = vector.load %arg7[%c0_9, %c0_10, %c0_11] : memref<2x8x1xf32, #tpu.memory_space<vmem>>, vector<1x8x1xf32>
    %13 = vector.shape_cast %12 : vector<1x8x1xf32> to vector<8x1xf32>
    %cst_12 = arith.constant dense<0xFF800000> : vector<8xf32>
    %14 = vector.multi_reduction <maximumf>, %11, %cst_12 [1] : vector<8x8xf32> to vector<8xf32>
    %15 = vector.shape_cast %14 : vector<8xf32> to vector<8x1xf32>
    %16 = arith.maximumf %13, %15 : vector<8x1xf32>
    %17 = arith.subf %13, %16 : vector<8x1xf32>
    %18 = math.exp %17 : vector<8x1xf32>
    %19 = vector.broadcast %16 : vector<8x1xf32> to vector<8x8xf32>
    %20 = arith.subf %11, %19 : vector<8x8xf32>
    %21 = math.exp %20 : vector<8x8xf32>
    %c0_13 = arith.constant 0 : index
    %c0_14 = arith.constant 0 : index
    %c0_15 = arith.constant 0 : index
    %22 = vector.load %arg8[%c0_13, %c0_14, %c0_15] : memref<2x8x1xf32, #tpu.memory_space<vmem>>, vector<1x8x1xf32>
    %23 = vector.shape_cast %22 : vector<1x8x1xf32> to vector<8x1xf32>
    %24 = arith.mulf %18, %23 : vector<8x1xf32>
    %cst_16 = arith.constant dense<0.000000e+00> : vector<8xf32>
    %25 = vector.multi_reduction <add>, %21, %cst_16 [1] : vector<8x8xf32> to vector<8xf32>
    %26 = vector.shape_cast %25 : vector<8xf32> to vector<8x1xf32>
    %27 = arith.addf %24, %26 : vector<8x1xf32>
    %c0_17 = arith.constant 0 : index
    %c0_18 = arith.constant 0 : index
    %c0_19 = arith.constant 0 : index
    %28 = vector.load %arg8[%c0_17, %c0_18, %c0_19] : memref<2x8x1xf32, #tpu.memory_space<vmem>>, vector<1x8x1xf32>
    %29 = vector.shape_cast %28 : vector<1x8x1xf32> to vector<8x1xf32>
    %30 = vector.shape_cast %27 : vector<8x1xf32> to vector<1x8x1xf32>
    tpu.vector_store %arg8[%c0_17, %c0_18, %c0_19], %30 {strides = array<i32>} : memref<2x8x1xf32, #tpu.memory_space<vmem>>, vector<1x8x1xf32>,
    %31 = arith.truncf %21 : vector<8x8xf32> to vector<8x8xbf16>
    %32 = vector.extract_strided_slice %8 {offsets = [0, 0], sizes = [8, 64], strides = [1, 1]} : vector<8x128xbf16> to vector<8x64xbf16>
    %cst_20 = arith.constant dense<0.000000e+00> : vector<8x64xf32>
    %33 = tpu.matmul %31, %32, %cst_20 {dimension_numbers = #tpu.dot_dimension_numbers<[1], [0], [0], [1], [0, 0, 1, 1], [], []>} : vector<8x8xbf16>, vector<8x64xbf16>, vector<8x64xf32> -> vector<8x64xf32>
    %c0_21 = arith.constant 0 : index
    %c0_22 = arith.constant 0 : index
    %c0_23 = arith.constant 0 : index
    %34 = vector.load %arg9[%c0_21, %c0_22, %c0_23] : memref<2x8x64xf32, #tpu.memory_space<vmem>>, vector<1x8x64xf32>
    %35 = vector.shape_cast %34 : vector<1x8x64xf32> to vector<8x64xf32>
    %36 = vector.broadcast %18 : vector<8x1xf32> to vector<8x64xf32>
    %37 = arith.mulf %36, %35 : vector<8x64xf32>
    %38 = arith.addf %37, %33 : vector<8x64xf32>
    %c0_24 = arith.constant 0 : index
    %c0_25 = arith.constant 0 : index
    %c0_26 = arith.constant 0 : index
    %39 = vector.load %arg9[%c0_24, %c0_25, %c0_26] : memref<2x8x64xf32, #tpu.memory_space<vmem>>, vector<1x8x64xf32>
    %40 = vector.shape_cast %39 : vector<1x8x64xf32> to vector<8x64xf32>
    %41 = vector.shape_cast %38 : vector<8x64xf32> to vector<1x8x64xf32>
    tpu.vector_store %arg9[%c0_24, %c0_25, %c0_26], %41 {strides = array<i32>} : memref<2x8x64xf32, #tpu.memory_space<vmem>>, vector<1x8x64xf32>,
    %c0_27 = arith.constant 0 : index
    %c0_28 = arith.constant 0 : index
    %c0_29 = arith.constant 0 : index
    %42 = vector.load %arg7[%c0_27, %c0_28, %c0_29] : memref<2x8x1xf32, #tpu.memory_space<vmem>>, vector<1x8x1xf32>
    %43 = vector.shape_cast %42 : vector<1x8x1xf32> to vector<8x1xf32>
    %44 = vector.shape_cast %16 : vector<8x1xf32> to vector<1x8x1xf32>
    tpu.vector_store %arg7[%c0_27, %c0_28, %c0_29], %44 {strides = array<i32>} : memref<2x8x1xf32, #tpu.memory_space<vmem>>, vector<1x8x1xf32>,
    %45 = vector.extract_strided_slice %4 {offsets = [0, 64], sizes = [8, 64], strides = [1, 1]} : vector<8x128xbf16> to vector<8x64xbf16>
    %46 = vector.extract_strided_slice %6 {offsets = [0, 64], sizes = [8, 64], strides = [1, 1]} : vector<8x128xbf16> to vector<8x64xbf16>
    %cst_30 = arith.constant dense<0.000000e+00> : vector<8x8xf32>
    %47 = tpu.matmul %45, %46, %cst_30 {dimension_numbers = #tpu.dot_dimension_numbers<[1], [1], [0], [0], [0, 0, 1, 0], [], []>} : vector<8x64xbf16>, vector<8x64xbf16>, vector<8x8xf32> -> vector<8x8xf32>
    %c1 = arith.constant 1 : index
    %c0_31 = arith.constant 0 : index
    %c0_32 = arith.constant 0 : index
    %48 = vector.load %arg7[%c1, %c0_31, %c0_32] : memref<2x8x1xf32, #tpu.memory_space<vmem>>, vector<1x8x1xf32>
    %49 = vector.shape_cast %48 : vector<1x8x1xf32> to vector<8x1xf32>
    %cst_33 = arith.constant dense<0xFF800000> : vector<8xf32>
    %50 = vector.multi_reduction <maximumf>, %47, %cst_33 [1] : vector<8x8xf32> to vector<8xf32>
    %51 = vector.shape_cast %50 : vector<8xf32> to vector<8x1xf32>
    %52 = arith.maximumf %49, %51 : vector<8x1xf32>
    %53 = arith.subf %49, %52 : vector<8x1xf32>
    %54 = math.exp %53 : vector<8x1xf32>
    %55 = vector.broadcast %52 : vector<8x1xf32> to vector<8x8xf32>
    %56 = arith.subf %47, %55 : vector<8x8xf32>
    %57 = math.exp %56 : vector<8x8xf32>
    %c1_34 = arith.constant 1 : index
    %c0_35 = arith.constant 0 : index
    %c0_36 = arith.constant 0 : index
    %58 = vector.load %arg8[%c1_34, %c0_35, %c0_36] : memref<2x8x1xf32, #tpu.memory_space<vmem>>, vector<1x8x1xf32>
    %59 = vector.shape_cast %58 : vector<1x8x1xf32> to vector<8x1xf32>
    %60 = arith.mulf %54, %59 : vector<8x1xf32>
    %cst_37 = arith.constant dense<0.000000e+00> : vector<8xf32>
    %61 = vector.multi_reduction <add>, %57, %cst_37 [1] : vector<8x8xf32> to vector<8xf32>
    %62 = vector.shape_cast %61 : vector<8xf32> to vector<8x1xf32>
    %63 = arith.addf %60, %62 : vector<8x1xf32>
    %c1_38 = arith.constant 1 : index
    %c0_39 = arith.constant 0 : index
    %c0_40 = arith.constant 0 : index
    %64 = vector.load %arg8[%c1_38, %c0_39, %c0_40] : memref<2x8x1xf32, #tpu.memory_space<vmem>>, vector<1x8x1xf32>
    %65 = vector.shape_cast %64 : vector<1x8x1xf32> to vector<8x1xf32>
    %66 = vector.shape_cast %63 : vector<8x1xf32> to vector<1x8x1xf32>
    tpu.vector_store %arg8[%c1_38, %c0_39, %c0_40], %66 {strides = array<i32>} : memref<2x8x1xf32, #tpu.memory_space<vmem>>, vector<1x8x1xf32>,
    %67 = arith.truncf %57 : vector<8x8xf32> to vector<8x8xbf16>
    %68 = vector.extract_strided_slice %8 {offsets = [0, 64], sizes = [8, 64], strides = [1, 1]} : vector<8x128xbf16> to vector<8x64xbf16>
    %cst_41 = arith.constant dense<0.000000e+00> : vector<8x64xf32>
    %69 = tpu.matmul %67, %68, %cst_41 {dimension_numbers = #tpu.dot_dimension_numbers<[1], [0], [0], [1], [0, 0, 1, 1], [], []>} : vector<8x8xbf16>, vector<8x64xbf16>, vector<8x64xf32> -> vector<8x64xf32>
    %c1_42 = arith.constant 1 : index
    %c0_43 = arith.constant 0 : index
    %c0_44 = arith.constant 0 : index
    %70 = vector.load %arg9[%c1_42, %c0_43, %c0_44] : memref<2x8x64xf32, #tpu.memory_space<vmem>>, vector<1x8x64xf32>
    %71 = vector.shape_cast %70 : vector<1x8x64xf32> to vector<8x64xf32>
    %72 = vector.broadcast %54 : vector<8x1xf32> to vector<8x64xf32>
    %73 = arith.mulf %72, %71 : vector<8x64xf32>
    %74 = arith.addf %73, %69 : vector<8x64xf32>
    %c1_45 = arith.constant 1 : index
    %c0_46 = arith.constant 0 : index
    %c0_47 = arith.constant 0 : index
    %75 = vector.load %arg9[%c1_45, %c0_46, %c0_47] : memref<2x8x64xf32, #tpu.memory_space<vmem>>, vector<1x8x64xf32>
    %76 = vector.shape_cast %75 : vector<1x8x64xf32> to vector<8x64xf32>
    %77 = vector.shape_cast %74 : vector<8x64xf32> to vector<1x8x64xf32>
    tpu.vector_store %arg9[%c1_45, %c0_46, %c0_47], %77 {strides = array<i32>} : memref<2x8x64xf32, #tpu.memory_space<vmem>>, vector<1x8x64xf32>,
    %c1_48 = arith.constant 1 : index
    %c0_49 = arith.constant 0 : index
    %c0_50 = arith.constant 0 : index
    %78 = vector.load %arg7[%c1_48, %c0_49, %c0_50] : memref<2x8x1xf32, #tpu.memory_space<vmem>>, vector<1x8x1xf32>
    %79 = vector.shape_cast %78 : vector<1x8x1xf32> to vector<8x1xf32>
    %80 = vector.shape_cast %52 : vector<8x1xf32> to vector<1x8x1xf32>
    tpu.vector_store %arg7[%c1_48, %c0_49, %c0_50], %80 {strides = array<i32>} : memref<2x8x1xf32, #tpu.memory_space<vmem>>, vector<1x8x1xf32>,
    %c0_i32_51 = arith.constant 0 : i32
    %81 = arith.cmpi eq, %arg2, %c0_i32_51 : i32
    %82 = arith.extui %81 : i1 to i32
    %c0_i32_52 = arith.constant 0 : i32
    %83 = arith.cmpi ne, %82, %c0_i32_52 : i32
    scf.if %83 {
      %c0_53 = arith.constant 0 : index
      %c0_54 = arith.constant 0 : index
      %c0_55 = arith.constant 0 : index
      %84 = vector.load %arg8[%c0_53, %c0_54, %c0_55] : memref<2x8x1xf32, #tpu.memory_space<vmem>>, vector<1x8x1xf32>
      %85 = vector.shape_cast %84 : vector<1x8x1xf32> to vector<8x1xf32>
      %86 = tpu.reciprocal %85 {approx = true} : vector<8x1xf32> -> vector<8x1xf32>
      %c0_56 = arith.constant 0 : index
      %c0_57 = arith.constant 0 : index
      %c0_58 = arith.constant 0 : index
      %87 = vector.load %arg9[%c0_56, %c0_57, %c0_58] : memref<2x8x64xf32, #tpu.memory_space<vmem>>, vector<1x8x64xf32>
      %88 = vector.shape_cast %87 : vector<1x8x64xf32> to vector<8x64xf32>
      %89 = vector.broadcast %86 : vector<8x1xf32> to vector<8x64xf32>
      %90 = arith.mulf %88, %89 : vector<8x64xf32>
      %c1_59 = arith.constant 1 : index
      %c0_60 = arith.constant 0 : index
      %c0_61 = arith.constant 0 : index
      %91 = vector.load %arg8[%c1_59, %c0_60, %c0_61] : memref<2x8x1xf32, #tpu.memory_space<vmem>>, vector<1x8x1xf32>
      %92 = vector.shape_cast %91 : vector<1x8x1xf32> to vector<8x1xf32>
      %93 = tpu.reciprocal %92 {approx = true} : vector<8x1xf32> -> vector<8x1xf32>
      %c1_62 = arith.constant 1 : index
      %c0_63 = arith.constant 0 : index
      %c0_64 = arith.constant 0 : index
      %94 = vector.load %arg9[%c1_62, %c0_63, %c0_64] : memref<2x8x64xf32, #tpu.memory_space<vmem>>, vector<1x8x64xf32>
      %95 = vector.shape_cast %94 : vector<1x8x64xf32> to vector<8x64xf32>
      %96 = vector.broadcast %93 : vector<8x1xf32> to vector<8x64xf32>
      %97 = arith.mulf %95, %96 : vector<8x64xf32>
      %98 = tpu.concatenate %90, %97 in 1 : vector<8x64xf32>, vector<8x64xf32> -> vector<8x128xf32>
      %99 = arith.truncf %98 : vector<8x128xf32> to vector<8x128xbf16>
      %c0_65 = arith.constant 0 : index
      %c0_66 = arith.constant 0 : index
      %c0_67 = arith.constant 0 : index
      %100 = vector.load %arg6[%c0_65, %c0_66, %c0_67] : memref<1x8x128xbf16, #tpu.memory_space<vmem>>, vector<1x8x128xbf16>
      %101 = vector.shape_cast %100 : vector<1x8x128xbf16> to vector<8x128xbf16>
      %102 = vector.shape_cast %99 : vector<8x128xbf16> to vector<1x8x128xbf16>
      tpu.vector_store %arg6[%c0_65, %c0_66, %c0_67], %102 {strides = array<i32>} : memref<1x8x128xbf16, #tpu.memory_space<vmem>>, vector<1x8x128xbf16>,
    } else {
    }
    return
  }
  func.func @transform_0(%arg0: i32, %arg1: i32, %arg2: i32) -> (i32, i32, i32) {
    %c0_i32 = arith.constant 0 : i32
    %c0_i32_0 = arith.constant 0 : i32
    return %arg0, %arg1, %c0_i32 : i32, i32, i32
  }
  func.func @transform_1(%arg0: i32, %arg1: i32, %arg2: i32) -> (i32, i32, i32) {
    %c1_i32 = arith.constant 1 : i32
    %c0_i32 = arith.constant 0 : i32
    return %arg0, %arg2, %c1_i32 : i32, i32, i32
  }
  func.func @transform_2(%arg0: i32, %arg1: i32, %arg2: i32) -> (i32, i32, i32) {
    %c2_i32 = arith.constant 2 : i32
    %c0_i32 = arith.constant 0 : i32
    return %arg0, %arg2, %c2_i32 : i32, i32, i32
  }
  func.func @transform_3(%arg0: i32, %arg1: i32, %arg2: i32) -> (i32, i32, i32) {
    %c0_i32 = arith.constant 0 : i32
    %c0_i32_0 = arith.constant 0 : i32
    return %arg0, %arg1, %c0_i32 : i32, i32, i32
  }
}

module attributes {stable_mosaic.version = 11 : i64} {
  func.func @_matmul_kernel(%arg0: i32, %arg1: i32, %arg2: i32, %arg3: memref<8x128xbf16, #tpu.memory_space<vmem>>, %arg4: memref<512x128xbf16, #tpu.memory_space<vmem>>, %arg5: memref<8x512xbf16, #tpu.memory_space<vmem>>, %arg6: memref<8x512xf32, #tpu.memory_space<vmem>>) attributes {dimension_semantics = [#tpu.dimension_semantics<parallel>, #tpu.dimension_semantics<parallel>, #tpu.dimension_semantics<arbitrary>], iteration_bounds = array<i64: 1, 1, 1>, scalar_prefetch = 0 : i64, scratch_operands = 1 : i64, tpu.core_type = #tpu.core_type<tc>, window_params = [{transform_indices = @transform_0, window_bounds = array<i64: 8, 128>}, {transform_indices = @transform_1, window_bounds = array<i64: 512, 128>}, {transform_indices = @transform_2, window_bounds = array<i64: 8, 512>}]} {
    %c0_i32 = arith.constant 0 : i32
    %0 = arith.cmpi eq, %arg2, %c0_i32 : i32
    %1 = arith.extui %0 : i1 to i32
    %c0_i32_0 = arith.constant 0 : i32
    %2 = arith.cmpi ne, %1, %c0_i32_0 : i32
    scf.if %2 {
      %cst_10 = arith.constant 0.000000e+00 : f32
      %12 = vector.broadcast %cst_10 : f32 to vector<8x512xf32>
      %c0_11 = arith.constant 0 : index
      %c0_12 = arith.constant 0 : index
      %13 = vector.load %arg6[%c0_11, %c0_12] : memref<8x512xf32, #tpu.memory_space<vmem>>, vector<8x512xf32>
      tpu.vector_store %arg6[%c0_11, %c0_12], %12 {strides = array<i32>} : memref<8x512xf32, #tpu.memory_space<vmem>>, vector<8x512xf32>,
    } else {
    }
    %c0 = arith.constant 0 : index
    %c0_1 = arith.constant 0 : index
    %3 = vector.load %arg6[%c0, %c0_1] : memref<8x512xf32, #tpu.memory_space<vmem>>, vector<8x512xf32>
    %c0_2 = arith.constant 0 : index
    %c0_3 = arith.constant 0 : index
    %4 = vector.load %arg3[%c0_2, %c0_3] : memref<8x128xbf16, #tpu.memory_space<vmem>>, vector<8x128xbf16>
    %c0_4 = arith.constant 0 : index
    %c0_5 = arith.constant 0 : index
    %5 = vector.load %arg4[%c0_4, %c0_5] : memref<512x128xbf16, #tpu.memory_space<vmem>>, vector<512x128xbf16>
    %cst = arith.constant dense<0.000000e+00> : vector<8x512xf32>
    %6 = tpu.matmul %4, %5, %cst {dimension_numbers = #tpu.dot_dimension_numbers<[1], [1], [0], [0], [0, 0, 1, 0], [], []>} : vector<8x128xbf16>, vector<512x128xbf16>, vector<8x512xf32> -> vector<8x512xf32>
    %7 = arith.addf %3, %6 : vector<8x512xf32>
    %c0_6 = arith.constant 0 : index
    %c0_7 = arith.constant 0 : index
    %8 = vector.load %arg6[%c0_6, %c0_7] : memref<8x512xf32, #tpu.memory_space<vmem>>, vector<8x512xf32>
    tpu.vector_store %arg6[%c0_6, %c0_7], %7 {strides = array<i32>} : memref<8x512xf32, #tpu.memory_space<vmem>>, vector<8x512xf32>,
    %c0_i32_8 = arith.constant 0 : i32
    %9 = arith.cmpi eq, %arg2, %c0_i32_8 : i32
    %10 = arith.extui %9 : i1 to i32
    %c0_i32_9 = arith.constant 0 : i32
    %11 = arith.cmpi ne, %10, %c0_i32_9 : i32
    scf.if %11 {
      %c0_10 = arith.constant 0 : index
      %c0_11 = arith.constant 0 : index
      %12 = vector.load %arg6[%c0_10, %c0_11] : memref<8x512xf32, #tpu.memory_space<vmem>>, vector<8x512xf32>
      %13 = arith.mulf %12, %12 : vector<8x512xf32>
      %14 = arith.mulf %12, %13 : vector<8x512xf32>
      %cst_12 = arith.constant 4.471500e-02 : f32
      %15 = vector.broadcast %cst_12 : f32 to vector<8x512xf32>
      %16 = arith.mulf %15, %14 : vector<8x512xf32>
      %17 = arith.addf %12, %16 : vector<8x512xf32>
      %cst_13 = arith.constant 0.797884583 : f32
      %18 = vector.broadcast %cst_13 : f32 to vector<8x512xf32>
      %19 = arith.mulf %18, %17 : vector<8x512xf32>
      %20 = math.tanh %19 : vector<8x512xf32>
      %cst_14 = arith.constant 1.000000e+00 : f32
      %21 = vector.broadcast %cst_14 : f32 to vector<8x512xf32>
      %22 = arith.addf %21, %20 : vector<8x512xf32>
      %cst_15 = arith.constant 5.000000e-01 : f32
      %23 = vector.broadcast %cst_15 : f32 to vector<8x512xf32>
      %24 = arith.mulf %23, %22 : vector<8x512xf32>
      %25 = arith.mulf %12, %24 : vector<8x512xf32>
      %26 = arith.truncf %25 : vector<8x512xf32> to vector<8x512xbf16>
      %c0_16 = arith.constant 0 : index
      %c0_17 = arith.constant 0 : index
      %27 = vector.load %arg5[%c0_16, %c0_17] : memref<8x512xbf16, #tpu.memory_space<vmem>>, vector<8x512xbf16>
      tpu.vector_store %arg5[%c0_16, %c0_17], %26 {strides = array<i32>} : memref<8x512xbf16, #tpu.memory_space<vmem>>, vector<8x512xbf16>,
    } else {
    }
    return
  }
  func.func @transform_0(%arg0: i32, %arg1: i32, %arg2: i32) -> (i32, i32) {
    %c0_i32 = arith.constant 0 : i32
    return %arg0, %arg2 : i32, i32
  }
  func.func @transform_1(%arg0: i32, %arg1: i32, %arg2: i32) -> (i32, i32) {
    %c0_i32 = arith.constant 0 : i32
    return %arg1, %arg2 : i32, i32
  }
  func.func @transform_2(%arg0: i32, %arg1: i32, %arg2: i32) -> (i32, i32) {
    %c0_i32 = arith.constant 0 : i32
    return %arg0, %arg1 : i32, i32
  }
}

module attributes {stable_mosaic.version = 11 : i64} {
  func.func @_matmul_kernel(%arg0: i32, %arg1: i32, %arg2: i32, %arg3: memref<8x512xbf16, #tpu.memory_space<vmem>>, %arg4: memref<128x512xbf16, #tpu.memory_space<vmem>>, %arg5: memref<8x128xf32, #tpu.memory_space<vmem>>, %arg6: memref<8x128xf32, #tpu.memory_space<vmem>>, %arg7: memref<8x128xf32, #tpu.memory_space<vmem>>) attributes {dimension_semantics = [#tpu.dimension_semantics<parallel>, #tpu.dimension_semantics<parallel>, #tpu.dimension_semantics<arbitrary>], iteration_bounds = array<i64: 1, 1, 1>, scalar_prefetch = 0 : i64, scratch_operands = 1 : i64, tpu.core_type = #tpu.core_type<tc>, window_params = [{transform_indices = @transform_0, window_bounds = array<i64: 8, 512>}, {transform_indices = @transform_1, window_bounds = array<i64: 128, 512>}, {transform_indices = @transform_2, window_bounds = array<i64: 8, 128>}, {transform_indices = @transform_3, window_bounds = array<i64: 8, 128>}]} {
    %c0_i32 = arith.constant 0 : i32
    %0 = arith.cmpi eq, %arg2, %c0_i32 : i32
    %1 = arith.extui %0 : i1 to i32
    %c0_i32_0 = arith.constant 0 : i32
    %2 = arith.cmpi ne, %1, %c0_i32_0 : i32
    scf.if %2 {
      %cst_10 = arith.constant 0.000000e+00 : f32
      %12 = vector.broadcast %cst_10 : f32 to vector<8x128xf32>
      %c0_11 = arith.constant 0 : index
      %c0_12 = arith.constant 0 : index
      %13 = vector.load %arg7[%c0_11, %c0_12] : memref<8x128xf32, #tpu.memory_space<vmem>>, vector<8x128xf32>
      tpu.vector_store %arg7[%c0_11, %c0_12], %12 {strides = array<i32>} : memref<8x128xf32, #tpu.memory_space<vmem>>, vector<8x128xf32>,
    } else {
    }
    %c0 = arith.constant 0 : index
    %c0_1 = arith.constant 0 : index
    %3 = vector.load %arg7[%c0, %c0_1] : memref<8x128xf32, #tpu.memory_space<vmem>>, vector<8x128xf32>
    %c0_2 = arith.constant 0 : index
    %c0_3 = arith.constant 0 : index
    %4 = vector.load %arg3[%c0_2, %c0_3] : memref<8x512xbf16, #tpu.memory_space<vmem>>, vector<8x512xbf16>
    %c0_4 = arith.constant 0 : index
    %c0_5 = arith.constant 0 : index
    %5 = vector.load %arg4[%c0_4, %c0_5] : memref<128x512xbf16, #tpu.memory_space<vmem>>, vector<128x512xbf16>
    %cst = arith.constant dense<0.000000e+00> : vector<8x128xf32>
    %6 = tpu.matmul %4, %5, %cst {dimension_numbers = #tpu.dot_dimension_numbers<[1], [1], [0], [0], [0, 0, 1, 0], [], []>} : vector<8x512xbf16>, vector<128x512xbf16>, vector<8x128xf32> -> vector<8x128xf32>
    %7 = arith.addf %3, %6 : vector<8x128xf32>
    %c0_6 = arith.constant 0 : index
    %c0_7 = arith.constant 0 : index
    %8 = vector.load %arg7[%c0_6, %c0_7] : memref<8x128xf32, #tpu.memory_space<vmem>>, vector<8x128xf32>
    tpu.vector_store %arg7[%c0_6, %c0_7], %7 {strides = array<i32>} : memref<8x128xf32, #tpu.memory_space<vmem>>, vector<8x128xf32>,
    %c0_i32_8 = arith.constant 0 : i32
    %9 = arith.cmpi eq, %arg2, %c0_i32_8 : i32
    %10 = arith.extui %9 : i1 to i32
    %c0_i32_9 = arith.constant 0 : i32
    %11 = arith.cmpi ne, %10, %c0_i32_9 : i32
    scf.if %11 {
      %c0_10 = arith.constant 0 : index
      %c0_11 = arith.constant 0 : index
      %12 = vector.load %arg7[%c0_10, %c0_11] : memref<8x128xf32, #tpu.memory_space<vmem>>, vector<8x128xf32>
      %c0_12 = arith.constant 0 : index
      %c0_13 = arith.constant 0 : index
      %13 = vector.load %arg5[%c0_12, %c0_13] : memref<8x128xf32, #tpu.memory_space<vmem>>, vector<8x128xf32>
      %14 = arith.addf %12, %13 : vector<8x128xf32>
      %c0_14 = arith.constant 0 : index
      %c0_15 = arith.constant 0 : index
      %15 = vector.load %arg6[%c0_14, %c0_15] : memref<8x128xf32, #tpu.memory_space<vmem>>, vector<8x128xf32>
      tpu.vector_store %arg6[%c0_14, %c0_15], %14 {strides = array<i32>} : memref<8x128xf32, #tpu.memory_space<vmem>>, vector<8x128xf32>,
    } else {
    }
    return
  }
  func.func @transform_0(%arg0: i32, %arg1: i32, %arg2: i32) -> (i32, i32) {
    %c0_i32 = arith.constant 0 : i32
    return %arg0, %arg2 : i32, i32
  }
  func.func @transform_1(%arg0: i32, %arg1: i32, %arg2: i32) -> (i32, i32) {
    %c0_i32 = arith.constant 0 : i32
    return %arg1, %arg2 : i32, i32
  }
  func.func @transform_2(%arg0: i32, %arg1: i32, %arg2: i32) -> (i32, i32) {
    %c0_i32 = arith.constant 0 : i32
    return %arg0, %arg1 : i32, i32
  }
  func.func @transform_3(%arg0: i32, %arg1: i32, %arg2: i32) -> (i32, i32) {
    %c0_i32 = arith.constant 0 : i32
    return %arg0, %arg1 : i32, i32
  }
}

module attributes {stable_mosaic.version = 11 : i64} {
  func.func @_matmul_kernel(%arg0: i32, %arg1: i32, %arg2: i32, %arg3: memref<8x128xbf16, #tpu.memory_space<vmem>>, %arg4: memref<128x128xbf16, #tpu.memory_space<vmem>>, %arg5: memref<8x128xf32, #tpu.memory_space<vmem>>, %arg6: memref<8x128xf32, #tpu.memory_space<vmem>>, %arg7: memref<8x128xf32, #tpu.memory_space<vmem>>) attributes {dimension_semantics = [#tpu.dimension_semantics<parallel>, #tpu.dimension_semantics<parallel>, #tpu.dimension_semantics<arbitrary>], iteration_bounds = array<i64: 1, 1, 1>, scalar_prefetch = 0 : i64, scratch_operands = 1 : i64, tpu.core_type = #tpu.core_type<tc>, window_params = [{transform_indices = @transform_0, window_bounds = array<i64: 8, 128>}, {transform_indices = @transform_1, window_bounds = array<i64: 128, 128>}, {transform_indices = @transform_2, window_bounds = array<i64: 8, 128>}, {transform_indices = @transform_3, window_bounds = array<i64: 8, 128>}]} {
    %c0_i32 = arith.constant 0 : i32
    %0 = arith.cmpi eq, %arg2, %c0_i32 : i32
    %1 = arith.extui %0 : i1 to i32
    %c0_i32_0 = arith.constant 0 : i32
    %2 = arith.cmpi ne, %1, %c0_i32_0 : i32
    scf.if %2 {
      %cst_10 = arith.constant 0.000000e+00 : f32
      %12 = vector.broadcast %cst_10 : f32 to vector<8x128xf32>
      %c0_11 = arith.constant 0 : index
      %c0_12 = arith.constant 0 : index
      %13 = vector.load %arg7[%c0_11, %c0_12] : memref<8x128xf32, #tpu.memory_space<vmem>>, vector<8x128xf32>
      tpu.vector_store %arg7[%c0_11, %c0_12], %12 {strides = array<i32>} : memref<8x128xf32, #tpu.memory_space<vmem>>, vector<8x128xf32>,
    } else {
    }
    %c0 = arith.constant 0 : index
    %c0_1 = arith.constant 0 : index
    %3 = vector.load %arg7[%c0, %c0_1] : memref<8x128xf32, #tpu.memory_space<vmem>>, vector<8x128xf32>
    %c0_2 = arith.constant 0 : index
    %c0_3 = arith.constant 0 : index
    %4 = vector.load %arg3[%c0_2, %c0_3] : memref<8x128xbf16, #tpu.memory_space<vmem>>, vector<8x128xbf16>
    %c0_4 = arith.constant 0 : index
    %c0_5 = arith.constant 0 : index
    %5 = vector.load %arg4[%c0_4, %c0_5] : memref<128x128xbf16, #tpu.memory_space<vmem>>, vector<128x128xbf16>
    %cst = arith.constant dense<0.000000e+00> : vector<8x128xf32>
    %6 = tpu.matmul %4, %5, %cst {dimension_numbers = #tpu.dot_dimension_numbers<[1], [1], [0], [0], [0, 0, 1, 0], [], []>} : vector<8x128xbf16>, vector<128x128xbf16>, vector<8x128xf32> -> vector<8x128xf32>
    %7 = arith.addf %3, %6 : vector<8x128xf32>
    %c0_6 = arith.constant 0 : index
    %c0_7 = arith.constant 0 : index
    %8 = vector.load %arg7[%c0_6, %c0_7] : memref<8x128xf32, #tpu.memory_space<vmem>>, vector<8x128xf32>
    tpu.vector_store %arg7[%c0_6, %c0_7], %7 {strides = array<i32>} : memref<8x128xf32, #tpu.memory_space<vmem>>, vector<8x128xf32>,
    %c0_i32_8 = arith.constant 0 : i32
    %9 = arith.cmpi eq, %arg2, %c0_i32_8 : i32
    %10 = arith.extui %9 : i1 to i32
    %c0_i32_9 = arith.constant 0 : i32
    %11 = arith.cmpi ne, %10, %c0_i32_9 : i32
    scf.if %11 {
      %c0_10 = arith.constant 0 : index
      %c0_11 = arith.constant 0 : index
      %12 = vector.load %arg7[%c0_10, %c0_11] : memref<8x128xf32, #tpu.memory_space<vmem>>, vector<8x128xf32>
      %c0_12 = arith.constant 0 : index
      %c0_13 = arith.constant 0 : index
      %13 = vector.load %arg5[%c0_12, %c0_13] : memref<8x128xf32, #tpu.memory_space<vmem>>, vector<8x128xf32>
      %14 = arith.addf %12, %13 : vector<8x128xf32>
      %c0_14 = arith.constant 0 : index
      %c0_15 = arith.constant 0 : index
      %15 = vector.load %arg6[%c0_14, %c0_15] : memref<8x128xf32, #tpu.memory_space<vmem>>, vector<8x128xf32>
      tpu.vector_store %arg6[%c0_14, %c0_15], %14 {strides = array<i32>} : memref<8x128xf32, #tpu.memory_space<vmem>>, vector<8x128xf32>,
    } else {
    }
    return
  }
  func.func @transform_0(%arg0: i32, %arg1: i32, %arg2: i32) -> (i32, i32) {
    %c0_i32 = arith.constant 0 : i32
    return %arg0, %arg2 : i32, i32
  }
  func.func @transform_1(%arg0: i32, %arg1: i32, %arg2: i32) -> (i32, i32) {
    %c0_i32 = arith.constant 0 : i32
    return %arg1, %arg2 : i32, i32
  }
  func.func @transform_2(%arg0: i32, %arg1: i32, %arg2: i32) -> (i32, i32) {
    %c0_i32 = arith.constant 0 : i32
    return %arg0, %arg1 : i32, i32
  }
  func.func @transform_3(%arg0: i32, %arg1: i32, %arg2: i32) -> (i32, i32) {
    %c0_i32 = arith.constant 0 : i32
    return %arg0, %arg1 : i32, i32
  }
}

module attributes {stable_mosaic.version = 11 : i64} {
  func.func @_matmul_kernel(%arg0: i32, %arg1: i32, %arg2: i32, %arg3: memref<8x128xbf16, #tpu.memory_space<vmem>>, %arg4: memref<128x128xbf16, #tpu.memory_space<vmem>>, %arg5: memref<1x128xf32, #tpu.memory_space<vmem>>, %arg6: memref<8x128xf32, #tpu.memory_space<vmem>>, %arg7: memref<8x128xf32, #tpu.memory_space<vmem>>) attributes {dimension_semantics = [#tpu.dimension_semantics<parallel>, #tpu.dimension_semantics<parallel>, #tpu.dimension_semantics<arbitrary>], iteration_bounds = array<i64: 1, 7, 1>, scalar_prefetch = 0 : i64, scratch_operands = 1 : i64, tpu.core_type = #tpu.core_type<tc>, window_params = [{transform_indices = @transform_0, window_bounds = array<i64: 8, 128>}, {transform_indices = @transform_1, window_bounds = array<i64: 128, 128>}, {transform_indices = @transform_2, window_bounds = array<i64: 1, 128>}, {transform_indices = @transform_3, window_bounds = array<i64: 8, 128>}]} {
    %c0_i32 = arith.constant 0 : i32
    %0 = arith.cmpi eq, %arg2, %c0_i32 : i32
    %1 = arith.extui %0 : i1 to i32
    %c0_i32_0 = arith.constant 0 : i32
    %2 = arith.cmpi ne, %1, %c0_i32_0 : i32
    scf.if %2 {
      %cst_10 = arith.constant 0.000000e+00 : f32
      %12 = vector.broadcast %cst_10 : f32 to vector<8x128xf32>
      %c0_11 = arith.constant 0 : index
      %c0_12 = arith.constant 0 : index
      %13 = vector.load %arg7[%c0_11, %c0_12] : memref<8x128xf32, #tpu.memory_space<vmem>>, vector<8x128xf32>
      tpu.vector_store %arg7[%c0_11, %c0_12], %12 {strides = array<i32>} : memref<8x128xf32, #tpu.memory_space<vmem>>, vector<8x128xf32>,
    } else {
    }
    %c0 = arith.constant 0 : index
    %c0_1 = arith.constant 0 : index
    %3 = vector.load %arg7[%c0, %c0_1] : memref<8x128xf32, #tpu.memory_space<vmem>>, vector<8x128xf32>
    %c0_2 = arith.constant 0 : index
    %c0_3 = arith.constant 0 : index
    %4 = vector.load %arg3[%c0_2, %c0_3] : memref<8x128xbf16, #tpu.memory_space<vmem>>, vector<8x128xbf16>
    %c0_4 = arith.constant 0 : index
    %c0_5 = arith.constant 0 : index
    %5 = vector.load %arg4[%c0_4, %c0_5] : memref<128x128xbf16, #tpu.memory_space<vmem>>, vector<128x128xbf16>
    %cst = arith.constant dense<0.000000e+00> : vector<8x128xf32>
    %6 = tpu.matmul %4, %5, %cst {dimension_numbers = #tpu.dot_dimension_numbers<[1], [1], [0], [0], [0, 0, 1, 0], [], []>} : vector<8x128xbf16>, vector<128x128xbf16>, vector<8x128xf32> -> vector<8x128xf32>
    %7 = arith.addf %3, %6 : vector<8x128xf32>
    %c0_6 = arith.constant 0 : index
    %c0_7 = arith.constant 0 : index
    %8 = vector.load %arg7[%c0_6, %c0_7] : memref<8x128xf32, #tpu.memory_space<vmem>>, vector<8x128xf32>
    tpu.vector_store %arg7[%c0_6, %c0_7], %7 {strides = array<i32>} : memref<8x128xf32, #tpu.memory_space<vmem>>, vector<8x128xf32>,
    %c0_i32_8 = arith.constant 0 : i32
    %9 = arith.cmpi eq, %arg2, %c0_i32_8 : i32
    %10 = arith.extui %9 : i1 to i32
    %c0_i32_9 = arith.constant 0 : i32
    %11 = arith.cmpi ne, %10, %c0_i32_9 : i32
    scf.if %11 {
      %c0_10 = arith.constant 0 : index
      %c0_11 = arith.constant 0 : index
      %12 = vector.load %arg7[%c0_10, %c0_11] : memref<8x128xf32, #tpu.memory_space<vmem>>, vector<8x128xf32>
      %c0_12 = arith.constant 0 : index
      %c0_13 = arith.constant 0 : index
      %13 = vector.load %arg5[%c0_12, %c0_13] : memref<1x128xf32, #tpu.memory_space<vmem>>, vector<1x128xf32>
      %14 = vector.broadcast %13 : vector<1x128xf32> to vector<8x128xf32>
      %15 = arith.addf %12, %14 : vector<8x128xf32>
      %c0_14 = arith.constant 0 : index
      %c0_15 = arith.constant 0 : index
      %16 = vector.load %arg6[%c0_14, %c0_15] : memref<8x128xf32, #tpu.memory_space<vmem>>, vector<8x128xf32>
      tpu.vector_store %arg6[%c0_14, %c0_15], %15 {strides = array<i32>} : memref<8x128xf32, #tpu.memory_space<vmem>>, vector<8x128xf32>,
    } else {
    }
    return
  }
  func.func @transform_0(%arg0: i32, %arg1: i32, %arg2: i32) -> (i32, i32) {
    %c0_i32 = arith.constant 0 : i32
    return %arg0, %arg2 : i32, i32
  }
  func.func @transform_1(%arg0: i32, %arg1: i32, %arg2: i32) -> (i32, i32) {
    %c0_i32 = arith.constant 0 : i32
    return %arg1, %arg2 : i32, i32
  }
  func.func @transform_2(%arg0: i32, %arg1: i32, %arg2: i32) -> (i32, i32) {
    %c0_i32 = arith.constant 0 : i32
    %c0_i32_0 = arith.constant 0 : i32
    return %c0_i32, %arg1 : i32, i32
  }
  func.func @transform_3(%arg0: i32, %arg1: i32, %arg2: i32) -> (i32, i32) {
    %c0_i32 = arith.constant 0 : i32
    return %arg0, %arg1 : i32, i32
  }
}

</mosaic_0001>

<llo_original>
// kernel: transformer_forward.18
$region0: #{transformer_forward.18}
  #allocation0 [shape = 'u32[]', space=smem, size = 0x4, offset = 0x4, fixed_abs, tag = 'smem constant byte address 0x4 - core index']
  #allocation1 [shape = 'u32[144,128]{1,0:T(1,128)}', space=vmem, size = 0x12000, scoped, tag = 'internal scratch']
  %s0 = inlined_call_operand.vmem [shape: f32[8,128], index: 0, kind: input, shape index: {}]
  %s1 = inlined_call_operand.vmem [shape: f32[1,128], index: 1, kind: input, shape index: {}]
  %s2 = inlined_call_operand.vmem [shape: bf16[8,128], index: 2, kind: output, shape index: {}]
  %s3 = sld [smem:[#allocation0]]
  $region18: #{transformer_forward.18} parent=0
    _
  %s5 = ssub.s32 1, %s3
  %s6 = scalar_select 0, %s5, %s3
  // Predicated region
  $region2: #{transformer_forward.18} parent=0 // pred_check
    _
  $region3: #{transformer_forward.18} parent=0 // pred_check_branch
    %8 = sbr.rel (0) target = $region5
  $region4: #{transformer_forward.18} parent=0 // pred_region
    _
  $region5: #{transformer_forward.18} parent=0 // pred_fallthru
    _
  // Predicated region
  $region6: #{transformer_forward.18} parent=0 // pred_check
    _
  $region7: #{transformer_forward.18} parent=0 // pred_check_branch
    %10 = sbr.rel (0) target = $region9
  $region8: #{transformer_forward.18} parent=0 // pred_region
    _
  $region9: #{transformer_forward.18} parent=0 // pred_fallthru
    _
  %v11 = vld [vmem:[%s0] sm:$0xff]
  %12 = vadd.xlane.f32.xlu0 %v11
  %v13 = vpop.xlane.xlu0 %12
  %v14 = vrcp.pop 128.0
  %v15 = vmul.f32 %v13, %v14
  %v16 = vsub.f32 %v11, %v15
  %v17 = vmul.f32 %v16, %v16
  %18 = vadd.xlane.f32.xlu0 %v17
  %v19 = vpop.xlane.xlu0 %18
  %v20 = vmul.f32 %v19, %v14
  %v21 = vadd.f32 %v20, 1e-05
  %v22 = vrsqrt.pop %v21
  %v23 = vmul.f32 %v16, %v22
  %v24 = vld [vmem:[%s1] sm:$0x1]
  %v26 = vlaneseq
  %v27 = vshrl.u32 %v26, 7
  %v28 = vsub.s32 0, %v27
  %v29 = vrot.slane %v24, %v28
  %v31 = vmul.f32 %v23, %v29
  %v32 = vpack.c.bf16 %v31, %v31
  %33 = vst [vmem:[%s2] sm:$0xf] %v32
  // Predicated region
  $region10: #{transformer_forward.18} parent=0 // pred_check
    _
  $region11: #{transformer_forward.18} parent=0 // pred_check_branch
    %35 = sbr.rel (0) target = $region13
  $region12: #{transformer_forward.18} parent=0 // pred_region
    _
  $region13: #{transformer_forward.18} parent=0 // pred_fallthru
    _
  // Predicated region
  $region14: #{transformer_forward.18} parent=0 // pred_check
    _
  $region15: #{transformer_forward.18} parent=0 // pred_check_branch
    %37 = sbr.rel (0) target = $region17
  $region16: #{transformer_forward.18} parent=0 // pred_region
    _
  $region17: #{transformer_forward.18} parent=0 // pred_fallthru
    _

// kernel: transformer_forward.17
$region0: #{transformer_forward.17}
  #allocation0 [shape = 'u32[]', space=smem, size = 0x4, offset = 0x4, fixed_abs, tag = 'smem constant byte address 0x4 - core index']
  #allocation1 [shape = 'u32[144,128]{1,0:T(1,128)}', space=vmem, size = 0x12000, scoped, tag = 'internal scratch']
  #allocation2 [shape = 'f32[8,128]{1,0:T(8,128)}', space=vmem, size = 0x1000, scoped, tag = 'scratch operand']
  %s0 = inlined_call_operand.vmem [shape: bf16[8,192], index: 0, kind: input, shape index: {}]
  %s1 = inlined_call_operand.vmem [shape: bf16[128,192], index: 1, kind: input, shape index: {}]
  %s2 = inlined_call_operand.vmem [shape: f32[8,128], index: 2, kind: output, shape index: {}]
  %s3 = sld [smem:[#allocation0]]
  $region26: #{transformer_forward.17} parent=0
    _
  %s5 = ssub.s32 1, %s3
  %s6 = scalar_select 0, %s5, %s3
  // Predicated region
  $region2: #{transformer_forward.17} parent=0 // pred_check
    _
  $region3: #{transformer_forward.17} parent=0 // pred_check_branch
    %8 = sbr.rel (0) target = $region5
  $region4: #{transformer_forward.17} parent=0 // pred_region
    _
  $region5: #{transformer_forward.17} parent=0 // pred_fallthru
    _
  // Predicated region
  $region6: #{transformer_forward.17} parent=0 // pred_check
    _
  $region7: #{transformer_forward.17} parent=0 // pred_check_branch
    %10 = sbr.rel (0) target = $region9
  $region8: #{transformer_forward.17} parent=0 // pred_region
    _
  $region9: #{transformer_forward.17} parent=0 // pred_fallthru
    _
  %p12 = scmp.eq.s32.totalorder 0, 0
  // Predicated region
  $region10: #{transformer_forward.17} parent=0 // pred_check
    %p13 = pneg %p12
  $region11: #{transformer_forward.17} parent=0 // pred_check_branch
    %15 = sbr.rel (%p13) target = $region13
  $region12: #{transformer_forward.17} parent=0 // pred_region
    %16 = vst [vmem:[#allocation2] sm:$0xff] 0.0
  $region13: #{transformer_forward.17} parent=0 // pred_fallthru
    _
  %v17 = vld [vmem:[#allocation2] sm:$0xff]
  %v18 = vld [vmem:[%s0] sm:$0xff]
  %v19 = vld [vmem:[%s1] sm:$0xff]
  %v20 = vld [vmem:[%s1 + $0x8] sm:$0xff]
  %v21 = vld [vmem:[%s1 + $0x10] sm:$0xff]
  %v22 = vld [vmem:[%s1 + $0x18] sm:$0xff]
  %v23 = vld [vmem:[%s1 + $0x20] sm:$0xff]
  %v24 = vld [vmem:[%s1 + $0x28] sm:$0xff]
  %v25 = vld [vmem:[%s1 + $0x30] sm:$0xff]
  %v26 = vld [vmem:[%s1 + $0x38] sm:$0xff]
  %v27 = vld [vmem:[%s1 + $0x40] sm:$0xff]
  %v28 = vld [vmem:[%s1 + $0x48] sm:$0xff]
  %v29 = vld [vmem:[%s1 + $0x50] sm:$0xff]
  %v30 = vld [vmem:[%s1 + $0x58] sm:$0xff]
  %v31 = vld [vmem:[%s1 + $0x60] sm:$0xff]
  %v32 = vld [vmem:[%s1 + $0x68] sm:$0xff]
  %v33 = vld [vmem:[%s1 + $0x70] sm:$0xff]
  %v34 = vld [vmem:[%s1 + $0x78] sm:$0xff]
  %v36 = vunpack.c.l.b16 %v18
  %v37 = vunpack.c.h.b16 %v18
  %v38 = vpack.c.b16 %v36, %v36
  %v39 = vpack.c.b16 %v37, %v37
  %v57 = vunpack.c.l.b16 %v19
  %v58 = vunpack.c.h.b16 %v19
  %v59 = vunpack.c.l.b16 %v20
  %v60 = vunpack.c.h.b16 %v20
  %v61 = vunpack.c.l.b16 %v21
  %v62 = vunpack.c.h.b16 %v21
  %v63 = vunpack.c.l.b16 %v22
  %v64 = vunpack.c.h.b16 %v22
  %v65 = vunpack.c.l.b16 %v23
  %v66 = vunpack.c.h.b16 %v23
  %v67 = vunpack.c.l.b16 %v24
  %v68 = vunpack.c.h.b16 %v24
  %v69 = vunpack.c.l.b16 %v25
  %v70 = vunpack.c.h.b16 %v25
  %v71 = vunpack.c.l.b16 %v26
  %v72 = vunpack.c.h.b16 %v26
  %v73 = vunpack.c.l.b16 %v27
  %v74 = vunpack.c.h.b16 %v27
  %v75 = vunpack.c.l.b16 %v28
  %v76 = vunpack.c.h.b16 %v28
  %v77 = vunpack.c.l.b16 %v29
  %v78 = vunpack.c.h.b16 %v29
  %v79 = vunpack.c.l.b16 %v30
  %v80 = vunpack.c.h.b16 %v30
  %v81 = vunpack.c.l.b16 %v31
  %v82 = vunpack.c.h.b16 %v31
  %v83 = vunpack.c.l.b16 %v32
  %v84 = vunpack.c.h.b16 %v32
  %v85 = vunpack.c.l.b16 %v33
  %v86 = vunpack.c.h.b16 %v33
  %v87 = vunpack.c.l.b16 %v34
  %v88 = vunpack.c.h.b16 %v34
  %v89 = vpack.c.b16 %v59, %v57
  %v90 = vpack.c.b16 %v60, %v58
  %v91 = vpack.c.b16 %v63, %v61
  %v92 = vpack.c.b16 %v64, %v62
  %v93 = vpack.c.b16 %v67, %v65
  %v94 = vpack.c.b16 %v68, %v66
  %v95 = vpack.c.b16 %v71, %v69
  %v96 = vpack.c.b16 %v72, %v70
  %v97 = vpack.c.b16 %v75, %v73
  %v98 = vpack.c.b16 %v76, %v74
  %v99 = vpack.c.b16 %v79, %v77
  %v100 = vpack.c.b16 %v80, %v78
  %v101 = vpack.c.b16 %v83, %v81
  %v102 = vpack.c.b16 %v84, %v82
  %v103 = vpack.c.b16 %v87, %v85
  %v104 = vpack.c.b16 %v88, %v86
  %vm113 = vcmask 523264
  %v115 = vsel %vm113, %v39, 0
  %v118 = vsel %vm113, %v90, 0
  %v121 = vsel %vm113, %v92, 0
  %v124 = vsel %vm113, %v94, 0
  %v127 = vsel %vm113, %v96, 0
  %v130 = vsel %vm113, %v98, 0
  %v133 = vsel %vm113, %v100, 0
  %v136 = vsel %vm113, %v102, 0
  %v139 = vsel %vm113, %v104, 0
  %141 = vmatprep.subr.bf16.mxu0 %v118
  %142 = vmatpush1.bf16.xpose.msra.mxu0 %v89
  %143 = vmatprep.subr.bf16.mxu0 %v121
  %144 = vmatpush1.bf16.xpose.msra.mxu0 %v91
  %145 = vmatprep.subr.bf16.mxu0 %v124
  %146 = vmatpush1.bf16.xpose.msra.mxu0 %v93
  %147 = vmatprep.subr.bf16.mxu0 %v127
  %148 = vmatpush1.bf16.xpose.msra.mxu0 %v95
  %149 = vmatprep.subr.bf16.mxu0 %v130
  %150 = vmatpush1.bf16.xpose.msra.mxu0 %v97
  %151 = vmatprep.subr.bf16.mxu0 %v133
  %152 = vmatpush1.bf16.xpose.msra.mxu0 %v99
  %153 = vmatprep.subr.bf16.mxu0 %v136
  %154 = vmatpush1.bf16.xpose.msra.mxu0 %v101
  %155 = vmatprep.subr.bf16.mxu0 %v139
  %156 = vmatpush1.bf16.xpose.msra.mxu0 %v103
  %157 = vmatprep.subr.bf16.mxu0 0
  %158 = vmatpush1.bf16.xpose.msra.mxu0 0
  %159 = vmatprep.subr.bf16.mxu0 0
  %160 = vmatpush1.bf16.xpose.msra.mxu0 0
  %161 = vmatprep.subr.bf16.mxu0 0
  %162 = vmatpush1.bf16.xpose.msra.mxu0 0
  %163 = vmatprep.subr.bf16.mxu0 0
  %164 = vmatpush1.bf16.xpose.msra.mxu0 0
  %165 = vmatprep.subr.bf16.mxu0 0
  %166 = vmatpush1.bf16.xpose.msra.mxu0 0
  %167 = vmatprep.subr.bf16.mxu0 0
  %168 = vmatpush1.bf16.xpose.msra.mxu0 0
  %169 = vmatprep.subr.bf16.mxu0 0
  %170 = vmatpush1.bf16.xpose.msra.mxu0 0
  %171 = vmatprep.subr.bf16.mxu0 0
  %172 = vmatpush1.bf16.xpose.msra.mxu0 0
  %173 = vmatprep.mubr.bf16.mxu0 %v115
  %174 = vmatmul.mubr.bf16.gmra.mrb[0].mxu0 %v38
  %v175 = vpop.f32.mrb[0].mxu0
  %v176 = vadd.f32 0.0, %v175
  %v177 = vpop.f32.mrb[0].mxu0
  %v178 = vpop.f32.mrb[0].mxu0
  %v179 = vpop.f32.mrb[0].mxu0
  %180 = vdwg.mxu0
  %v181 = vadd.f32 %v17, %v176
  %182 = vst [vmem:[#allocation2] sm:$0xff] %v181
  // Predicated region
  $region14: #{transformer_forward.17} parent=0 // pred_check
    %p183 = pneg %p12
  $region15: #{transformer_forward.17} parent=0 // pred_check_branch
    %185 = sbr.rel (%p183) target = $region17
  $region16: #{transformer_forward.17} parent=0 // pred_region
    %v186 = vld [vmem:[#allocation2] sm:$0xff]
    %187 = vst [vmem:[%s2] sm:$0xff] %v186
  $region17: #{transformer_forward.17} parent=0 // pred_fallthru
    _
  // Predicated region
  $region18: #{transformer_forward.17} parent=0 // pred_check
    _
  $region19: #{transformer_forward.17} parent=0 // pred_check_branch
    %189 = sbr.rel (0) target = $region21
  $region20: #{transformer_forward.17} parent=0 // pred_region
    _
  $region21: #{transformer_forward.17} parent=0 // pred_fallthru
    _
  // Predicated region
  $region22: #{transformer_forward.17} parent=0 // pred_check
    _
  $region23: #{transformer_forward.17} parent=0 // pred_check_branch
    %191 = sbr.rel (0) target = $region25
  $region24: #{transformer_forward.17} parent=0 // pred_region
    _
  $region25: #{transformer_forward.17} parent=0 // pred_fallthru
    _

// kernel: transformer_forward.19
$region0: #{transformer_forward.19}
  #allocation0 [shape = 'u32[]', space=smem, size = 0x4, offset = 0x4, fixed_abs, tag = 'smem constant byte address 0x4 - core index']
  #allocation1 [shape = 'u32[144,128]{1,0:T(1,128)}', space=vmem, size = 0x12000, scoped, tag = 'internal scratch']
  #allocation2 [shape = 'f32[8,384]{1,0:T(8,128)}', space=vmem, size = 0x3000, scoped, tag = 'scratch operand']
  %s0 = inlined_call_operand.vmem [shape: bf16[8,128], index: 0, kind: input, shape index: {}]
  %s1 = inlined_call_operand.vmem [shape: bf16[384,128], index: 1, kind: input, shape index: {}]
  %s2 = inlined_call_operand.vmem [shape: bf16[8,384], index: 2, kind: output, shape index: {}]
  %s3 = sld [smem:[#allocation0]]
  $region26: #{transformer_forward.19} parent=0
    _
  %s5 = ssub.s32 1, %s3
  %s6 = scalar_select 0, %s5, %s3
  // Predicated region
  $region2: #{transformer_forward.19} parent=0 // pred_check
    _
  $region3: #{transformer_forward.19} parent=0 // pred_check_branch
    %8 = sbr.rel (0) target = $region5
  $region4: #{transformer_forward.19} parent=0 // pred_region
    _
  $region5: #{transformer_forward.19} parent=0 // pred_fallthru
    _
  // Predicated region
  $region6: #{transformer_forward.19} parent=0 // pred_check
    _
  $region7: #{transformer_forward.19} parent=0 // pred_check_branch
    %10 = sbr.rel (0) target = $region9
  $region8: #{transformer_forward.19} parent=0 // pred_region
    _
  $region9: #{transformer_forward.19} parent=0 // pred_fallthru
    _
  %p12 = scmp.eq.s32.totalorder 0, 0
  // Predicated region
  $region10: #{transformer_forward.19} parent=0 // pred_check
    %p13 = pneg %p12
  $region11: #{transformer_forward.19} parent=0 // pred_check_branch
    %15 = sbr.rel (%p13) target = $region13
  $region12: #{transformer_forward.19} parent=0 // pred_region
    %16 = vst [vmem:[#allocation2] sm:$0xff] 0.0
    %17 = vst [vmem:[#allocation2 + $0x8] sm:$0xff] 0.0
    %18 = vst [vmem:[#allocation2 + $0x10] sm:$0xff] 0.0
  $region13: #{transformer_forward.19} parent=0 // pred_fallthru
    _
  %v19 = vld [vmem:[#allocation2] sm:$0xff]
  %v20 = vld [vmem:[#allocation2 + $0x8] sm:$0xff]
  %v21 = vld [vmem:[#allocation2 + $0x10] sm:$0xff]
  %v22 = vld [vmem:[%s0] sm:$0xf]
  %v23 = vld [vmem:[%s1] sm:$0xf]
  %v24 = vld [vmem:[%s1 + $0x4] sm:$0xf]
  %v25 = vld [vmem:[%s1 + $0x8] sm:$0xf]
  %v26 = vld [vmem:[%s1 + $0xc] sm:$0xf]
  %v27 = vld [vmem:[%s1 + $0x10] sm:$0xf]
  %v28 = vld [vmem:[%s1 + $0x14] sm:$0xf]
  %v29 = vld [vmem:[%s1 + $0x18] sm:$0xf]
  %v30 = vld [vmem:[%s1 + $0x1c] sm:$0xf]
  %v31 = vld [vmem:[%s1 + $0x20] sm:$0xf]
  %v32 = vld [vmem:[%s1 + $0x24] sm:$0xf]
  %v33 = vld [vmem:[%s1 + $0x28] sm:$0xf]
  %v34 = vld [vmem:[%s1 + $0x2c] sm:$0xf]
  %v35 = vld [vmem:[%s1 + $0x30] sm:$0xf]
  %v36 = vld [vmem:[%s1 + $0x34] sm:$0xf]
  %v37 = vld [vmem:[%s1 + $0x38] sm:$0xf]
  %v38 = vld [vmem:[%s1 + $0x3c] sm:$0xf]
  %v39 = vld [vmem:[%s1 + $0x40] sm:$0xf]
  %v40 = vld [vmem:[%s1 + $0x44] sm:$0xf]
  %v41 = vld [vmem:[%s1 + $0x48] sm:$0xf]
  %v42 = vld [vmem:[%s1 + $0x4c] sm:$0xf]
  %v43 = vld [vmem:[%s1 + $0x50] sm:$0xf]
  %v44 = vld [vmem:[%s1 + $0x54] sm:$0xf]
  %v45 = vld [vmem:[%s1 + $0x58] sm:$0xf]
  %v46 = vld [vmem:[%s1 + $0x5c] sm:$0xf]
  %v47 = vld [vmem:[%s1 + $0x60] sm:$0xf]
  %v48 = vld [vmem:[%s1 + $0x64] sm:$0xf]
  %v49 = vld [vmem:[%s1 + $0x68] sm:$0xf]
  %v50 = vld [vmem:[%s1 + $0x6c] sm:$0xf]
  %v51 = vld [vmem:[%s1 + $0x70] sm:$0xf]
  %v52 = vld [vmem:[%s1 + $0x74] sm:$0xf]
  %v53 = vld [vmem:[%s1 + $0x78] sm:$0xf]
  %v54 = vld [vmem:[%s1 + $0x7c] sm:$0xf]
  %v55 = vld [vmem:[%s1 + $0x80] sm:$0xf]
  %v56 = vld [vmem:[%s1 + $0x84] sm:$0xf]
  %v57 = vld [vmem:[%s1 + $0x88] sm:$0xf]
  %v58 = vld [vmem:[%s1 + $0x8c] sm:$0xf]
  %v59 = vld [vmem:[%s1 + $0x90] sm:$0xf]
  %v60 = vld [vmem:[%s1 + $0x94] sm:$0xf]
  %v61 = vld [vmem:[%s1 + $0x98] sm:$0xf]
  %v62 = vld [vmem:[%s1 + $0x9c] sm:$0xf]
  %v63 = vld [vmem:[%s1 + $0xa0] sm:$0xf]
  %v64 = vld [vmem:[%s1 + $0xa4] sm:$0xf]
  %v65 = vld [vmem:[%s1 + $0xa8] sm:$0xf]
  %v66 = vld [vmem:[%s1 + $0xac] sm:$0xf]
  %v67 = vld [vmem:[%s1 + $0xb0] sm:$0xf]
  %v68 = vld [vmem:[%s1 + $0xb4] sm:$0xf]
  %v69 = vld [vmem:[%s1 + $0xb8] sm:$0xf]
  %v70 = vld [vmem:[%s1 + $0xbc] sm:$0xf]
  %v119 = vunpack.c.l.b16 %v23
  %v120 = vunpack.c.l.b16 %v24
  %v121 = vunpack.c.l.b16 %v25
  %v122 = vunpack.c.l.b16 %v26
  %v123 = vunpack.c.l.b16 %v27
  %v124 = vunpack.c.l.b16 %v28
  %v125 = vunpack.c.l.b16 %v29
  %v126 = vunpack.c.l.b16 %v30
  %v127 = vunpack.c.l.b16 %v31
  %v128 = vunpack.c.l.b16 %v32
  %v129 = vunpack.c.l.b16 %v33
  %v130 = vunpack.c.l.b16 %v34
  %v131 = vunpack.c.l.b16 %v35
  %v132 = vunpack.c.l.b16 %v36
  %v133 = vunpack.c.l.b16 %v37
  %v134 = vunpack.c.l.b16 %v38
  %v135 = vunpack.c.l.b16 %v39
  %v136 = vunpack.c.l.b16 %v40
  %v137 = vunpack.c.l.b16 %v41
  %v138 = vunpack.c.l.b16 %v42
  %v139 = vunpack.c.l.b16 %v43
  %v140 = vunpack.c.l.b16 %v44
  %v141 = vunpack.c.l.b16 %v45
  %v142 = vunpack.c.l.b16 %v46
  %v143 = vunpack.c.l.b16 %v47
  %v144 = vunpack.c.l.b16 %v48
  %v145 = vunpack.c.l.b16 %v49
  %v146 = vunpack.c.l.b16 %v50
  %v147 = vunpack.c.l.b16 %v51
  %v148 = vunpack.c.l.b16 %v52
  %v149 = vunpack.c.l.b16 %v53
  %v150 = vunpack.c.l.b16 %v54
  %v151 = vunpack.c.l.b16 %v55
  %v152 = vunpack.c.l.b16 %v56
  %v153 = vunpack.c.l.b16 %v57
  %v154 = vunpack.c.l.b16 %v58
  %v155 = vunpack.c.l.b16 %v59
  %v156 = vunpack.c.l.b16 %v60
  %v157 = vunpack.c.l.b16 %v61
  %v158 = vunpack.c.l.b16 %v62
  %v159 = vunpack.c.l.b16 %v63
  %v160 = vunpack.c.l.b16 %v64
  %v161 = vunpack.c.l.b16 %v65
  %v162 = vunpack.c.l.b16 %v66
  %v163 = vunpack.c.l.b16 %v67
  %v164 = vunpack.c.l.b16 %v68
  %v165 = vunpack.c.l.b16 %v69
  %v166 = vunpack.c.l.b16 %v70
  %v167 = vpack.c.b16 %v120, %v119
  %v168 = vpack.c.b16 %v122, %v121
  %v169 = vpack.c.b16 %v124, %v123
  %v170 = vpack.c.b16 %v126, %v125
  %v171 = vpack.c.b16 %v128, %v127
  %v172 = vpack.c.b16 %v130, %v129
  %v173 = vpack.c.b16 %v132, %v131
  %v174 = vpack.c.b16 %v134, %v133
  %v175 = vpack.c.b16 %v136, %v135
  %v176 = vpack.c.b16 %v138, %v137
  %v177 = vpack.c.b16 %v140, %v139
  %v178 = vpack.c.b16 %v142, %v141
  %v179 = vpack.c.b16 %v144, %v143
  %v180 = vpack.c.b16 %v146, %v145
  %v181 = vpack.c.b16 %v148, %v147
  %v182 = vpack.c.b16 %v150, %v149
  %v183 = vpack.c.b16 %v152, %v151
  %v184 = vpack.c.b16 %v154, %v153
  %v185 = vpack.c.b16 %v156, %v155
  %v186 = vpack.c.b16 %v158, %v157
  %v187 = vpack.c.b16 %v160, %v159
  %v188 = vpack.c.b16 %v162, %v161
  %v189 = vpack.c.b16 %v164, %v163
  %v190 = vpack.c.b16 %v166, %v165
  %215 = vmatprep.subr.bf16.mxu0 0
  %216 = vmatpush1.bf16.xpose.msra.mxu0 %v167
  %217 = vmatprep.subr.bf16.mxu0 0
  %218 = vmatpush1.bf16.xpose.msra.mxu0 %v168
  %219 = vmatprep.subr.bf16.mxu0 0
  %220 = vmatpush1.bf16.xpose.msra.mxu0 %v169
  %221 = vmatprep.subr.bf16.mxu0 0
  %222 = vmatpush1.bf16.xpose.msra.mxu0 %v170
  %223 = vmatprep.subr.bf16.mxu0 0
  %224 = vmatpush1.bf16.xpose.msra.mxu0 %v171
  %225 = vmatprep.subr.bf16.mxu0 0
  %226 = vmatpush1.bf16.xpose.msra.mxu0 %v172
  %227 = vmatprep.subr.bf16.mxu0 0
  %228 = vmatpush1.bf16.xpose.msra.mxu0 %v173
  %229 = vmatprep.subr.bf16.mxu0 0
  %230 = vmatpush1.bf16.xpose.msra.mxu0 %v174
  %231 = vmatprep.subr.bf16.mxu0 0
  %232 = vmatpush1.bf16.xpose.msra.mxu0 %v175
  %233 = vmatprep.subr.bf16.mxu0 0
  %234 = vmatpush1.bf16.xpose.msra.mxu0 %v176
  %235 = vmatprep.subr.bf16.mxu0 0
  %236 = vmatpush1.bf16.xpose.msra.mxu0 %v177
  %237 = vmatprep.subr.bf16.mxu0 0
  %238 = vmatpush1.bf16.xpose.msra.mxu0 %v178
  %239 = vmatprep.subr.bf16.mxu0 0
  %240 = vmatpush1.bf16.xpose.msra.mxu0 %v179
  %241 = vmatprep.subr.bf16.mxu0 0
  %242 = vmatpush1.bf16.xpose.msra.mxu0 %v180
  %243 = vmatprep.subr.bf16.mxu0 0
  %244 = vmatpush1.bf16.xpose.msra.mxu0 %v181
  %245 = vmatprep.subr.bf16.mxu0 0
  %246 = vmatpush1.bf16.xpose.msra.mxu0 %v182
  %247 = vmatprep.mubr.bf16.mxu0 0
  %248 = vmatmul.mubr.bf16.gmra.mrb[0].mxu0 %v22
  %v249 = vpop.f32.mrb[0].mxu0
  %v250 = vadd.f32 0.0, %v249
  %v251 = vpop.f32.mrb[0].mxu0
  %v252 = vadd.f32 0.0, %v251
  %v253 = vpop.f32.mrb[0].mxu0
  %v254 = vpop.f32.mrb[0].mxu0
  %255 = vdwg.mxu0
  %256 = vmatprep.subr.bf16.mxu0 0
  %257 = vmatpush1.bf16.xpose.msra.mxu0 %v183
  %258 = vmatprep.subr.bf16.mxu0 0
  %259 = vmatpush1.bf16.xpose.msra.mxu0 %v184
  %260 = vmatprep.subr.bf16.mxu0 0
  %261 = vmatpush1.bf16.xpose.msra.mxu0 %v185
  %262 = vmatprep.subr.bf16.mxu0 0
  %263 = vmatpush1.bf16.xpose.msra.mxu0 %v186
  %264 = vmatprep.subr.bf16.mxu0 0
  %265 = vmatpush1.bf16.xpose.msra.mxu0 %v187
  %266 = vmatprep.subr.bf16.mxu0 0
  %267 = vmatpush1.bf16.xpose.msra.mxu0 %v188
  %268 = vmatprep.subr.bf16.mxu0 0
  %269 = vmatpush1.bf16.xpose.msra.mxu0 %v189
  %270 = vmatprep.subr.bf16.mxu0 0
  %271 = vmatpush1.bf16.xpose.msra.mxu0 %v190
  %272 = vmatprep.subr.bf16.mxu0 0
  %273 = vmatpush1.bf16.xpose.msra.mxu0 0
  %274 = vmatprep.subr.bf16.mxu0 0
  %275 = vmatpush1.bf16.xpose.msra.mxu0 0
  %276 = vmatprep.subr.bf16.mxu0 0
  %277 = vmatpush1.bf16.xpose.msra.mxu0 0
  %278 = vmatprep.subr.bf16.mxu0 0
  %279 = vmatpush1.bf16.xpose.msra.mxu0 0
  %280 = vmatprep.subr.bf16.mxu0 0
  %281 = vmatpush1.bf16.xpose.msra.mxu0 0
  %282 = vmatprep.subr.bf16.mxu0 0
  %283 = vmatpush1.bf16.xpose.msra.mxu0 0
  %284 = vmatprep.subr.bf16.mxu0 0
  %285 = vmatpush1.bf16.xpose.msra.mxu0 0
  %286 = vmatprep.subr.bf16.mxu0 0
  %287 = vmatpush1.bf16.xpose.msra.mxu0 0
  %288 = vmatprep.mubr.bf16.mxu0 0
  %289 = vmatmul.mubr.bf16.gmra.mrb[0].mxu0 %v22
  %v290 = vpop.f32.mrb[0].mxu0
  %v291 = vadd.f32 0.0, %v290
  %v292 = vpop.f32.mrb[0].mxu0
  %v293 = vpop.f32.mrb[0].mxu0
  %v294 = vpop.f32.mrb[0].mxu0
  %295 = vdwg.mxu0
  %v296 = vadd.f32 %v19, %v250
  %v297 = vadd.f32 %v20, %v252
  %v298 = vadd.f32 %v21, %v291
  %299 = vst [vmem:[#allocation2] sm:$0xff] %v296
  %300 = vst [vmem:[#allocation2 + $0x8] sm:$0xff] %v297
  %301 = vst [vmem:[#allocation2 + $0x10] sm:$0xff] %v298
  // Predicated region
  $region14: #{transformer_forward.19} parent=0 // pred_check
    %p302 = pneg %p12
  $region15: #{transformer_forward.19} parent=0 // pred_check_branch
    %304 = sbr.rel (%p302) target = $region17
  $region16: #{transformer_forward.19} parent=0 // pred_region
    %v305 = vld [vmem:[#allocation2] sm:$0xff]
    %v306 = vld [vmem:[#allocation2 + $0x8] sm:$0xff]
    %v307 = vld [vmem:[#allocation2 + $0x10] sm:$0xff]
    %v308 = vpack.c.bf16 %v305, %v305
    %v309 = vpack.c.bf16 %v306, %v306
    %v310 = vpack.c.bf16 %v307, %v307
    %v314 = vunpack.c.l.b16 %v308
    %v315 = vunpack.c.l.b16 %v309
    %v316 = vunpack.c.l.b16 %v310
    %v317 = vpack.c.b16 %v315, %v314
    %v318 = vpack.c.b16 %v316, %v316
    %321 = vst [vmem:[%s2] sm:$0xff] %v317
    %322 = vst [vmem:[%s2 + $0x8] sm:$0xf] %v318
  $region17: #{transformer_forward.19} parent=0 // pred_fallthru
    _
  // Predicated region
  $region18: #{transformer_forward.19} parent=0 // pred_check
    _
  $region19: #{transformer_forward.19} parent=0 // pred_check_branch
    %324 = sbr.rel (0) target = $region21
  $region20: #{transformer_forward.19} parent=0 // pred_region
    _
  $region21: #{transformer_forward.19} parent=0 // pred_fallthru
    _
  // Predicated region
  $region22: #{transformer_forward.19} parent=0 // pred_check
    _
  $region23: #{transformer_forward.19} parent=0 // pred_check_branch
    %326 = sbr.rel (0) target = $region25
  $region24: #{transformer_forward.19} parent=0 // pred_region
    _
  $region25: #{transformer_forward.19} parent=0 // pred_fallthru
    _

// kernel: transformer_forward.20
$region0: #{transformer_forward.20}
  #allocation0 [shape = 'u32[]', space=smem, size = 0x4, offset = 0x4, fixed_abs, tag = 'smem constant byte address 0x4 - core index']
  #allocation1 [shape = 'u32[144,128]{1,0:T(1,128)}', space=vmem, size = 0x12000, scoped, tag = 'internal scratch']
  #allocation2 [shape = 'f32[2,8,1]{2,1,0:T(8,128)}', space=vmem, size = 0x2000, scoped, tag = 'scratch operand']
  #allocation3 [shape = 'f32[2,8,1]{2,1,0:T(8,128)}', space=vmem, size = 0x2000, scoped, tag = 'scratch operand']
  #allocation4 [shape = 'f32[2,8,64]{2,1,0:T(8,128)}', space=vmem, size = 0x2000, scoped, tag = 'scratch operand']
  %s0 = inlined_call_operand.vmem [shape: bf16[1,8,384], index: 0, kind: input, shape index: {}, may-alias: {0,1,2}]
  %s1 = inlined_call_operand.vmem [shape: bf16[1,8,384], index: 1, kind: input, shape index: {}, may-alias: {0,1,2}]
  %s2 = inlined_call_operand.vmem [shape: bf16[1,8,384], index: 2, kind: input, shape index: {}, may-alias: {0,1,2}]
  %s3 = inlined_call_operand.vmem [shape: bf16[1,8,128], index: 3, kind: output, shape index: {}]
  %s4 = sld [smem:[#allocation0]]
  $region30: #{transformer_forward.20} parent=0
    _
  %s6 = ssub.s32 1, %s4
  %s7 = scalar_select 0, %s6, %s4
  // Predicated region
  $region2: #{transformer_forward.20} parent=0 // pred_check
    _
  $region3: #{transformer_forward.20} parent=0 // pred_check_branch
    %9 = sbr.rel (0) target = $region5
  $region4: #{transformer_forward.20} parent=0 // pred_region
    _
  $region5: #{transformer_forward.20} parent=0 // pred_fallthru
    _
  // Predicated region
  $region6: #{transformer_forward.20} parent=0 // pred_check
    _
  $region7: #{transformer_forward.20} parent=0 // pred_check_branch
    %11 = sbr.rel (0) target = $region9
  $region8: #{transformer_forward.20} parent=0 // pred_region
    %s12 = scalar_lea.vmem %s1, 4
  $region9: #{transformer_forward.20} parent=0 // pred_fallthru
    _
  // Predicated region
  $region10: #{transformer_forward.20} parent=0 // pred_check
    _
  $region11: #{transformer_forward.20} parent=0 // pred_check_branch
    %14 = sbr.rel (0) target = $region13
  $region12: #{transformer_forward.20} parent=0 // pred_region
    %s15 = scalar_lea.vmem %s2, 8
  $region13: #{transformer_forward.20} parent=0 // pred_fallthru
    _
  %s16 = scalar_lea.vmem %s1, 4
  %s17 = scalar_lea.vmem %s2, 8
  %s18 = scalar_lea.vmem %s1, 4
  %s19 = scalar_lea.vmem %s2, 8
  %p21 = scmp.eq.s32.totalorder 0, 0
  // Predicated region
  $region14: #{transformer_forward.20} parent=0 // pred_check
    %p22 = pneg %p21
  $region15: #{transformer_forward.20} parent=0 // pred_check_branch
    %24 = sbr.rel (%p22) target = $region17
  $region16: #{transformer_forward.20} parent=0 // pred_region
    %vm25 = vcmask 7168
    %26 = vst.msk [vmem:[#allocation2] sm:$0xff] %vm25, -inf
    %27 = vst.msk [vmem:[#allocation2 + $0x8] sm:$0xff] %vm25, -inf
    %28 = vst.msk [vmem:[#allocation3] sm:$0xff] %vm25, 0.0
    %29 = vst.msk [vmem:[#allocation3 + $0x8] sm:$0xff] %vm25, 0.0
    %vm30 = vcmask 523264
    %31 = vst.msk [vmem:[#allocation4] sm:$0xff] %vm30, 0.0
    %32 = vst.msk [vmem:[#allocation4 + $0x8] sm:$0xff] %vm30, 0.0
  $region17: #{transformer_forward.20} parent=0 // pred_fallthru
    _
  %v33 = vld [vmem:[%s0] sm:$0xf]
  %v34 = vld [vmem:[%s18] sm:$0xf]
  %v35 = vld [vmem:[%s19] sm:$0xf]
  %vm36 = vcmask 523264
  %v38 = vsel %vm36, %v33, 0
  %v41 = vsel %vm36, %v34, 0
  %43 = vmatprep.subr.bf16.mxu0 0
  %44 = vmatpush1.bf16.xpose.msra.mxu0 %v41
  %45 = vmatprep.subr.bf16.mxu0 0
  %46 = vmatpush1.bf16.xpose.msra.mxu0 0
  %47 = vmatprep.subr.bf16.mxu0 0
  %48 = vmatpush1.bf16.xpose.msra.mxu0 0
  %49 = vmatprep.subr.bf16.mxu0 0
  %50 = vmatpush1.bf16.xpose.msra.mxu0 0
  %51 = vmatprep.subr.bf16.mxu0 0
  %52 = vmatpush1.bf16.xpose.msra.mxu0 0
  %53 = vmatprep.subr.bf16.mxu0 0
  %54 = vmatpush1.bf16.xpose.msra.mxu0 0
  %55 = vmatprep.subr.bf16.mxu0 0
  %56 = vmatpush1.bf16.xpose.msra.mxu0 0
  %57 = vmatprep.subr.bf16.mxu0 0
  %58 = vmatpush1.bf16.xpose.msra.mxu0 0
  %59 = vmatprep.subr.bf16.mxu0 0
  %60 = vmatpush1.bf16.xpose.msra.mxu0 0
  %61 = vmatprep.subr.bf16.mxu0 0
  %62 = vmatpush1.bf16.xpose.msra.mxu0 0
  %63 = vmatprep.subr.bf16.mxu0 0
  %64 = vmatpush1.bf16.xpose.msra.mxu0 0
  %65 = vmatprep.subr.bf16.mxu0 0
  %66 = vmatpush1.bf16.xpose.msra.mxu0 0
  %67 = vmatprep.subr.bf16.mxu0 0
  %68 = vmatpush1.bf16.xpose.msra.mxu0 0
  %69 = vmatprep.subr.bf16.mxu0 0
  %70 = vmatpush1.bf16.xpose.msra.mxu0 0
  %71 = vmatprep.subr.bf16.mxu0 0
  %72 = vmatpush1.bf16.xpose.msra.mxu0 0
  %73 = vmatprep.subr.bf16.mxu0 0
  %74 = vmatpush1.bf16.xpose.msra.mxu0 0
  %75 = vmatprep.mubr.bf16.mxu0 0
  %76 = vmatmul.mubr.bf16.gmra.mrb[0].mxu0 %v38
  %v77 = vpop.f32.mrb[0].mxu0
  %v78 = vadd.f32 0.0, %v77
  %v79 = vpop.f32.mrb[0].mxu0
  %v80 = vpop.f32.mrb[0].mxu0
  %v81 = vpop.f32.mrb[0].mxu0
  %82 = vdwg.mxu0
  %v83 = vld [vmem:[#allocation2] sm:$0xff]
  %vm84 = vcmask 64512
  %v85 = vsel %vm84, %v78, -inf
  %86 = vmax.xlane.f32.xlu0 %v85
  %v87 = vpop.xlane.xlu0 %86
  %v88 = vmax.f32 %v83, %v87
  %v89 = vsub.f32 %v83, %v88
  %v90 = vmul.f32 %v89, 1.442695
  %v91 = vpow.pop %v90
  %93 = vset.pattern.permute.xlu0 0
  %94 = vperm.xlu0 %93, %v88
  %v95 = vpop.permute.xlu0 %94
  %v97 = vsub.f32 %v78, %v95
  %v98 = vmul.f32 %v97, 1.442695
  %v99 = vpow.pop %v98
  %v100 = vld [vmem:[#allocation3] sm:$0xff]
  %v101 = vmul.f32 %v91, %v100
  %v102 = vsel %vm84, %v99, 0.0
  %103 = vadd.xlane.f32.xlu0 %v102
  %v104 = vpop.xlane.xlu0 %103
  %v105 = vadd.f32 %v101, %v104
  %vm106 = vcmask 7168
  %107 = vst.msk [vmem:[#allocation3] sm:$0xff] %vm106, %v105
  %v108 = vpack.c.bf16 %v99, %v99
  %v110 = vsel %vm84, %v108, 0
  %vm112 = vcmask 1043456
  %v114 = vsel %vm112, %v35, 0
  %116 = vmatprep.subr.bf16.mxu0 0
  %117 = vmatpush1.bf16.msra.mxu0 %v114
  %118 = vmatprep.subr.bf16.mxu0 0
  %119 = vmatpush1.bf16.msra.mxu0 0
  %120 = vmatprep.subr.bf16.mxu0 0
  %121 = vmatpush1.bf16.msra.mxu0 0
  %122 = vmatprep.subr.bf16.mxu0 0
  %123 = vmatpush1.bf16.msra.mxu0 0
  %124 = vmatprep.subr.bf16.mxu0 0
  %125 = vmatpush1.bf16.msra.mxu0 0
  %126 = vmatprep.subr.bf16.mxu0 0
  %127 = vmatpush1.bf16.msra.mxu0 0
  %128 = vmatprep.subr.bf16.mxu0 0
  %129 = vmatpush1.bf16.msra.mxu0 0
  %130 = vmatprep.subr.bf16.mxu0 0
  %131 = vmatpush1.bf16.msra.mxu0 0
  %132 = vmatprep.subr.bf16.mxu0 0
  %133 = vmatpush1.bf16.msra.mxu0 0
  %134 = vmatprep.subr.bf16.mxu0 0
  %135 = vmatpush1.bf16.msra.mxu0 0
  %136 = vmatprep.subr.bf16.mxu0 0
  %137 = vmatpush1.bf16.msra.mxu0 0
  %138 = vmatprep.subr.bf16.mxu0 0
  %139 = vmatpush1.bf16.msra.mxu0 0
  %140 = vmatprep.subr.bf16.mxu0 0
  %141 = vmatpush1.bf16.msra.mxu0 0
  %142 = vmatprep.subr.bf16.mxu0 0
  %143 = vmatpush1.bf16.msra.mxu0 0
  %144 = vmatprep.subr.bf16.mxu0 0
  %145 = vmatpush1.bf16.msra.mxu0 0
  %146 = vmatprep.subr.bf16.mxu0 0
  %147 = vmatpush1.bf16.msra.mxu0 0
  %148 = vmatprep.mubr.bf16.mxu0 0
  %149 = vmatmul.mubr.bf16.gmra.mrb[0].mxu0 %v110
  %v150 = vpop.f32.mrb[0].mxu0
  %v151 = vadd.f32 0.0, %v150
  %v152 = vpop.f32.mrb[0].mxu0
  %v153 = vpop.f32.mrb[0].mxu0
  %v154 = vpop.f32.mrb[0].mxu0
  %155 = vdwg.mxu0
  %v156 = vld [vmem:[#allocation4] sm:$0xff]
  %158 = vset.pattern.permute.xlu0 0
  %159 = vperm.xlu0 %158, %v91
  %v160 = vpop.permute.xlu0 %159
  %v162 = vmul.f32 %v160, %v156
  %v163 = vadd.f32 %v162, %v151
  %164 = vst.msk [vmem:[#allocation4] sm:$0xff] %vm36, %v163
  %165 = vst.msk [vmem:[#allocation2] sm:$0xff] %vm106, %v88
  %v167 = vunpack.c.l.b16 %v33
  %v168 = vpack.c.b16 %v167, %v167
  %169 = vrot.lane.b32.xlu0 %v168, 64
  %v170 = vpop.permute.xlu0 %169
  %v172 = vunpack.c.l.b16 %v34
  %v173 = vpack.c.b16 %v172, %v172
  %174 = vrot.lane.b32.xlu0 %v173, 64
  %v175 = vpop.permute.xlu0 %174
  %v177 = vsel %vm36, %v170, 0
  %v180 = vsel %vm36, %v175, 0
  %182 = vmatprep.subr.bf16.mxu0 0
  %183 = vmatpush1.bf16.xpose.msra.mxu0 %v180
  %184 = vmatprep.subr.bf16.mxu0 0
  %185 = vmatpush1.bf16.xpose.msra.mxu0 0
  %186 = vmatprep.subr.bf16.mxu0 0
  %187 = vmatpush1.bf16.xpose.msra.mxu0 0
  %188 = vmatprep.subr.bf16.mxu0 0
  %189 = vmatpush1.bf16.xpose.msra.mxu0 0
  %190 = vmatprep.subr.bf16.mxu0 0
  %191 = vmatpush1.bf16.xpose.msra.mxu0 0
  %192 = vmatprep.subr.bf16.mxu0 0
  %193 = vmatpush1.bf16.xpose.msra.mxu0 0
  %194 = vmatprep.subr.bf16.mxu0 0
  %195 = vmatpush1.bf16.xpose.msra.mxu0 0
  %196 = vmatprep.subr.bf16.mxu0 0
  %197 = vmatpush1.bf16.xpose.msra.mxu0 0
  %198 = vmatprep.subr.bf16.mxu0 0
  %199 = vmatpush1.bf16.xpose.msra.mxu0 0
  %200 = vmatprep.subr.bf16.mxu0 0
  %201 = vmatpush1.bf16.xpose.msra.mxu0 0
  %202 = vmatprep.subr.bf16.mxu0 0
  %203 = vmatpush1.bf16.xpose.msra.mxu0 0
  %204 = vmatprep.subr.bf16.mxu0 0
  %205 = vmatpush1.bf16.xpose.msra.mxu0 0
  %206 = vmatprep.subr.bf16.mxu0 0
  %207 = vmatpush1.bf16.xpose.msra.mxu0 0
  %208 = vmatprep.subr.bf16.mxu0 0
  %209 = vmatpush1.bf16.xpose.msra.mxu0 0
  %210 = vmatprep.subr.bf16.mxu0 0
  %211 = vmatpush1.bf16.xpose.msra.mxu0 0
  %212 = vmatprep.subr.bf16.mxu0 0
  %213 = vmatpush1.bf16.xpose.msra.mxu0 0
  %214 = vmatprep.mubr.bf16.mxu0 0
  %215 = vmatmul.mubr.bf16.gmra.mrb[0].mxu0 %v177
  %v216 = vpop.f32.mrb[0].mxu0
  %v217 = vadd.f32 0.0, %v216
  %v218 = vpop.f32.mrb[0].mxu0
  %v219 = vpop.f32.mrb[0].mxu0
  %v220 = vpop.f32.mrb[0].mxu0
  %221 = vdwg.mxu0
  %s222 = scalar_lea.vmem [#allocation2], 8
  %v223 = vld [vmem:[%s222] sm:$0xff]
  %v224 = vsel %vm84, %v217, -inf
  %225 = vmax.xlane.f32.xlu0 %v224
  %v226 = vpop.xlane.xlu0 %225
  %v227 = vmax.f32 %v223, %v226
  %v228 = vsub.f32 %v223, %v227
  %v229 = vmul.f32 %v228, 1.442695
  %v230 = vpow.pop %v229
  %232 = vset.pattern.permute.xlu0 0
  %233 = vperm.xlu0 %232, %v227
  %v234 = vpop.permute.xlu0 %233
  %v236 = vsub.f32 %v217, %v234
  %v237 = vmul.f32 %v236, 1.442695
  %v238 = vpow.pop %v237
  %s239 = scalar_lea.vmem [#allocation3], 8
  %v240 = vld [vmem:[%s239] sm:$0xff]
  %v241 = vmul.f32 %v230, %v240
  %v242 = vsel %vm84, %v238, 0.0
  %243 = vadd.xlane.f32.xlu0 %v242
  %v244 = vpop.xlane.xlu0 %243
  %v245 = vadd.f32 %v241, %v244
  %246 = vst.msk [vmem:[%s239] sm:$0xff] %vm106, %v245
  %v247 = vpack.c.bf16 %v238, %v238
  %v249 = vunpack.c.l.b16 %v35
  %v250 = vpack.c.b16 %v249, %v249
  %251 = vrot.lane.b32.xlu0 %v250, 64
  %v252 = vpop.permute.xlu0 %251
  %v254 = vsel %vm84, %v247, 0
  %v257 = vsel %vm112, %v252, 0
  %259 = vmatprep.subr.bf16.mxu0 0
  %260 = vmatpush1.bf16.msra.mxu0 %v257
  %261 = vmatprep.subr.bf16.mxu0 0
  %262 = vmatpush1.bf16.msra.mxu0 0
  %263 = vmatprep.subr.bf16.mxu0 0
  %264 = vmatpush1.bf16.msra.mxu0 0
  %265 = vmatprep.subr.bf16.mxu0 0
  %266 = vmatpush1.bf16.msra.mxu0 0
  %267 = vmatprep.subr.bf16.mxu0 0
  %268 = vmatpush1.bf16.msra.mxu0 0
  %269 = vmatprep.subr.bf16.mxu0 0
  %270 = vmatpush1.bf16.msra.mxu0 0
  %271 = vmatprep.subr.bf16.mxu0 0
  %272 = vmatpush1.bf16.msra.mxu0 0
  %273 = vmatprep.subr.bf16.mxu0 0
  %274 = vmatpush1.bf16.msra.mxu0 0
  %275 = vmatprep.subr.bf16.mxu0 0
  %276 = vmatpush1.bf16.msra.mxu0 0
  %277 = vmatprep.subr.bf16.mxu0 0
  %278 = vmatpush1.bf16.msra.mxu0 0
  %279 = vmatprep.subr.bf16.mxu0 0
  %280 = vmatpush1.bf16.msra.mxu0 0
  %281 = vmatprep.subr.bf16.mxu0 0
  %282 = vmatpush1.bf16.msra.mxu0 0
  %283 = vmatprep.subr.bf16.mxu0 0
  %284 = vmatpush1.bf16.msra.mxu0 0
  %285 = vmatprep.subr.bf16.mxu0 0
  %286 = vmatpush1.bf16.msra.mxu0 0
  %287 = vmatprep.subr.bf16.mxu0 0
  %288 = vmatpush1.bf16.msra.mxu0 0
  %289 = vmatprep.subr.bf16.mxu0 0
  %290 = vmatpush1.bf16.msra.mxu0 0
  %291 = vmatprep.mubr.bf16.mxu0 0
  %292 = vmatmul.mubr.bf16.gmra.mrb[0].mxu0 %v254
  %v293 = vpop.f32.mrb[0].mxu0
  %v294 = vadd.f32 0.0, %v293
  %v295 = vpop.f32.mrb[0].mxu0
  %v296 = vpop.f32.mrb[0].mxu0
  %v297 = vpop.f32.mrb[0].mxu0
  %298 = vdwg.mxu0
  %s299 = scalar_lea.vmem [#allocation4], 8
  %v300 = vld [vmem:[%s299] sm:$0xff]
  %302 = vset.pattern.permute.xlu0 0
  %303 = vperm.xlu0 %302, %v230
  %v304 = vpop.permute.xlu0 %303
  %v306 = vmul.f32 %v304, %v300
  %v307 = vadd.f32 %v306, %v294
  %308 = vst.msk [vmem:[%s299] sm:$0xff] %vm36, %v307
  %309 = vst.msk [vmem:[%s222] sm:$0xff] %vm106, %v227
  // Predicated region
  $region18: #{transformer_forward.20} parent=0 // pred_check
    %p310 = pneg %p21
  $region19: #{transformer_forward.20} parent=0 // pred_check_branch
    %312 = sbr.rel (%p310) target = $region21
  $region20: #{transformer_forward.20} parent=0 // pred_region
    %v313 = vld [vmem:[#allocation3] sm:$0xff]
    %v314 = vrcp.pop %v313
    %v315 = vld [vmem:[#allocation4] sm:$0xff]
    %317 = vset.pattern.permute.xlu0 0
    %318 = vperm.xlu0 %317, %v314
    %v319 = vpop.permute.xlu0 %318
    %v321 = vmul.f32 %v315, %v319
    %v322 = vld [vmem:[%s239] sm:$0xff]
    %v323 = vrcp.pop %v322
    %v324 = vld [vmem:[%s299] sm:$0xff]
    %326 = vset.pattern.permute.xlu0 0
    %327 = vperm.xlu0 %326, %v323
    %v328 = vpop.permute.xlu0 %327
    %v330 = vmul.f32 %v324, %v328
    %332 = vrot.lane.b32.xlu0 %v330, 64
    %v333 = vpop.permute.xlu0 %332
    %v335 = vsel %vm36, %v321, %v333
    %v336 = vpack.c.bf16 %v335, %v335
    %337 = vst [vmem:[%s3] sm:$0xf] %v336
  $region21: #{transformer_forward.20} parent=0 // pred_fallthru
    _
  // Predicated region
  $region22: #{transformer_forward.20} parent=0 // pred_check
    _
  $region23: #{transformer_forward.20} parent=0 // pred_check_branch
    %339 = sbr.rel (0) target = $region25
  $region24: #{transformer_forward.20} parent=0 // pred_region
    _
  $region25: #{transformer_forward.20} parent=0 // pred_fallthru
    _
  // Predicated region
  $region26: #{transformer_forward.20} parent=0 // pred_check
    _
  $region27: #{transformer_forward.20} parent=0 // pred_check_branch
    %341 = sbr.rel (0) target = $region29
  $region28: #{transformer_forward.20} parent=0 // pred_region
    _
  $region29: #{transformer_forward.20} parent=0 // pred_fallthru
    _

// kernel: transformer_forward.24
$region0: #{transformer_forward.24}
  #allocation0 [shape = 'u32[]', space=smem, size = 0x4, offset = 0x4, fixed_abs, tag = 'smem constant byte address 0x4 - core index']
  #allocation1 [shape = 'u32[144,128]{1,0:T(1,128)}', space=vmem, size = 0x12000, scoped, tag = 'internal scratch']
  #allocation2 [shape = 'f32[8,128]{1,0:T(8,128)}', space=vmem, size = 0x1000, scoped, tag = 'scratch operand']
  %s0 = inlined_call_operand.vmem [shape: bf16[8,512], index: 0, kind: input, shape index: {}]
  %s1 = inlined_call_operand.vmem [shape: bf16[128,512], index: 1, kind: input, shape index: {}]
  %s2 = inlined_call_operand.vmem [shape: f32[8,128], index: 2, kind: input, shape index: {}]
  %s3 = inlined_call_operand.vmem [shape: f32[8,128], index: 3, kind: output, shape index: {}]
  %s4 = sld [smem:[#allocation0]]
  $region30: #{transformer_forward.24} parent=0
    _
  %s6 = ssub.s32 1, %s4
  %s7 = scalar_select 0, %s6, %s4
  // Predicated region
  $region2: #{transformer_forward.24} parent=0 // pred_check
    _
  $region3: #{transformer_forward.24} parent=0 // pred_check_branch
    %9 = sbr.rel (0) target = $region5
  $region4: #{transformer_forward.24} parent=0 // pred_region
    _
  $region5: #{transformer_forward.24} parent=0 // pred_fallthru
    _
  // Predicated region
  $region6: #{transformer_forward.24} parent=0 // pred_check
    _
  $region7: #{transformer_forward.24} parent=0 // pred_check_branch
    %11 = sbr.rel (0) target = $region9
  $region8: #{transformer_forward.24} parent=0 // pred_region
    _
  $region9: #{transformer_forward.24} parent=0 // pred_fallthru
    _
  // Predicated region
  $region10: #{transformer_forward.24} parent=0 // pred_check
    _
  $region11: #{transformer_forward.24} parent=0 // pred_check_branch
    %13 = sbr.rel (0) target = $region13
  $region12: #{transformer_forward.24} parent=0 // pred_region
    _
  $region13: #{transformer_forward.24} parent=0 // pred_fallthru
    _
  %p15 = scmp.eq.s32.totalorder 0, 0
  // Predicated region
  $region14: #{transformer_forward.24} parent=0 // pred_check
    %p16 = pneg %p15
  $region15: #{transformer_forward.24} parent=0 // pred_check_branch
    %18 = sbr.rel (%p16) target = $region17
  $region16: #{transformer_forward.24} parent=0 // pred_region
    %19 = vst [vmem:[#allocation2] sm:$0xff] 0.0
  $region17: #{transformer_forward.24} parent=0 // pred_fallthru
    _
  %v20 = vld [vmem:[#allocation2] sm:$0xff]
  %v21 = vld [vmem:[%s0] sm:$0xff]
  %v22 = vld [vmem:[%s0 + $0x8] sm:$0xff]
  %v23 = vld [vmem:[%s1] sm:$0xff]
  %v24 = vld [vmem:[%s1 + $0x8] sm:$0xff]
  %v25 = vld [vmem:[%s1 + $0x10] sm:$0xff]
  %v26 = vld [vmem:[%s1 + $0x18] sm:$0xff]
  %v27 = vld [vmem:[%s1 + $0x20] sm:$0xff]
  %v28 = vld [vmem:[%s1 + $0x28] sm:$0xff]
  %v29 = vld [vmem:[%s1 + $0x30] sm:$0xff]
  %v30 = vld [vmem:[%s1 + $0x38] sm:$0xff]
  %v31 = vld [vmem:[%s1 + $0x40] sm:$0xff]
  %v32 = vld [vmem:[%s1 + $0x48] sm:$0xff]
  %v33 = vld [vmem:[%s1 + $0x50] sm:$0xff]
  %v34 = vld [vmem:[%s1 + $0x58] sm:$0xff]
  %v35 = vld [vmem:[%s1 + $0x60] sm:$0xff]
  %v36 = vld [vmem:[%s1 + $0x68] sm:$0xff]
  %v37 = vld [vmem:[%s1 + $0x70] sm:$0xff]
  %v38 = vld [vmem:[%s1 + $0x78] sm:$0xff]
  %v39 = vld [vmem:[%s1 + $0x80] sm:$0xff]
  %v40 = vld [vmem:[%s1 + $0x88] sm:$0xff]
  %v41 = vld [vmem:[%s1 + $0x90] sm:$0xff]
  %v42 = vld [vmem:[%s1 + $0x98] sm:$0xff]
  %v43 = vld [vmem:[%s1 + $0xa0] sm:$0xff]
  %v44 = vld [vmem:[%s1 + $0xa8] sm:$0xff]
  %v45 = vld [vmem:[%s1 + $0xb0] sm:$0xff]
  %v46 = vld [vmem:[%s1 + $0xb8] sm:$0xff]
  %v47 = vld [vmem:[%s1 + $0xc0] sm:$0xff]
  %v48 = vld [vmem:[%s1 + $0xc8] sm:$0xff]
  %v49 = vld [vmem:[%s1 + $0xd0] sm:$0xff]
  %v50 = vld [vmem:[%s1 + $0xd8] sm:$0xff]
  %v51 = vld [vmem:[%s1 + $0xe0] sm:$0xff]
  %v52 = vld [vmem:[%s1 + $0xe8] sm:$0xff]
  %v53 = vld [vmem:[%s1 + $0xf0] sm:$0xff]
  %v54 = vld [vmem:[%s1 + $0xf8] sm:$0xff]
  %v57 = vunpack.c.l.b16 %v21
  %v58 = vunpack.c.h.b16 %v21
  %v59 = vunpack.c.l.b16 %v22
  %v60 = vunpack.c.h.b16 %v22
  %v61 = vpack.c.b16 %v57, %v57
  %v62 = vpack.c.b16 %v58, %v58
  %v63 = vpack.c.b16 %v59, %v59
  %v64 = vpack.c.b16 %v60, %v60
  %v101 = vunpack.c.l.b16 %v23
  %v102 = vunpack.c.h.b16 %v23
  %v103 = vunpack.c.l.b16 %v24
  %v104 = vunpack.c.h.b16 %v24
  %v105 = vunpack.c.l.b16 %v25
  %v106 = vunpack.c.h.b16 %v25
  %v107 = vunpack.c.l.b16 %v26
  %v108 = vunpack.c.h.b16 %v26
  %v109 = vunpack.c.l.b16 %v27
  %v110 = vunpack.c.h.b16 %v27
  %v111 = vunpack.c.l.b16 %v28
  %v112 = vunpack.c.h.b16 %v28
  %v113 = vunpack.c.l.b16 %v29
  %v114 = vunpack.c.h.b16 %v29
  %v115 = vunpack.c.l.b16 %v30
  %v116 = vunpack.c.h.b16 %v30
  %v117 = vunpack.c.l.b16 %v31
  %v118 = vunpack.c.h.b16 %v31
  %v119 = vunpack.c.l.b16 %v32
  %v120 = vunpack.c.h.b16 %v32
  %v121 = vunpack.c.l.b16 %v33
  %v122 = vunpack.c.h.b16 %v33
  %v123 = vunpack.c.l.b16 %v34
  %v124 = vunpack.c.h.b16 %v34
  %v125 = vunpack.c.l.b16 %v35
  %v126 = vunpack.c.h.b16 %v35
  %v127 = vunpack.c.l.b16 %v36
  %v128 = vunpack.c.h.b16 %v36
  %v129 = vunpack.c.l.b16 %v37
  %v130 = vunpack.c.h.b16 %v37
  %v131 = vunpack.c.l.b16 %v38
  %v132 = vunpack.c.h.b16 %v38
  %v133 = vunpack.c.l.b16 %v39
  %v134 = vunpack.c.h.b16 %v39
  %v135 = vunpack.c.l.b16 %v40
  %v136 = vunpack.c.h.b16 %v40
  %v137 = vunpack.c.l.b16 %v41
  %v138 = vunpack.c.h.b16 %v41
  %v139 = vunpack.c.l.b16 %v42
  %v140 = vunpack.c.h.b16 %v42
  %v141 = vunpack.c.l.b16 %v43
  %v142 = vunpack.c.h.b16 %v43
  %v143 = vunpack.c.l.b16 %v44
  %v144 = vunpack.c.h.b16 %v44
  %v145 = vunpack.c.l.b16 %v45
  %v146 = vunpack.c.h.b16 %v45
  %v147 = vunpack.c.l.b16 %v46
  %v148 = vunpack.c.h.b16 %v46
  %v149 = vunpack.c.l.b16 %v47
  %v150 = vunpack.c.h.b16 %v47
  %v151 = vunpack.c.l.b16 %v48
  %v152 = vunpack.c.h.b16 %v48
  %v153 = vunpack.c.l.b16 %v49
  %v154 = vunpack.c.h.b16 %v49
  %v155 = vunpack.c.l.b16 %v50
  %v156 = vunpack.c.h.b16 %v50
  %v157 = vunpack.c.l.b16 %v51
  %v158 = vunpack.c.h.b16 %v51
  %v159 = vunpack.c.l.b16 %v52
  %v160 = vunpack.c.h.b16 %v52
  %v161 = vunpack.c.l.b16 %v53
  %v162 = vunpack.c.h.b16 %v53
  %v163 = vunpack.c.l.b16 %v54
  %v164 = vunpack.c.h.b16 %v54
  %v165 = vpack.c.b16 %v105, %v101
  %v166 = vpack.c.b16 %v106, %v102
  %v167 = vpack.c.b16 %v107, %v103
  %v168 = vpack.c.b16 %v108, %v104
  %v169 = vpack.c.b16 %v113, %v109
  %v170 = vpack.c.b16 %v114, %v110
  %v171 = vpack.c.b16 %v115, %v111
  %v172 = vpack.c.b16 %v116, %v112
  %v173 = vpack.c.b16 %v121, %v117
  %v174 = vpack.c.b16 %v122, %v118
  %v175 = vpack.c.b16 %v123, %v119
  %v176 = vpack.c.b16 %v124, %v120
  %v177 = vpack.c.b16 %v129, %v125
  %v178 = vpack.c.b16 %v130, %v126
  %v179 = vpack.c.b16 %v131, %v127
  %v180 = vpack.c.b16 %v132, %v128
  %v181 = vpack.c.b16 %v137, %v133
  %v182 = vpack.c.b16 %v138, %v134
  %v183 = vpack.c.b16 %v139, %v135
  %v184 = vpack.c.b16 %v140, %v136
  %v185 = vpack.c.b16 %v145, %v141
  %v186 = vpack.c.b16 %v146, %v142
  %v187 = vpack.c.b16 %v147, %v143
  %v188 = vpack.c.b16 %v148, %v144
  %v189 = vpack.c.b16 %v153, %v149
  %v190 = vpack.c.b16 %v154, %v150
  %v191 = vpack.c.b16 %v155, %v151
  %v192 = vpack.c.b16 %v156, %v152
  %v193 = vpack.c.b16 %v161, %v157
  %v194 = vpack.c.b16 %v162, %v158
  %v195 = vpack.c.b16 %v163, %v159
  %v196 = vpack.c.b16 %v164, %v160
  %229 = vmatprep.subr.bf16.mxu0 %v166
  %230 = vmatpush1.bf16.xpose.msra.mxu0 %v165
  %231 = vmatprep.subr.bf16.mxu0 %v170
  %232 = vmatpush1.bf16.xpose.msra.mxu0 %v169
  %233 = vmatprep.subr.bf16.mxu0 %v174
  %234 = vmatpush1.bf16.xpose.msra.mxu0 %v173
  %235 = vmatprep.subr.bf16.mxu0 %v178
  %236 = vmatpush1.bf16.xpose.msra.mxu0 %v177
  %237 = vmatprep.subr.bf16.mxu0 %v182
  %238 = vmatpush1.bf16.xpose.msra.mxu0 %v181
  %239 = vmatprep.subr.bf16.mxu0 %v186
  %240 = vmatpush1.bf16.xpose.msra.mxu0 %v185
  %241 = vmatprep.subr.bf16.mxu0 %v190
  %242 = vmatpush1.bf16.xpose.msra.mxu0 %v189
  %243 = vmatprep.subr.bf16.mxu0 %v194
  %244 = vmatpush1.bf16.xpose.msra.mxu0 %v193
  %245 = vmatprep.subr.bf16.mxu0 0
  %246 = vmatpush1.bf16.xpose.msra.mxu0 0
  %247 = vmatprep.subr.bf16.mxu0 0
  %248 = vmatpush1.bf16.xpose.msra.mxu0 0
  %249 = vmatprep.subr.bf16.mxu0 0
  %250 = vmatpush1.bf16.xpose.msra.mxu0 0
  %251 = vmatprep.subr.bf16.mxu0 0
  %252 = vmatpush1.bf16.xpose.msra.mxu0 0
  %253 = vmatprep.subr.bf16.mxu0 0
  %254 = vmatpush1.bf16.xpose.msra.mxu0 0
  %255 = vmatprep.subr.bf16.mxu0 0
  %256 = vmatpush1.bf16.xpose.msra.mxu0 0
  %257 = vmatprep.subr.bf16.mxu0 0
  %258 = vmatpush1.bf16.xpose.msra.mxu0 0
  %259 = vmatprep.subr.bf16.mxu0 0
  %260 = vmatpush1.bf16.xpose.msra.mxu0 0
  %261 = vmatprep.mubr.bf16.mxu0 %v62
  %262 = vmatmul.mubr.bf16.gmra.mrb[0].mxu0 %v61
  %v263 = vpop.f32.mrb[0].mxu0
  %v264 = vadd.f32 0.0, %v263
  %v265 = vpop.f32.mrb[0].mxu0
  %v266 = vpop.f32.mrb[0].mxu0
  %v267 = vpop.f32.mrb[0].mxu0
  %268 = vdwg.mxu0
  %269 = vmatprep.subr.bf16.mxu0 %v168
  %270 = vmatpush1.bf16.xpose.msra.mxu0 %v167
  %271 = vmatprep.subr.bf16.mxu0 %v172
  %272 = vmatpush1.bf16.xpose.msra.mxu0 %v171
  %273 = vmatprep.subr.bf16.mxu0 %v176
  %274 = vmatpush1.bf16.xpose.msra.mxu0 %v175
  %275 = vmatprep.subr.bf16.mxu0 %v180
  %276 = vmatpush1.bf16.xpose.msra.mxu0 %v179
  %277 = vmatprep.subr.bf16.mxu0 %v184
  %278 = vmatpush1.bf16.xpose.msra.mxu0 %v183
  %279 = vmatprep.subr.bf16.mxu0 %v188
  %280 = vmatpush1.bf16.xpose.msra.mxu0 %v187
  %281 = vmatprep.subr.bf16.mxu0 %v192
  %282 = vmatpush1.bf16.xpose.msra.mxu0 %v191
  %283 = vmatprep.subr.bf16.mxu0 %v196
  %284 = vmatpush1.bf16.xpose.msra.mxu0 %v195
  %285 = vmatprep.subr.bf16.mxu0 0
  %286 = vmatpush1.bf16.xpose.msra.mxu0 0
  %287 = vmatprep.subr.bf16.mxu0 0
  %288 = vmatpush1.bf16.xpose.msra.mxu0 0
  %289 = vmatprep.subr.bf16.mxu0 0
  %290 = vmatpush1.bf16.xpose.msra.mxu0 0
  %291 = vmatprep.subr.bf16.mxu0 0
  %292 = vmatpush1.bf16.xpose.msra.mxu0 0
  %293 = vmatprep.subr.bf16.mxu0 0
  %294 = vmatpush1.bf16.xpose.msra.mxu0 0
  %295 = vmatprep.subr.bf16.mxu0 0
  %296 = vmatpush1.bf16.xpose.msra.mxu0 0
  %297 = vmatprep.subr.bf16.mxu0 0
  %298 = vmatpush1.bf16.xpose.msra.mxu0 0
  %299 = vmatprep.subr.bf16.mxu0 0
  %300 = vmatpush1.bf16.xpose.msra.mxu0 0
  %301 = vmatprep.mubr.bf16.mxu0 %v64
  %302 = vmatmul.mubr.bf16.gmra.mrb[0].mxu0 %v63
  %v303 = vpop.f32.mrb[0].mxu0
  %v304 = vadd.f32 %v264, %v303
  %v305 = vpop.f32.mrb[0].mxu0
  %v306 = vpop.f32.mrb[0].mxu0
  %v307 = vpop.f32.mrb[0].mxu0
  %308 = vdwg.mxu0
  %v309 = vadd.f32 %v20, %v304
  %310 = vst [vmem:[#allocation2] sm:$0xff] %v309
  // Predicated region
  $region18: #{transformer_forward.24} parent=0 // pred_check
    %p311 = pneg %p15
  $region19: #{transformer_forward.24} parent=0 // pred_check_branch
    %313 = sbr.rel (%p311) target = $region21
  $region20: #{transformer_forward.24} parent=0 // pred_region
    %v314 = vld [vmem:[#allocation2] sm:$0xff]
    %v315 = vld [vmem:[%s2] sm:$0xff]
    %v316 = vadd.f32 %v314, %v315
    %317 = vst [vmem:[%s3] sm:$0xff] %v316
  $region21: #{transformer_forward.24} parent=0 // pred_fallthru
    _
  // Predicated region
  $region22: #{transformer_forward.24} parent=0 // pred_check
    _
  $region23: #{transformer_forward.24} parent=0 // pred_check_branch
    %319 = sbr.rel (0) target = $region25
  $region24: #{transformer_forward.24} parent=0 // pred_region
    _
  $region25: #{transformer_forward.24} parent=0 // pred_fallthru
    _
  // Predicated region
  $region26: #{transformer_forward.24} parent=0 // pred_check
    _
  $region27: #{transformer_forward.24} parent=0 // pred_check_branch
    %321 = sbr.rel (0) target = $region29
  $region28: #{transformer_forward.24} parent=0 // pred_region
    _
  $region29: #{transformer_forward.24} parent=0 // pred_fallthru
    _

// kernel: transformer_forward.21
$region0: #{transformer_forward.21}
  #allocation0 [shape = 'u32[]', space=smem, size = 0x4, offset = 0x4, fixed_abs, tag = 'smem constant byte address 0x4 - core index']
  #allocation1 [shape = 'u32[144,128]{1,0:T(1,128)}', space=vmem, size = 0x12000, scoped, tag = 'internal scratch']
  #allocation2 [shape = 'f32[8,128]{1,0:T(8,128)}', space=vmem, size = 0x1000, scoped, tag = 'scratch operand']
  %s0 = inlined_call_operand.vmem [shape: bf16[8,128], index: 0, kind: input, shape index: {}]
  %s1 = inlined_call_operand.vmem [shape: bf16[128,128], index: 1, kind: input, shape index: {}]
  %s2 = inlined_call_operand.vmem [shape: f32[8,128], index: 2, kind: input, shape index: {}]
  %s3 = inlined_call_operand.vmem [shape: f32[8,128], index: 3, kind: output, shape index: {}]
  %s4 = sld [smem:[#allocation0]]
  $region30: #{transformer_forward.21} parent=0
    _
  %s6 = ssub.s32 1, %s4
  %s7 = scalar_select 0, %s6, %s4
  // Predicated region
  $region2: #{transformer_forward.21} parent=0 // pred_check
    _
  $region3: #{transformer_forward.21} parent=0 // pred_check_branch
    %9 = sbr.rel (0) target = $region5
  $region4: #{transformer_forward.21} parent=0 // pred_region
    _
  $region5: #{transformer_forward.21} parent=0 // pred_fallthru
    _
  // Predicated region
  $region6: #{transformer_forward.21} parent=0 // pred_check
    _
  $region7: #{transformer_forward.21} parent=0 // pred_check_branch
    %11 = sbr.rel (0) target = $region9
  $region8: #{transformer_forward.21} parent=0 // pred_region
    _
  $region9: #{transformer_forward.21} parent=0 // pred_fallthru
    _
  // Predicated region
  $region10: #{transformer_forward.21} parent=0 // pred_check
    _
  $region11: #{transformer_forward.21} parent=0 // pred_check_branch
    %13 = sbr.rel (0) target = $region13
  $region12: #{transformer_forward.21} parent=0 // pred_region
    _
  $region13: #{transformer_forward.21} parent=0 // pred_fallthru
    _
  %p15 = scmp.eq.s32.totalorder 0, 0
  // Predicated region
  $region14: #{transformer_forward.21} parent=0 // pred_check
    %p16 = pneg %p15
  $region15: #{transformer_forward.21} parent=0 // pred_check_branch
    %18 = sbr.rel (%p16) target = $region17
  $region16: #{transformer_forward.21} parent=0 // pred_region
    %19 = vst [vmem:[#allocation2] sm:$0xff] 0.0
  $region17: #{transformer_forward.21} parent=0 // pred_fallthru
    _
  %v20 = vld [vmem:[#allocation2] sm:$0xff]
  %v21 = vld [vmem:[%s0] sm:$0xf]
  %v22 = vld [vmem:[%s1] sm:$0xf]
  %v23 = vld [vmem:[%s1 + $0x4] sm:$0xf]
  %v24 = vld [vmem:[%s1 + $0x8] sm:$0xf]
  %v25 = vld [vmem:[%s1 + $0xc] sm:$0xf]
  %v26 = vld [vmem:[%s1 + $0x10] sm:$0xf]
  %v27 = vld [vmem:[%s1 + $0x14] sm:$0xf]
  %v28 = vld [vmem:[%s1 + $0x18] sm:$0xf]
  %v29 = vld [vmem:[%s1 + $0x1c] sm:$0xf]
  %v30 = vld [vmem:[%s1 + $0x20] sm:$0xf]
  %v31 = vld [vmem:[%s1 + $0x24] sm:$0xf]
  %v32 = vld [vmem:[%s1 + $0x28] sm:$0xf]
  %v33 = vld [vmem:[%s1 + $0x2c] sm:$0xf]
  %v34 = vld [vmem:[%s1 + $0x30] sm:$0xf]
  %v35 = vld [vmem:[%s1 + $0x34] sm:$0xf]
  %v36 = vld [vmem:[%s1 + $0x38] sm:$0xf]
  %v37 = vld [vmem:[%s1 + $0x3c] sm:$0xf]
  %v54 = vunpack.c.l.b16 %v22
  %v55 = vunpack.c.l.b16 %v23
  %v56 = vunpack.c.l.b16 %v24
  %v57 = vunpack.c.l.b16 %v25
  %v58 = vunpack.c.l.b16 %v26
  %v59 = vunpack.c.l.b16 %v27
  %v60 = vunpack.c.l.b16 %v28
  %v61 = vunpack.c.l.b16 %v29
  %v62 = vunpack.c.l.b16 %v30
  %v63 = vunpack.c.l.b16 %v31
  %v64 = vunpack.c.l.b16 %v32
  %v65 = vunpack.c.l.b16 %v33
  %v66 = vunpack.c.l.b16 %v34
  %v67 = vunpack.c.l.b16 %v35
  %v68 = vunpack.c.l.b16 %v36
  %v69 = vunpack.c.l.b16 %v37
  %v70 = vpack.c.b16 %v55, %v54
  %v71 = vpack.c.b16 %v57, %v56
  %v72 = vpack.c.b16 %v59, %v58
  %v73 = vpack.c.b16 %v61, %v60
  %v74 = vpack.c.b16 %v63, %v62
  %v75 = vpack.c.b16 %v65, %v64
  %v76 = vpack.c.b16 %v67, %v66
  %v77 = vpack.c.b16 %v69, %v68
  %86 = vmatprep.subr.bf16.mxu0 0
  %87 = vmatpush1.bf16.xpose.msra.mxu0 %v70
  %88 = vmatprep.subr.bf16.mxu0 0
  %89 = vmatpush1.bf16.xpose.msra.mxu0 %v71
  %90 = vmatprep.subr.bf16.mxu0 0
  %91 = vmatpush1.bf16.xpose.msra.mxu0 %v72
  %92 = vmatprep.subr.bf16.mxu0 0
  %93 = vmatpush1.bf16.xpose.msra.mxu0 %v73
  %94 = vmatprep.subr.bf16.mxu0 0
  %95 = vmatpush1.bf16.xpose.msra.mxu0 %v74
  %96 = vmatprep.subr.bf16.mxu0 0
  %97 = vmatpush1.bf16.xpose.msra.mxu0 %v75
  %98 = vmatprep.subr.bf16.mxu0 0
  %99 = vmatpush1.bf16.xpose.msra.mxu0 %v76
  %100 = vmatprep.subr.bf16.mxu0 0
  %101 = vmatpush1.bf16.xpose.msra.mxu0 %v77
  %102 = vmatprep.subr.bf16.mxu0 0
  %103 = vmatpush1.bf16.xpose.msra.mxu0 0
  %104 = vmatprep.subr.bf16.mxu0 0
  %105 = vmatpush1.bf16.xpose.msra.mxu0 0
  %106 = vmatprep.subr.bf16.mxu0 0
  %107 = vmatpush1.bf16.xpose.msra.mxu0 0
  %108 = vmatprep.subr.bf16.mxu0 0
  %109 = vmatpush1.bf16.xpose.msra.mxu0 0
  %110 = vmatprep.subr.bf16.mxu0 0
  %111 = vmatpush1.bf16.xpose.msra.mxu0 0
  %112 = vmatprep.subr.bf16.mxu0 0
  %113 = vmatpush1.bf16.xpose.msra.mxu0 0
  %114 = vmatprep.subr.bf16.mxu0 0
  %115 = vmatpush1.bf16.xpose.msra.mxu0 0
  %116 = vmatprep.subr.bf16.mxu0 0
  %117 = vmatpush1.bf16.xpose.msra.mxu0 0
  %118 = vmatprep.mubr.bf16.mxu0 0
  %119 = vmatmul.mubr.bf16.gmra.mrb[0].mxu0 %v21
  %v120 = vpop.f32.mrb[0].mxu0
  %v121 = vadd.f32 0.0, %v120
  %v122 = vpop.f32.mrb[0].mxu0
  %v123 = vpop.f32.mrb[0].mxu0
  %v124 = vpop.f32.mrb[0].mxu0
  %125 = vdwg.mxu0
  %v126 = vadd.f32 %v20, %v121
  %127 = vst [vmem:[#allocation2] sm:$0xff] %v126
  // Predicated region
  $region18: #{transformer_forward.21} parent=0 // pred_check
    %p128 = pneg %p15
  $region19: #{transformer_forward.21} parent=0 // pred_check_branch
    %130 = sbr.rel (%p128) target = $region21
  $region20: #{transformer_forward.21} parent=0 // pred_region
    %v131 = vld [vmem:[#allocation2] sm:$0xff]
    %v132 = vld [vmem:[%s2] sm:$0xff]
    %v133 = vadd.f32 %v131, %v132
    %134 = vst [vmem:[%s3] sm:$0xff] %v133
  $region21: #{transformer_forward.21} parent=0 // pred_fallthru
    _
  // Predicated region
  $region22: #{transformer_forward.21} parent=0 // pred_check
    _
  $region23: #{transformer_forward.21} parent=0 // pred_check_branch
    %136 = sbr.rel (0) target = $region25
  $region24: #{transformer_forward.21} parent=0 // pred_region
    _
  $region25: #{transformer_forward.21} parent=0 // pred_fallthru
    _
  // Predicated region
  $region26: #{transformer_forward.21} parent=0 // pred_check
    _
  $region27: #{transformer_forward.21} parent=0 // pred_check_branch
    %138 = sbr.rel (0) target = $region29
  $region28: #{transformer_forward.21} parent=0 // pred_region
    _
  $region29: #{transformer_forward.21} parent=0 // pred_fallthru
    _

// kernel: transformer_forward.23
$region0: #{transformer_forward.23}
  #allocation0 [shape = 'u32[]', space=smem, size = 0x4, offset = 0x4, fixed_abs, tag = 'smem constant byte address 0x4 - core index']
  #allocation1 [shape = 'u32[144,128]{1,0:T(1,128)}', space=vmem, size = 0x12000, scoped, tag = 'internal scratch']
  #allocation2 [shape = 'f32[8,512]{1,0:T(8,128)}', space=vmem, size = 0x4000, scoped, tag = 'scratch operand']
  %s0 = inlined_call_operand.vmem [shape: bf16[8,128], index: 0, kind: input, shape index: {}]
  %s1 = inlined_call_operand.vmem [shape: bf16[512,128], index: 1, kind: input, shape index: {}]
  %s2 = inlined_call_operand.vmem [shape: bf16[8,512], index: 2, kind: output, shape index: {}]
  %s3 = sld [smem:[#allocation0]]
  $region26: #{transformer_forward.23} parent=0
    _
  %s5 = ssub.s32 1, %s3
  %s6 = scalar_select 0, %s5, %s3
  // Predicated region
  $region2: #{transformer_forward.23} parent=0 // pred_check
    _
  $region3: #{transformer_forward.23} parent=0 // pred_check_branch
    %8 = sbr.rel (0) target = $region5
  $region4: #{transformer_forward.23} parent=0 // pred_region
    _
  $region5: #{transformer_forward.23} parent=0 // pred_fallthru
    _
  // Predicated region
  $region6: #{transformer_forward.23} parent=0 // pred_check
    _
  $region7: #{transformer_forward.23} parent=0 // pred_check_branch
    %10 = sbr.rel (0) target = $region9
  $region8: #{transformer_forward.23} parent=0 // pred_region
    _
  $region9: #{transformer_forward.23} parent=0 // pred_fallthru
    _
  %p12 = scmp.eq.s32.totalorder 0, 0
  // Predicated region
  $region10: #{transformer_forward.23} parent=0 // pred_check
    %p13 = pneg %p12
  $region11: #{transformer_forward.23} parent=0 // pred_check_branch
    %15 = sbr.rel (%p13) target = $region13
  $region12: #{transformer_forward.23} parent=0 // pred_region
    %16 = vst [vmem:[#allocation2] sm:$0xff] 0.0
    %17 = vst [vmem:[#allocation2 + $0x8] sm:$0xff] 0.0
    %18 = vst [vmem:[#allocation2 + $0x10] sm:$0xff] 0.0
    %19 = vst [vmem:[#allocation2 + $0x18] sm:$0xff] 0.0
  $region13: #{transformer_forward.23} parent=0 // pred_fallthru
    _
  %v20 = vld [vmem:[#allocation2] sm:$0xff]
  %v21 = vld [vmem:[#allocation2 + $0x8] sm:$0xff]
  %v22 = vld [vmem:[#allocation2 + $0x10] sm:$0xff]
  %v23 = vld [vmem:[#allocation2 + $0x18] sm:$0xff]
  %v24 = vld [vmem:[%s0] sm:$0xf]
  %v25 = vld [vmem:[%s1] sm:$0xf]
  %v26 = vld [vmem:[%s1 + $0x4] sm:$0xf]
  %v27 = vld [vmem:[%s1 + $0x8] sm:$0xf]
  %v28 = vld [vmem:[%s1 + $0xc] sm:$0xf]
  %v29 = vld [vmem:[%s1 + $0x10] sm:$0xf]
  %v30 = vld [vmem:[%s1 + $0x14] sm:$0xf]
  %v31 = vld [vmem:[%s1 + $0x18] sm:$0xf]
  %v32 = vld [vmem:[%s1 + $0x1c] sm:$0xf]
  %v33 = vld [vmem:[%s1 + $0x20] sm:$0xf]
  %v34 = vld [vmem:[%s1 + $0x24] sm:$0xf]
  %v35 = vld [vmem:[%s1 + $0x28] sm:$0xf]
  %v36 = vld [vmem:[%s1 + $0x2c] sm:$0xf]
  %v37 = vld [vmem:[%s1 + $0x30] sm:$0xf]
  %v38 = vld [vmem:[%s1 + $0x34] sm:$0xf]
  %v39 = vld [vmem:[%s1 + $0x38] sm:$0xf]
  %v40 = vld [vmem:[%s1 + $0x3c] sm:$0xf]
  %v41 = vld [vmem:[%s1 + $0x40] sm:$0xf]
  %v42 = vld [vmem:[%s1 + $0x44] sm:$0xf]
  %v43 = vld [vmem:[%s1 + $0x48] sm:$0xf]
  %v44 = vld [vmem:[%s1 + $0x4c] sm:$0xf]
  %v45 = vld [vmem:[%s1 + $0x50] sm:$0xf]
  %v46 = vld [vmem:[%s1 + $0x54] sm:$0xf]
  %v47 = vld [vmem:[%s1 + $0x58] sm:$0xf]
  %v48 = vld [vmem:[%s1 + $0x5c] sm:$0xf]
  %v49 = vld [vmem:[%s1 + $0x60] sm:$0xf]
  %v50 = vld [vmem:[%s1 + $0x64] sm:$0xf]
  %v51 = vld [vmem:[%s1 + $0x68] sm:$0xf]
  %v52 = vld [vmem:[%s1 + $0x6c] sm:$0xf]
  %v53 = vld [vmem:[%s1 + $0x70] sm:$0xf]
  %v54 = vld [vmem:[%s1 + $0x74] sm:$0xf]
  %v55 = vld [vmem:[%s1 + $0x78] sm:$0xf]
  %v56 = vld [vmem:[%s1 + $0x7c] sm:$0xf]
  %v57 = vld [vmem:[%s1 + $0x80] sm:$0xf]
  %v58 = vld [vmem:[%s1 + $0x84] sm:$0xf]
  %v59 = vld [vmem:[%s1 + $0x88] sm:$0xf]
  %v60 = vld [vmem:[%s1 + $0x8c] sm:$0xf]
  %v61 = vld [vmem:[%s1 + $0x90] sm:$0xf]
  %v62 = vld [vmem:[%s1 + $0x94] sm:$0xf]
  %v63 = vld [vmem:[%s1 + $0x98] sm:$0xf]
  %v64 = vld [vmem:[%s1 + $0x9c] sm:$0xf]
  %v65 = vld [vmem:[%s1 + $0xa0] sm:$0xf]
  %v66 = vld [vmem:[%s1 + $0xa4] sm:$0xf]
  %v67 = vld [vmem:[%s1 + $0xa8] sm:$0xf]
  %v68 = vld [vmem:[%s1 + $0xac] sm:$0xf]
  %v69 = vld [vmem:[%s1 + $0xb0] sm:$0xf]
  %v70 = vld [vmem:[%s1 + $0xb4] sm:$0xf]
  %v71 = vld [vmem:[%s1 + $0xb8] sm:$0xf]
  %v72 = vld [vmem:[%s1 + $0xbc] sm:$0xf]
  %v73 = vld [vmem:[%s1 + $0xc0] sm:$0xf]
  %v74 = vld [vmem:[%s1 + $0xc4] sm:$0xf]
  %v75 = vld [vmem:[%s1 + $0xc8] sm:$0xf]
  %v76 = vld [vmem:[%s1 + $0xcc] sm:$0xf]
  %v77 = vld [vmem:[%s1 + $0xd0] sm:$0xf]
  %v78 = vld [vmem:[%s1 + $0xd4] sm:$0xf]
  %v79 = vld [vmem:[%s1 + $0xd8] sm:$0xf]
  %v80 = vld [vmem:[%s1 + $0xdc] sm:$0xf]
  %v81 = vld [vmem:[%s1 + $0xe0] sm:$0xf]
  %v82 = vld [vmem:[%s1 + $0xe4] sm:$0xf]
  %v83 = vld [vmem:[%s1 + $0xe8] sm:$0xf]
  %v84 = vld [vmem:[%s1 + $0xec] sm:$0xf]
  %v85 = vld [vmem:[%s1 + $0xf0] sm:$0xf]
  %v86 = vld [vmem:[%s1 + $0xf4] sm:$0xf]
  %v87 = vld [vmem:[%s1 + $0xf8] sm:$0xf]
  %v88 = vld [vmem:[%s1 + $0xfc] sm:$0xf]
  %v153 = vunpack.c.l.b16 %v25
  %v154 = vunpack.c.l.b16 %v26
  %v155 = vunpack.c.l.b16 %v27
  %v156 = vunpack.c.l.b16 %v28
  %v157 = vunpack.c.l.b16 %v29
  %v158 = vunpack.c.l.b16 %v30
  %v159 = vunpack.c.l.b16 %v31
  %v160 = vunpack.c.l.b16 %v32
  %v161 = vunpack.c.l.b16 %v33
  %v162 = vunpack.c.l.b16 %v34
  %v163 = vunpack.c.l.b16 %v35
  %v164 = vunpack.c.l.b16 %v36
  %v165 = vunpack.c.l.b16 %v37
  %v166 = vunpack.c.l.b16 %v38
  %v167 = vunpack.c.l.b16 %v39
  %v168 = vunpack.c.l.b16 %v40
  %v169 = vunpack.c.l.b16 %v41
  %v170 = vunpack.c.l.b16 %v42
  %v171 = vunpack.c.l.b16 %v43
  %v172 = vunpack.c.l.b16 %v44
  %v173 = vunpack.c.l.b16 %v45
  %v174 = vunpack.c.l.b16 %v46
  %v175 = vunpack.c.l.b16 %v47
  %v176 = vunpack.c.l.b16 %v48
  %v177 = vunpack.c.l.b16 %v49
  %v178 = vunpack.c.l.b16 %v50
  %v179 = vunpack.c.l.b16 %v51
  %v180 = vunpack.c.l.b16 %v52
  %v181 = vunpack.c.l.b16 %v53
  %v182 = vunpack.c.l.b16 %v54
  %v183 = vunpack.c.l.b16 %v55
  %v184 = vunpack.c.l.b16 %v56
  %v185 = vunpack.c.l.b16 %v57
  %v186 = vunpack.c.l.b16 %v58
  %v187 = vunpack.c.l.b16 %v59
  %v188 = vunpack.c.l.b16 %v60
  %v189 = vunpack.c.l.b16 %v61
  %v190 = vunpack.c.l.b16 %v62
  %v191 = vunpack.c.l.b16 %v63
  %v192 = vunpack.c.l.b16 %v64
  %v193 = vunpack.c.l.b16 %v65
  %v194 = vunpack.c.l.b16 %v66
  %v195 = vunpack.c.l.b16 %v67
  %v196 = vunpack.c.l.b16 %v68
  %v197 = vunpack.c.l.b16 %v69
  %v198 = vunpack.c.l.b16 %v70
  %v199 = vunpack.c.l.b16 %v71
  %v200 = vunpack.c.l.b16 %v72
  %v201 = vunpack.c.l.b16 %v73
  %v202 = vunpack.c.l.b16 %v74
  %v203 = vunpack.c.l.b16 %v75
  %v204 = vunpack.c.l.b16 %v76
  %v205 = vunpack.c.l.b16 %v77
  %v206 = vunpack.c.l.b16 %v78
  %v207 = vunpack.c.l.b16 %v79
  %v208 = vunpack.c.l.b16 %v80
  %v209 = vunpack.c.l.b16 %v81
  %v210 = vunpack.c.l.b16 %v82
  %v211 = vunpack.c.l.b16 %v83
  %v212 = vunpack.c.l.b16 %v84
  %v213 = vunpack.c.l.b16 %v85
  %v214 = vunpack.c.l.b16 %v86
  %v215 = vunpack.c.l.b16 %v87
  %v216 = vunpack.c.l.b16 %v88
  %v217 = vpack.c.b16 %v154, %v153
  %v218 = vpack.c.b16 %v156, %v155
  %v219 = vpack.c.b16 %v158, %v157
  %v220 = vpack.c.b16 %v160, %v159
  %v221 = vpack.c.b16 %v162, %v161
  %v222 = vpack.c.b16 %v164, %v163
  %v223 = vpack.c.b16 %v166, %v165
  %v224 = vpack.c.b16 %v168, %v167
  %v225 = vpack.c.b16 %v170, %v169
  %v226 = vpack.c.b16 %v172, %v171
  %v227 = vpack.c.b16 %v174, %v173
  %v228 = vpack.c.b16 %v176, %v175
  %v229 = vpack.c.b16 %v178, %v177
  %v230 = vpack.c.b16 %v180, %v179
  %v231 = vpack.c.b16 %v182, %v181
  %v232 = vpack.c.b16 %v184, %v183
  %v233 = vpack.c.b16 %v186, %v185
  %v234 = vpack.c.b16 %v188, %v187
  %v235 = vpack.c.b16 %v190, %v189
  %v236 = vpack.c.b16 %v192, %v191
  %v237 = vpack.c.b16 %v194, %v193
  %v238 = vpack.c.b16 %v196, %v195
  %v239 = vpack.c.b16 %v198, %v197
  %v240 = vpack.c.b16 %v200, %v199
  %v241 = vpack.c.b16 %v202, %v201
  %v242 = vpack.c.b16 %v204, %v203
  %v243 = vpack.c.b16 %v206, %v205
  %v244 = vpack.c.b16 %v208, %v207
  %v245 = vpack.c.b16 %v210, %v209
  %v246 = vpack.c.b16 %v212, %v211
  %v247 = vpack.c.b16 %v214, %v213
  %v248 = vpack.c.b16 %v216, %v215
  %281 = vmatprep.subr.bf16.mxu0 0
  %282 = vmatpush1.bf16.xpose.msra.mxu0 %v217
  %283 = vmatprep.subr.bf16.mxu0 0
  %284 = vmatpush1.bf16.xpose.msra.mxu0 %v218
  %285 = vmatprep.subr.bf16.mxu0 0
  %286 = vmatpush1.bf16.xpose.msra.mxu0 %v219
  %287 = vmatprep.subr.bf16.mxu0 0
  %288 = vmatpush1.bf16.xpose.msra.mxu0 %v220
  %289 = vmatprep.subr.bf16.mxu0 0
  %290 = vmatpush1.bf16.xpose.msra.mxu0 %v221
  %291 = vmatprep.subr.bf16.mxu0 0
  %292 = vmatpush1.bf16.xpose.msra.mxu0 %v222
  %293 = vmatprep.subr.bf16.mxu0 0
  %294 = vmatpush1.bf16.xpose.msra.mxu0 %v223
  %295 = vmatprep.subr.bf16.mxu0 0
  %296 = vmatpush1.bf16.xpose.msra.mxu0 %v224
  %297 = vmatprep.subr.bf16.mxu0 0
  %298 = vmatpush1.bf16.xpose.msra.mxu0 %v225
  %299 = vmatprep.subr.bf16.mxu0 0
  %300 = vmatpush1.bf16.xpose.msra.mxu0 %v226
  %301 = vmatprep.subr.bf16.mxu0 0
  %302 = vmatpush1.bf16.xpose.msra.mxu0 %v227
  %303 = vmatprep.subr.bf16.mxu0 0
  %304 = vmatpush1.bf16.xpose.msra.mxu0 %v228
  %305 = vmatprep.subr.bf16.mxu0 0
  %306 = vmatpush1.bf16.xpose.msra.mxu0 %v229
  %307 = vmatprep.subr.bf16.mxu0 0
  %308 = vmatpush1.bf16.xpose.msra.mxu0 %v230
  %309 = vmatprep.subr.bf16.mxu0 0
  %310 = vmatpush1.bf16.xpose.msra.mxu0 %v231
  %311 = vmatprep.subr.bf16.mxu0 0
  %312 = vmatpush1.bf16.xpose.msra.mxu0 %v232
  %313 = vmatprep.mubr.bf16.mxu0 0
  %314 = vmatmul.mubr.bf16.gmra.mrb[0].mxu0 %v24
  %v315 = vpop.f32.mrb[0].mxu0
  %v316 = vadd.f32 0.0, %v315
  %v317 = vpop.f32.mrb[0].mxu0
  %v318 = vadd.f32 0.0, %v317
  %v319 = vpop.f32.mrb[0].mxu0
  %v320 = vpop.f32.mrb[0].mxu0
  %321 = vdwg.mxu0
  %322 = vmatprep.subr.bf16.mxu0 0
  %323 = vmatpush1.bf16.xpose.msra.mxu0 %v233
  %324 = vmatprep.subr.bf16.mxu0 0
  %325 = vmatpush1.bf16.xpose.msra.mxu0 %v234
  %326 = vmatprep.subr.bf16.mxu0 0
  %327 = vmatpush1.bf16.xpose.msra.mxu0 %v235
  %328 = vmatprep.subr.bf16.mxu0 0
  %329 = vmatpush1.bf16.xpose.msra.mxu0 %v236
  %330 = vmatprep.subr.bf16.mxu0 0
  %331 = vmatpush1.bf16.xpose.msra.mxu0 %v237
  %332 = vmatprep.subr.bf16.mxu0 0
  %333 = vmatpush1.bf16.xpose.msra.mxu0 %v238
  %334 = vmatprep.subr.bf16.mxu0 0
  %335 = vmatpush1.bf16.xpose.msra.mxu0 %v239
  %336 = vmatprep.subr.bf16.mxu0 0
  %337 = vmatpush1.bf16.xpose.msra.mxu0 %v240
  %338 = vmatprep.subr.bf16.mxu0 0
  %339 = vmatpush1.bf16.xpose.msra.mxu0 %v241
  %340 = vmatprep.subr.bf16.mxu0 0
  %341 = vmatpush1.bf16.xpose.msra.mxu0 %v242
  %342 = vmatprep.subr.bf16.mxu0 0
  %343 = vmatpush1.bf16.xpose.msra.mxu0 %v243
  %344 = vmatprep.subr.bf16.mxu0 0
  %345 = vmatpush1.bf16.xpose.msra.mxu0 %v244
  %346 = vmatprep.subr.bf16.mxu0 0
  %347 = vmatpush1.bf16.xpose.msra.mxu0 %v245
  %348 = vmatprep.subr.bf16.mxu0 0
  %349 = vmatpush1.bf16.xpose.msra.mxu0 %v246
  %350 = vmatprep.subr.bf16.mxu0 0
  %351 = vmatpush1.bf16.xpose.msra.mxu0 %v247
  %352 = vmatprep.subr.bf16.mxu0 0
  %353 = vmatpush1.bf16.xpose.msra.mxu0 %v248
  %354 = vmatprep.mubr.bf16.mxu0 0
  %355 = vmatmul.mubr.bf16.gmra.mrb[0].mxu0 %v24
  %v356 = vpop.f32.mrb[0].mxu0
  %v357 = vadd.f32 0.0, %v356
  %v358 = vpop.f32.mrb[0].mxu0
  %v359 = vadd.f32 0.0, %v358
  %v360 = vpop.f32.mrb[0].mxu0
  %v361 = vpop.f32.mrb[0].mxu0
  %362 = vdwg.mxu0
  %v363 = vadd.f32 %v20, %v316
  %v364 = vadd.f32 %v21, %v318
  %v365 = vadd.f32 %v22, %v357
  %v366 = vadd.f32 %v23, %v359
  %367 = vst [vmem:[#allocation2] sm:$0xff] %v363
  %368 = vst [vmem:[#allocation2 + $0x8] sm:$0xff] %v364
  %369 = vst [vmem:[#allocation2 + $0x10] sm:$0xff] %v365
  %370 = vst [vmem:[#allocation2 + $0x18] sm:$0xff] %v366
  // Predicated region
  $region14: #{transformer_forward.23} parent=0 // pred_check
    %p371 = pneg %p12
  $region15: #{transformer_forward.23} parent=0 // pred_check_branch
    %373 = sbr.rel (%p371) target = $region17
  $region16: #{transformer_forward.23} parent=0 // pred_region
    %v374 = vld [vmem:[#allocation2] sm:$0xff]
    %v375 = vld [vmem:[#allocation2 + $0x8] sm:$0xff]
    %v376 = vld [vmem:[#allocation2 + $0x10] sm:$0xff]
    %v377 = vld [vmem:[#allocation2 + $0x18] sm:$0xff]
    %v378 = vmul.f32 %v374, %v374
    %v379 = vmul.f32 %v375, %v375
    %v380 = vmul.f32 %v376, %v376
    %v381 = vmul.f32 %v377, %v377
    %v382 = vmul.f32 %v374, %v378
    %v383 = vmul.f32 %v375, %v379
    %v384 = vmul.f32 %v376, %v380
    %v385 = vmul.f32 %v377, %v381
    %v386 = vmul.f32 %v382, 0.044715
    %v387 = vmul.f32 %v383, 0.044715
    %v388 = vmul.f32 %v384, 0.044715
    %v389 = vmul.f32 %v385, 0.044715
    %v390 = vadd.f32 %v374, %v386
    %v391 = vadd.f32 %v375, %v387
    %v392 = vadd.f32 %v376, %v388
    %v393 = vadd.f32 %v377, %v389
    %v394 = vmul.f32 %v390, 0.7978846
    %v395 = vmul.f32 %v391, 0.7978846
    %v396 = vmul.f32 %v392, 0.7978846
    %v397 = vmul.f32 %v393, 0.7978846
    %v398 = vtanh.pop %v394
    %v399 = vtanh.pop %v395
    %v400 = vtanh.pop %v396
    %v401 = vtanh.pop %v397
    %v402 = vadd.f32 %v398, 1.0
    %v403 = vadd.f32 %v399, 1.0
    %v404 = vadd.f32 %v400, 1.0
    %v405 = vadd.f32 %v401, 1.0
    %v406 = vmul.f32 %v402, 0.5
    %v407 = vmul.f32 %v403, 0.5
    %v408 = vmul.f32 %v404, 0.5
    %v409 = vmul.f32 %v405, 0.5
    %v410 = vmul.f32 %v374, %v406
    %v411 = vmul.f32 %v375, %v407
    %v412 = vmul.f32 %v376, %v408
    %v413 = vmul.f32 %v377, %v409
    %v414 = vpack.c.bf16 %v410, %v410
    %v415 = vpack.c.bf16 %v411, %v411
    %v416 = vpack.c.bf16 %v412, %v412
    %v417 = vpack.c.bf16 %v413, %v413
    %v422 = vunpack.c.l.b16 %v414
    %v423 = vunpack.c.l.b16 %v415
    %v424 = vunpack.c.l.b16 %v416
    %v425 = vunpack.c.l.b16 %v417
    %v426 = vpack.c.b16 %v423, %v422
    %v427 = vpack.c.b16 %v425, %v424
    %430 = vst [vmem:[%s2] sm:$0xff] %v426
    %431 = vst [vmem:[%s2 + $0x8] sm:$0xff] %v427
  $region17: #{transformer_forward.23} parent=0 // pred_fallthru
    _
  // Predicated region
  $region18: #{transformer_forward.23} parent=0 // pred_check
    _
  $region19: #{transformer_forward.23} parent=0 // pred_check_branch
    %433 = sbr.rel (0) target = $region21
  $region20: #{transformer_forward.23} parent=0 // pred_region
    _
  $region21: #{transformer_forward.23} parent=0 // pred_fallthru
    _
  // Predicated region
  $region22: #{transformer_forward.23} parent=0 // pred_check
    _
  $region23: #{transformer_forward.23} parent=0 // pred_check_branch
    %435 = sbr.rel (0) target = $region25
  $region24: #{transformer_forward.23} parent=0 // pred_region
    _
  $region25: #{transformer_forward.23} parent=0 // pred_fallthru
    _

// kernel: transformer_forward.33
$region0: #{transformer_forward.33}
  #allocation0 [shape = 'u32[]', space=smem, size = 0x4, offset = 0x4, fixed_abs, tag = 'smem constant byte address 0x4 - core index']
  #allocation1 [shape = 'u32[144,128]{1,0:T(1,128)}', space=vmem, size = 0x12000, scoped, tag = 'internal scratch']
  #allocation2 [shape = 'f32[8,128]{1,0:T(8,128)}', space=vmem, size = 0x1000, scoped, tag = 'scratch operand']
  %s0 = inlined_call_operand.vmem [shape: bf16[8,128], index: 0, kind: input, shape index: {}]
  %s1 = inlined_call_operand.vmem [shape: bf16[896,128], index: 1, kind: input, shape index: {}]
  %s2 = inlined_call_operand.vmem [shape: f32[1,896], index: 2, kind: input, shape index: {}]
  %s3 = inlined_call_operand.vmem [shape: f32[8,896], index: 3, kind: output, shape index: {}]
  %s4 = sld [smem:[#allocation0]]
  $region53: #{transformer_forward.33} parent=0
    _
  %s6 = ssub.s32 1, %s4
  %s7 = scalar_select 0, %s6, %s4
  loop: start=0, step=1, limit=9
  $region2: #{transformer_forward.33} parent=0 // loop_pre_header
    _
  $region3: #{transformer_forward.33} parent=0 // loop_header
    %s9 = sphi 0, %s13
    %p10 = scmp.ge.s32.totalorder %s9, 9
    %s16 = sphi 0, %s35
    %s17 = sphi 0, %s31
    %s18 = sphi 0, %s27
    %s19 = sphi 0, %s16
    %s20 = sphi 0, %s17
    %s21 = sphi 0, %s18
    %s22 = sphi 0, %s19
    %s23 = sphi 0, %s20
    %s24 = sphi 0, %s21
    %s40 = sphi 0, %s42
    %s43 = sphi 0, %s40
    %s44 = sphi 0, %s43
    %s60 = sphi 0, %s44
    %s68 = sphi 0, %s70
    %s71 = sphi 0, %s68
    %s72 = sphi 0, %s71
    %s88 = sphi 0, %s72
    %s94 = sphi 0, %s96
    %s97 = sphi 0, %s94
    %s98 = sphi 0, %s97
    %s114 = sphi 0, %s98
    %s122 = sphi 0, %s124
    %s125 = sphi 0, %s122
    %s126 = sphi 0, %s125
    %s142 = sphi 0, %s126
  $region4: #{transformer_forward.33} parent=0 // loop_header_branch
    %12 = sbr.rel (%p10) target = $region8
  $region5: #{transformer_forward.33} parent=0 // loop_body
    %s14 = ssub.s32 %s9, 1
    %s15 = ssub.s32 %s9, 2
    %s25 = sadd.s32 1, %s18
    %p26 = scmp.ge.s32.totalorder %s25, 1
    %s27 = scalar_select %p26, 0, %s25
    %s28 = sadd.s32 1, %s17
    %s29 = scalar_select %p26, %s28, %s17
    %p30 = scmp.ge.s32.totalorder %s29, 7
    %s31 = scalar_select %p30, 0, %s29
    %s32 = sadd.s32 1, %s16
    %s33 = scalar_select %p30, %s32, %s16
    %p34 = scmp.ge.s32.totalorder %s33, 1
    %s35 = scalar_select %p34, 0, %s33
    %s36 = ssub.s32 %s16, %s35
    %s37 = ssub.s32 %s18, %s27
    %s38 = sor.u32 %s36, %s37
    %p39 = scmp.eq.s32.totalorder %s38, 0
    %s41 = sadd.s32 %s40, 1
    %s42 = scalar_select %p39, %s40, %s41
    %p45 = pneg %p39
    %p46 = scmp.eq.s32.totalorder %s9, 6
    %p47 = por %p45, %p46
    %p48 = scmp.ne.s32.totalorder %s40, %s43
    %p49 = scmp.eq.s32.totalorder %s9, 0
    %p50 = por %p48, %p49
    %p51 = scmp.ne.s32.totalorder %s40, %s43
    %p52 = scmp.eq.s32.totalorder %s14, 6
    %p53 = por %p51, %p52
    %p54 = scmp.ne.s32.totalorder %s43, %s44
    %p55 = scmp.eq.s32.totalorder %s14, 0
    %p56 = por %p54, %p55
    %p57 = scmp.ne.s32.totalorder %s43, %s44
    %p58 = scmp.eq.s32.totalorder %s15, 6
    %p59 = por %p57, %p58
    %p61 = scmp.ne.s32.totalorder %s44, %s60
    %p62 = scmp.eq.s32.totalorder %s15, 0
    %p63 = por %p61, %p62
    %s64 = ssub.s32 %s17, %s31
    %s65 = ssub.s32 %s18, %s27
    %s66 = sor.u32 %s64, %s65
    %p67 = scmp.eq.s32.totalorder %s66, 0
    %s69 = sadd.s32 %s68, 1
    %s70 = scalar_select %p67, %s68, %s69
    %p73 = pneg %p67
    %p74 = scmp.eq.s32.totalorder %s9, 6
    %p75 = por %p73, %p74
    %p76 = scmp.ne.s32.totalorder %s68, %s71
    %p77 = scmp.eq.s32.totalorder %s9, 0
    %p78 = por %p76, %p77
    %p79 = scmp.ne.s32.totalorder %s68, %s71
    %p80 = scmp.eq.s32.totalorder %s14, 6
    %p81 = por %p79, %p80
    %p82 = scmp.ne.s32.totalorder %s71, %s72
    %p83 = scmp.eq.s32.totalorder %s14, 0
    %p84 = por %p82, %p83
    %p85 = scmp.ne.s32.totalorder %s71, %s72
    %p86 = scmp.eq.s32.totalorder %s15, 6
    %p87 = por %p85, %p86
    %p89 = scmp.ne.s32.totalorder %s72, %s88
    %p90 = scmp.eq.s32.totalorder %s15, 0
    %p91 = por %p89, %p90
    %s92 = ssub.s32 %s17, %s31
    %p93 = scmp.eq.s32.totalorder %s92, 0
    %s95 = sadd.s32 %s94, 1
    %s96 = scalar_select %p93, %s94, %s95
    %p99 = pneg %p93
    %p100 = scmp.eq.s32.totalorder %s9, 6
    %p101 = por %p99, %p100
    %p102 = scmp.ne.s32.totalorder %s94, %s97
    %p103 = scmp.eq.s32.totalorder %s9, 0
    %p104 = por %p102, %p103
    %p105 = scmp.ne.s32.totalorder %s94, %s97
    %p106 = scmp.eq.s32.totalorder %s14, 6
    %p107 = por %p105, %p106
    %p108 = scmp.ne.s32.totalorder %s97, %s98
    %p109 = scmp.eq.s32.totalorder %s14, 0
    %p110 = por %p108, %p109
    %p111 = scmp.ne.s32.totalorder %s97, %s98
    %p112 = scmp.eq.s32.totalorder %s15, 6
    %p113 = por %p111, %p112
    %p115 = scmp.ne.s32.totalorder %s98, %s114
    %p116 = scmp.eq.s32.totalorder %s15, 0
    %p117 = por %p115, %p116
    %s118 = ssub.s32 %s16, %s35
    %s119 = ssub.s32 %s17, %s31
    %s120 = sor.u32 %s118, %s119
    %p121 = scmp.eq.s32.totalorder %s120, 0
    %s123 = sadd.s32 %s122, 1
    %s124 = scalar_select %p121, %s122, %s123
    %p127 = pneg %p121
    %p128 = scmp.eq.s32.totalorder %s9, 6
    %p129 = por %p127, %p128
    %p130 = scmp.ne.s32.totalorder %s122, %s125
    %p131 = scmp.eq.s32.totalorder %s9, 0
    %p132 = por %p130, %p131
    %p133 = scmp.ne.s32.totalorder %s122, %s125
    %p134 = scmp.eq.s32.totalorder %s14, 6
    %p135 = por %p133, %p134
    %p136 = scmp.ne.s32.totalorder %s125, %s126
    %p137 = scmp.eq.s32.totalorder %s14, 0
    %p138 = por %p136, %p137
    %p139 = scmp.ne.s32.totalorder %s125, %s126
    %p140 = scmp.eq.s32.totalorder %s15, 6
    %p141 = por %p139, %p140
    %p143 = scmp.ne.s32.totalorder %s126, %s142
    %p144 = scmp.eq.s32.totalorder %s15, 0
    %p145 = por %p143, %p144
    %p146 = scmp.le.s32.totalorder 1, %s9
    %p147 = scmp.lt.s32.totalorder %s9, 8
    %p148 = pnand %p146, %p147
    %p149 = pneg %p148
    // Predicated region
    $region9: #{transformer_forward.33} parent=5 // pred_check
      _
    $region10: #{transformer_forward.33} parent=5 // pred_check_branch
      %151 = sbr.rel (%p148) target = $region12
    $region11: #{transformer_forward.33} parent=5 // pred_region
      %s152 = ssub.s32 %s9, 1
      // Predicated region
      $region13: #{transformer_forward.33} parent=11 // pred_check
        %p153 = pneg %p56
      $region14: #{transformer_forward.33} parent=11 // pred_check_branch
        %155 = sbr.rel (%p153) target = $region16
      $region15: #{transformer_forward.33} parent=11 // pred_region
        %p156 = scmp.lt.s32.totalorder %s19, 0
        %s157 = scalar_select %p156, %s19, 0
        %p158 = scmp.lt.s32.totalorder %s21, 0
        %s159 = scalar_select %p158, %s21, 0
        %s160 = sadd.s32 %s159, %s157
        %s161 = smul.addr %s160, 4
        %s162 = scalar_lea.vmem %s0, %s161
      $region16: #{transformer_forward.33} parent=11 // pred_fallthru
        _
    $region12: #{transformer_forward.33} parent=5 // pred_fallthru
      _
    %p163 = scmp.lt.s32.totalorder %s9, 7
    // Predicated region
    $region17: #{transformer_forward.33} parent=5 // pred_check
      %p164 = pneg %p163
    $region18: #{transformer_forward.33} parent=5 // pred_check_branch
      %166 = sbr.rel (%p164) target = $region20
    $region19: #{transformer_forward.33} parent=5 // pred_region
      // Predicated region
      $region21: #{transformer_forward.33} parent=19 // pred_check
        %p167 = pneg %p78
      $region22: #{transformer_forward.33} parent=19 // pred_check_branch
        %169 = sbr.rel (%p167) target = $region24
      $region23: #{transformer_forward.33} parent=19 // pred_region
        %s170 = smul.u32 16, %s17
        %p171 = scmp.lt.s32.totalorder %s170, 111
        %s172 = scalar_select %p171, %s170, 111
        %p173 = scmp.lt.s32.totalorder %s18, 0
        %s174 = scalar_select %p173, %s18, 0
        %s175 = sadd.s32 %s174, %s172
        %s176 = smul.addr %s175, 4
        %s177 = scalar_lea.vmem %s1, %s176
        %s178 = smul.u32 16, %s17
      $region24: #{transformer_forward.33} parent=19 // pred_fallthru
        _
      // Predicated region
      $region25: #{transformer_forward.33} parent=19 // pred_check
        %p179 = pneg %p104
      $region26: #{transformer_forward.33} parent=19 // pred_check_branch
        %181 = sbr.rel (%p179) target = $region28
      $region27: #{transformer_forward.33} parent=19 // pred_region
        %p182 = scmp.lt.s32.totalorder %s17, 6
        %s183 = scalar_select %p182, %s17, 6
        %s184 = scalar_lea.vmem %s2, %s183
      $region28: #{transformer_forward.33} parent=19 // pred_fallthru
        _
    $region20: #{transformer_forward.33} parent=5 // pred_fallthru
      _
    %p185 = scmp.le.s32.totalorder 1, %s9
    %p186 = scmp.lt.s32.totalorder %s9, 8
    %p187 = pnand %p185, %p186
    %p188 = pneg %p187
    // Predicated region
    $region29: #{transformer_forward.33} parent=5 // pred_check
      _
    $region30: #{transformer_forward.33} parent=5 // pred_check_branch
      %190 = sbr.rel (%p187) target = $region32
    $region31: #{transformer_forward.33} parent=5 // pred_region
      %s191 = ssub.s32 %s9, 1
      %p192 = scmp.lt.s32.totalorder %s19, 0
      %s193 = scalar_select %p192, %s19, 0
      %p194 = scmp.lt.s32.totalorder %s21, 0
      %s195 = scalar_select %p194, %s21, 0
      %s196 = sadd.s32 %s195, %s193
      %s197 = smul.addr %s196, 4
      %s198 = scalar_lea.vmem %s0, %s197
      %p199 = pneg %p56
      %p200 = pneg %p53
      %s201 = smul.u32 16, %s20
      %p202 = scmp.lt.s32.totalorder %s201, 111
      %s203 = scalar_select %p202, %s201, 111
      %p204 = scmp.lt.s32.totalorder %s21, 0
      %s205 = scalar_select %p204, %s21, 0
      %s206 = sadd.s32 %s205, %s203
      %s207 = smul.addr %s206, 4
      %s208 = scalar_lea.vmem %s1, %s207
      %p209 = pneg %p84
      %p210 = pneg %p81
      %p211 = scmp.lt.s32.totalorder %s20, 6
      %s212 = scalar_select %p211, %s20, 6
      %s213 = scalar_lea.vmem %s2, %s212
      %p214 = pneg %p110
      %p215 = pneg %p107
      %p216 = pneg %p138
      %p217 = pneg %p135
      %p218 = scmp.lt.s32.totalorder %s19, 0
      %s219 = scalar_select %p218, %s19, 0
      %p220 = scmp.lt.s32.totalorder %s20, 6
      %s221 = scalar_select %p220, %s20, 6
      %s222 = smul.addr %s219, 7
      %s223 = sadd.s32 %s221, %s222
      %s224 = smul.addr %s223, 8
      %s225 = scalar_lea.vmem %s3, %s224
      %p226 = scmp.lt.s32.totalorder %s19, 0
      %s227 = scalar_select %p226, %s19, 0
      %p228 = scmp.lt.s32.totalorder %s21, 0
      %s229 = scalar_select %p228, %s21, 0
      %s230 = sadd.s32 %s229, %s227
      %s231 = smul.addr %s230, 4
      %s232 = scalar_lea.vmem %s0, %s231
      %s233 = smul.u32 16, %s20
      %p234 = scmp.lt.s32.totalorder %s233, 111
      %s235 = scalar_select %p234, %s233, 111
      %p236 = scmp.lt.s32.totalorder %s21, 0
      %s237 = scalar_select %p236, %s21, 0
      %s238 = sadd.s32 %s237, %s235
      %s239 = smul.addr %s238, 4
      %s240 = scalar_lea.vmem %s1, %s239
      %s241 = smul.u32 16, %s20
      %p242 = scmp.lt.s32.totalorder %s20, 6
      %s243 = scalar_select %p242, %s20, 6
      %s244 = scalar_lea.vmem %s2, %s243
      %p245 = scmp.lt.s32.totalorder %s19, 0
      %s246 = scalar_select %p245, %s19, 0
      %p247 = scmp.lt.s32.totalorder %s20, 6
      %s248 = scalar_select %p247, %s20, 6
      %s249 = smul.addr %s246, 7
      %s250 = sadd.s32 %s248, %s249
      %s251 = smul.addr %s250, 8
      %s252 = scalar_lea.vmem %s3, %s251
      %p254 = scmp.eq.s32.totalorder %s21, 0
      // Predicated region
      $region33: #{transformer_forward.33} parent=31 // pred_check
        %p255 = pneg %p254
      $region34: #{transformer_forward.33} parent=31 // pred_check_branch
        %257 = sbr.rel (%p255) target = $region36
      $region35: #{transformer_forward.33} parent=31 // pred_region
        %258 = vst [vmem:[#allocation2] sm:$0xff] 0.0
      $region36: #{transformer_forward.33} parent=31 // pred_fallthru
        _
      %v259 = vld [vmem:[#allocation2] sm:$0xff]
      %v260 = vld [vmem:[%s232] sm:$0xf]
      %v261 = vld [vmem:[%s240] sm:$0xf]
      %v262 = vld [vmem:[%s240 + $0x4] sm:$0xf]
      %v263 = vld [vmem:[%s240 + $0x8] sm:$0xf]
      %v264 = vld [vmem:[%s240 + $0xc] sm:$0xf]
      %v265 = vld [vmem:[%s240 + $0x10] sm:$0xf]
      %v266 = vld [vmem:[%s240 + $0x14] sm:$0xf]
      %v267 = vld [vmem:[%s240 + $0x18] sm:$0xf]
      %v268 = vld [vmem:[%s240 + $0x1c] sm:$0xf]
      %v269 = vld [vmem:[%s240 + $0x20] sm:$0xf]
      %v270 = vld [vmem:[%s240 + $0x24] sm:$0xf]
      %v271 = vld [vmem:[%s240 + $0x28] sm:$0xf]
      %v272 = vld [vmem:[%s240 + $0x2c] sm:$0xf]
      %v273 = vld [vmem:[%s240 + $0x30] sm:$0xf]
      %v274 = vld [vmem:[%s240 + $0x34] sm:$0xf]
      %v275 = vld [vmem:[%s240 + $0x38] sm:$0xf]
      %v276 = vld [vmem:[%s240 + $0x3c] sm:$0xf]
      %v293 = vunpack.c.l.b16 %v261
      %v294 = vunpack.c.l.b16 %v262
      %v295 = vunpack.c.l.b16 %v263
      %v296 = vunpack.c.l.b16 %v264
      %v297 = vunpack.c.l.b16 %v265
      %v298 = vunpack.c.l.b16 %v266
      %v299 = vunpack.c.l.b16 %v267
      %v300 = vunpack.c.l.b16 %v268
      %v301 = vunpack.c.l.b16 %v269
      %v302 = vunpack.c.l.b16 %v270
      %v303 = vunpack.c.l.b16 %v271
      %v304 = vunpack.c.l.b16 %v272
      %v305 = vunpack.c.l.b16 %v273
      %v306 = vunpack.c.l.b16 %v274
      %v307 = vunpack.c.l.b16 %v275
      %v308 = vunpack.c.l.b16 %v276
      %v309 = vpack.c.b16 %v294, %v293
      %v310 = vpack.c.b16 %v296, %v295
      %v311 = vpack.c.b16 %v298, %v297
      %v312 = vpack.c.b16 %v300, %v299
      %v313 = vpack.c.b16 %v302, %v301
      %v314 = vpack.c.b16 %v304, %v303
      %v315 = vpack.c.b16 %v306, %v305
      %v316 = vpack.c.b16 %v308, %v307
      %325 = vmatprep.subr.bf16.mxu0 0
      %326 = vmatpush1.bf16.xpose.msra.mxu0 %v309
      %327 = vmatprep.subr.bf16.mxu0 0
      %328 = vmatpush1.bf16.xpose.msra.mxu0 %v310
      %329 = vmatprep.subr.bf16.mxu0 0
      %330 = vmatpush1.bf16.xpose.msra.mxu0 %v311
      %331 = vmatprep.subr.bf16.mxu0 0
      %332 = vmatpush1.bf16.xpose.msra.mxu0 %v312
      %333 = vmatprep.subr.bf16.mxu0 0
      %334 = vmatpush1.bf16.xpose.msra.mxu0 %v313
      %335 = vmatprep.subr.bf16.mxu0 0
      %336 = vmatpush1.bf16.xpose.msra.mxu0 %v314
      %337 = vmatprep.subr.bf16.mxu0 0
      %338 = vmatpush1.bf16.xpose.msra.mxu0 %v315
      %339 = vmatprep.subr.bf16.mxu0 0
      %340 = vmatpush1.bf16.xpose.msra.mxu0 %v316
      %341 = vmatprep.subr.bf16.mxu0 0
      %342 = vmatpush1.bf16.xpose.msra.mxu0 0
      %343 = vmatprep.subr.bf16.mxu0 0
      %344 = vmatpush1.bf16.xpose.msra.mxu0 0
      %345 = vmatprep.subr.bf16.mxu0 0
      %346 = vmatpush1.bf16.xpose.msra.mxu0 0
      %347 = vmatprep.subr.bf16.mxu0 0
      %348 = vmatpush1.bf16.xpose.msra.mxu0 0
      %349 = vmatprep.subr.bf16.mxu0 0
      %350 = vmatpush1.bf16.xpose.msra.mxu0 0
      %351 = vmatprep.subr.bf16.mxu0 0
      %352 = vmatpush1.bf16.xpose.msra.mxu0 0
      %353 = vmatprep.subr.bf16.mxu0 0
      %354 = vmatpush1.bf16.xpose.msra.mxu0 0
      %355 = vmatprep.subr.bf16.mxu0 0
      %356 = vmatpush1.bf16.xpose.msra.mxu0 0
      %357 = vmatprep.mubr.bf16.mxu0 0
      %358 = vmatmul.mubr.bf16.gmra.mrb[0].mxu0 %v260
      %v359 = vpop.f32.mrb[0].mxu0
      %v360 = vadd.f32 0.0, %v359
      %v361 = vpop.f32.mrb[0].mxu0
      %v362 = vpop.f32.mrb[0].mxu0
      %v363 = vpop.f32.mrb[0].mxu0
      %364 = vdwg.mxu0
      %v365 = vadd.f32 %v259, %v360
      %366 = vst [vmem:[#allocation2] sm:$0xff] %v365
      // Predicated region
      $region37: #{transformer_forward.33} parent=31 // pred_check
        %p367 = pneg %p254
      $region38: #{transformer_forward.33} parent=31 // pred_check_branch
        %369 = sbr.rel (%p367) target = $region40
      $region39: #{transformer_forward.33} parent=31 // pred_region
        %v370 = vld [vmem:[#allocation2] sm:$0xff]
        %v371 = vld [vmem:[%s244] sm:$0x1]
        %v373 = vlaneseq
        %v374 = vshrl.u32 %v373, 7
        %v375 = vsub.s32 0, %v374
        %v376 = vrot.slane %v371, %v375
        %v378 = vadd.f32 %v370, %v376
        %379 = vst [vmem:[%s252] sm:$0xff] %v378
      $region40: #{transformer_forward.33} parent=31 // pred_fallthru
        _
      %p380 = scmp.lt.s32.totalorder %s19, 0
      %s381 = scalar_select %p380, %s19, 0
      %p382 = scmp.lt.s32.totalorder %s20, 6
      %s383 = scalar_select %p382, %s20, 6
      %s384 = smul.addr %s381, 7
      %s385 = sadd.s32 %s383, %s384
      %s386 = smul.addr %s385, 8
      %s387 = scalar_lea.vmem %s3, %s386
      // Predicated region
      $region41: #{transformer_forward.33} parent=31 // pred_check
        %p388 = pneg %p135
      $region42: #{transformer_forward.33} parent=31 // pred_check_branch
        %390 = sbr.rel (%p388) target = $region44
      $region43: #{transformer_forward.33} parent=31 // pred_region
        _
      $region44: #{transformer_forward.33} parent=31 // pred_fallthru
        _
    $region32: #{transformer_forward.33} parent=5 // pred_fallthru
      _
    %p391 = scmp.le.s32.totalorder 2, %s9
    // Predicated region
    $region45: #{transformer_forward.33} parent=5 // pred_check
      %p392 = pneg %p391
    $region46: #{transformer_forward.33} parent=5 // pred_check_branch
      %394 = sbr.rel (%p392) target = $region48
    $region47: #{transformer_forward.33} parent=5 // pred_region
      %s395 = ssub.s32 %s9, 2
      // Predicated region
      $region49: #{transformer_forward.33} parent=47 // pred_check
        %p396 = pneg %p141
      $region50: #{transformer_forward.33} parent=47 // pred_check_branch
        %398 = sbr.rel (%p396) target = $region52
      $region51: #{transformer_forward.33} parent=47 // pred_region
        %p399 = scmp.lt.s32.totalorder %s22, 0
        %s400 = scalar_select %p399, %s22, 0
        %p401 = scmp.lt.s32.totalorder %s23, 6
        %s402 = scalar_select %p401, %s23, 6
        %s403 = smul.addr %s400, 7
        %s404 = sadd.s32 %s402, %s403
        %s405 = smul.addr %s404, 8
        %s406 = scalar_lea.vmem %s3, %s405
      $region52: #{transformer_forward.33} parent=47 // pred_fallthru
        _
    $region48: #{transformer_forward.33} parent=5 // pred_fallthru
      _
  $region6: #{transformer_forward.33} parent=0 // loop_footer
    %s13 = sadd.s32 1, %s9
  $region7: #{transformer_forward.33} parent=0 // loop_footer_branch
    %8 = sbr.rel target = $region3
  $region8: #{transformer_forward.33} parent=0 // loop_exit
    _

</llo_original>
